<compile_context>
chip_gen: v5e
topology: v5e:2x2
jax: 0.10.0
libtpu: 0.0.40
codegen_flags: <defaults>
</compile_context>

<pallas_src>
import math
import jax
import jax.numpy as jnp
from jax.experimental import pallas as pl
from jax.experimental.pallas import tpu as pltpu


def _make_summarize_kernel(scope, kernel_type, temperature, L, C):
    inv_sqrt_c = 1.0 / math.sqrt(C)
    inv_temp = 1.0 / temperature

    def summarize_kernel(*refs):
        out_ref, alpha_ref = refs[-2], refs[-1]
        refs = refs[:-2]
        h_refs = refs[:L]                                   # L x (tn, C)
        pos = L
        if scope == 'local':
            q_refs = refs[L:2 * L]                          # L x (tn, C)
            pos = 2 * L
            key_all = None
        else:
            key_all = refs[L][...]                          # (L, C) mean-over-nodes key
            pos = L + 1

        if kernel_type == 'wdp':
            w = refs[pos][...]                              # (1, C)
        elif kernel_type in ('ad', 'mx'):
            wq = refs[pos][...]                             # (1, C)
            wk = refs[pos + 1][...]                         # (1, C)
            b = refs[pos + 2][...].astype(jnp.float32)      # (1, 1)

        # ---- per-scope-slot logits: one pass over each (tn, C) tile ---------
        logits = []
        for l in range(L):
            h_l = h_refs[l][...]                            # (tn, C), input dtype
            if scope == 'local':
                q_l = q_refs[l][...]
                k_l = h_l                                   # key is h itself
            else:
                q_l = h_l
                k_l = key_all[l:l + 1, :]                   # (1, C) broadcasts over rows

            if kernel_type == 'dp':
                lg = jnp.sum(q_l * k_l, axis=-1, keepdims=True).astype(jnp.float32)
            elif kernel_type == 'sdp':
                lg = jnp.sum(q_l * k_l, axis=-1, keepdims=True).astype(jnp.float32) * inv_sqrt_c
            elif kernel_type == 'wdp':
                lg = jnp.sum(q_l * k_l * w, axis=-1, keepdims=True).astype(jnp.float32) * inv_sqrt_c
            elif kernel_type == 'ad':
                # Linear(2C -> 1) on cat([q, k]) == <q, wq> + <k, wk> + b,
                # fused into a single cross-lane reduce.
                lg = jnp.sum(q_l * wq + k_l * wk, axis=-1, keepdims=True).astype(jnp.float32) + b
            elif kernel_type == 'mx':
                # Both reductions consume the same loaded q/k tiles (one traversal).
                ad = jnp.sum(q_l * wq + k_l * wk, axis=-1, keepdims=True).astype(jnp.float32) + b
                dp = jnp.sum(q_l * k_l, axis=-1, keepdims=True).astype(jnp.float32)
                lg = ad * jax.nn.sigmoid(dp)
            else:
                raise ValueError(f"unknown kernel {kernel_type}")
            logits.append(lg * inv_temp)                    # (tn, 1) f32

        # ---- softmax over the L scope slots (pure VPU, no cross-lane reduce) -
        m = logits[0]
        for lg in logits[1:]:
            m = jnp.maximum(m, lg)
        exps = [jnp.exp(lg - m) for lg in logits]
        den = exps[0]
        for e in exps[1:]:
            den = den + e
        inv_den = 1.0 / den                                 # exact: rows sum to 1
        alphas = [e * inv_den for e in exps]                # each (tn, 1) f32

        # ---- summary = sum_l alpha_l * h_l, accumulated in f32 ---------------
        acc = h_refs[0][...].astype(jnp.float32) * alphas[0]
        for l in range(1, L):
            acc = acc + h_refs[l][...].astype(jnp.float32) * alphas[l]
        out_ref[...] = acc.astype(out_ref.dtype)

        # ---- alpha (tn, L): place columns via selects (no minor-dim concat) --
        tn = alpha_ref.shape[0]
        lane = jax.lax.broadcasted_iota(jnp.int32, (tn, L), 1)
        amat = jnp.zeros((tn, L), jnp.float32)
        for l in range(L):
            amat = jnp.where(lane == l, alphas[l], amat)
        alpha_ref[...] = amat.astype(alpha_ref.dtype)

    return summarize_kernel


def _vmem_capacity_bytes():
    """Per-core VMEM capacity; conservative 64 MiB (v7x) fallback if unknown."""
    try:
        return int(pltpu.get_tpu_info().vmem_capacity_bytes)
    except Exception:
        return 64 * 1024 * 1024


def _pick_block_n(N, L, C, n_streams, in_bytes, tile_budget, want_two_steps):
    """Largest 8-aligned N-tile whose pipelined working set fits `tile_budget`."""
    per_row = 2 * n_streams * L * C * in_bytes      # double-buffered (tn, C) input tiles
    per_row += 2 * (C + L) * in_bytes               # double-buffered (tn, C)/(tn, L) outputs
    per_row += 3 * C * 4 + 4 * L * 4                # in-kernel f32 temporaries (acc/products/logits)
    tn = max(8, tile_budget // max(per_row, 1))
    if want_two_steps and N >= 256:
        # Two-TensorCore parts (v7x): guarantee >=2 grid steps so both cores work.
        tn = min(tn, (-(-N // 2) + 7) // 8 * 8)
    if tn >= N:
        return N
    return max(8, (tn // 8) * 8)


def summarize(hs, hs_, *, scope, kernel, temperature, weight, att_w, att_b,
              block_n=None):
    """JAX/Pallas equivalent of Summarize.forward.

    hs, hs_ : lists of L arrays, each (N, C).
    Returns (summary (N, C), alpha (N, L)).
    """
    L = len(hs)
    N, C = hs[0].shape
    dtype = hs[0].dtype
    in_bytes = jnp.dtype(dtype).itemsize

    vmem_cap = _vmem_capacity_bytes()
    big_vmem = vmem_cap >= 100 * 1024 * 1024        # v5e/v6e: 128 MiB; v7x: 64 MiB
    vmem_limit = (96 if big_vmem else 48) * 1024 * 1024
    tile_budget = int(vmem_limit * 0.7)             # headroom for compiler scratch / spills
    n_streams = 2 if scope == 'local' else 1

    if block_n is None:
        tn = _pick_block_n(N, L, C, n_streams, in_bytes, tile_budget,
                           want_two_steps=not big_vmem)
    else:
        # Explicit override; prefer the auto picker (tiny tiles pay ~0.35us/step).
        tn = min(block_n, N)
    if tn < N:
        tn = max(8, (tn // 8) * 8)                  # (8, 128) rule on partial blocks
    grid = (pl.cdiv(N, tn),)

    def row_spec(shape):
        return pl.BlockSpec(shape, lambda i: (i, 0))

    def full_spec(shape):
        return pl.BlockSpec(shape, lambda i: (0, 0))

    # L (or 2L) separate (N, C) streams -- no torch.stack-style materialization.
    operands = list(hs)
    in_specs = [row_spec((tn, C)) for _ in range(L)]
    if scope == 'local':
        operands += list(hs_)
        in_specs += [row_spec((tn, C)) for _ in range(L)]
    else:
        # key = mean over nodes: one small (L, C) tensor shared by all grid steps
        # (no (N, L, C) repeat / tile).
        key = jnp.stack([jnp.mean(x, axis=0) for x in hs_], axis=0)
        operands.append(key)
        in_specs.append(full_spec((L, C)))

    # Only ship the parameters the selected kernel actually reads.
    if kernel == 'wdp':
        operands.append(jnp.reshape(weight, (1, C)))
        in_specs.append(full_spec((1, C)))
    elif kernel in ('ad', 'mx'):
        operands.append(jnp.reshape(att_w[:C], (1, C)))     # wq
        operands.append(jnp.reshape(att_w[C:], (1, C)))     # wk
        operands.append(jnp.reshape(att_b, (1, 1)))         # bias
        in_specs += [full_spec((1, C)), full_spec((1, C)), full_spec((1, 1))]

    out_shape = (jax.ShapeDtypeStruct((N, C), dtype),
                 jax.ShapeDtypeStruct((N, L), dtype))
    out_specs = (row_spec((tn, C)), row_spec((tn, L)))

    kern = _make_summarize_kernel(scope, kernel, temperature, L, C)

    out, alpha = pl.pallas_call(
        kern,
        out_shape=out_shape,
        grid=grid,
        in_specs=in_specs,
        out_specs=out_specs,
        compiler_params=pltpu.CompilerParams(
            dimension_semantics=("parallel",),      # shards the N-grid across TCs
            vmem_limit_bytes=vmem_limit,
        ),
    )(*operands)
    return out, alpha


def summarize_ref(hs, hs_, *, scope, kernel, temperature, weight, att_w, att_b):
    """Plain-JAX reference mirroring the PyTorch forward exactly."""
    h = jnp.stack(hs, axis=1)
    h_ = jnp.stack(hs_, axis=1)
    N, L, C = h.shape
    if scope == 'local':
        query, key = h_, h
    else:
        query = h
        key = jnp.tile(jnp.mean(h_, axis=0, keepdims=True), (N, 1, 1))
    if kernel == 'dp':
        alpha = (query * key).sum(-1)
    elif kernel == 'sdp':
        alpha = (query * key).sum(-1) / math.sqrt(C)
    elif kernel == 'wdp':
        alpha = (query * key * weight).sum(-1) / math.sqrt(C)
    elif kernel == 'ad':
        qk = jnp.concatenate([query, key], axis=-1)
        alpha = (qk @ att_w) + att_b[0]
    elif kernel == 'mx':
        qk = jnp.concatenate([query, key], axis=-1)
        alpha = ((qk @ att_w) + att_b[0]) * jax.nn.sigmoid((query * key).sum(-1))
    alpha = jax.nn.softmax(alpha / temperature, axis=-1)
    return (h * alpha[..., None]).sum(1), alpha


if __name__ == "__main__":
    # Lane-aligned channels (C=128) so the summary stores are lane-dense.
    N, L, C = 256, 8, 128         # nodes, len(hs), channels
    temperature = 0.5

    root = jax.random.PRNGKey(0)
    k_hs, k_hs_, k_w, k_b = jax.random.split(root, 4)
    hs = [jax.random.normal(jax.random.fold_in(k_hs, i), (N, C), jnp.float32)
          for i in range(L)]
    hs_ = [jax.random.normal(jax.random.fold_in(k_hs_, i), (N, C), jnp.float32)
           for i in range(L)]

    # Parameters (shapes from __init__): att = Linear(2C, 1), weight = ones(C).
    weight = jnp.ones((C,), jnp.float32)
    bound = 1.0 / math.sqrt(2 * C)
    att_w = jax.random.uniform(k_w, (2 * C,), jnp.float32, -bound, bound)
    att_b = jax.random.uniform(k_b, (1,), jnp.float32, -bound, bound)

    RTOL = ATOL = 1e-3            # exact softmax divide -> tight tolerance
    configs = [(s, k) for s in ('local', 'global')
               for k in ('dp', 'sdp', 'wdp', 'ad', 'mx')]
    for scope, kern in configs:
        kwargs = dict(scope=scope, kernel=kern, temperature=temperature,
                      weight=weight, att_w=att_w, att_b=att_b)
        out, alpha = summarize(hs, hs_, **kwargs)     # auto (VMEM-aware) tiling
        jax.block_until_ready((out, alpha))
        out_r, alpha_r = summarize_ref(hs, hs_, **kwargs)
        assert out.shape == (N, C) and alpha.shape == (N, L)
        assert jnp.allclose(out, out_r, rtol=RTOL, atol=ATOL), (scope, kern)
        assert jnp.allclose(alpha, alpha_r, rtol=RTOL, atol=ATOL), (scope, kern)

    # Explicit multi-step grid (tn=128 -> 2 steps; matches the v7x two-core split).
    out, alpha = summarize(hs, hs_, scope='local', kernel='mx',
                           temperature=temperature, weight=weight,
                           att_w=att_w, att_b=att_b, block_n=128)
    jax.block_until_ready((out, alpha))
    out_r, alpha_r = summarize_ref(hs, hs_, scope='local', kernel='mx',
                                   temperature=temperature, weight=weight,
                                   att_w=att_w, att_b=att_b)
    assert jnp.allclose(out, out_r, rtol=RTOL, atol=ATOL)
    assert jnp.allclose(alpha, alpha_r, rtol=RTOL, atol=ATOL)

    print("KERNEL_OK")
</pallas_src>

<mosaic_0001>
module attributes {stable_mosaic.version = 11 : i64} {
  func.func @summarize_kernel(%arg0: i32, %arg1: memref<128x128xf32, #tpu.memory_space<vmem>>, %arg2: memref<128x128xf32, #tpu.memory_space<vmem>>, %arg3: memref<128x128xf32, #tpu.memory_space<vmem>>, %arg4: memref<128x128xf32, #tpu.memory_space<vmem>>, %arg5: memref<128x128xf32, #tpu.memory_space<vmem>>, %arg6: memref<128x128xf32, #tpu.memory_space<vmem>>, %arg7: memref<128x128xf32, #tpu.memory_space<vmem>>, %arg8: memref<128x128xf32, #tpu.memory_space<vmem>>, %arg9: memref<128x128xf32, #tpu.memory_space<vmem>>, %arg10: memref<128x128xf32, #tpu.memory_space<vmem>>, %arg11: memref<128x128xf32, #tpu.memory_space<vmem>>, %arg12: memref<128x128xf32, #tpu.memory_space<vmem>>, %arg13: memref<128x128xf32, #tpu.memory_space<vmem>>, %arg14: memref<128x128xf32, #tpu.memory_space<vmem>>, %arg15: memref<128x128xf32, #tpu.memory_space<vmem>>, %arg16: memref<128x128xf32, #tpu.memory_space<vmem>>, %arg17: memref<128x128xf32, #tpu.memory_space<vmem>>, %arg18: memref<128x8xf32, #tpu.memory_space<vmem>>) attributes {dimension_semantics = [#tpu.dimension_semantics<parallel>], iteration_bounds = array<i64: 2>, scalar_prefetch = 0 : i64, scratch_operands = 0 : i64, tpu.core_type = #tpu.core_type<tc>, window_params = [{transform_indices = @transform_0, window_bounds = array<i64: 128, 128>}, {transform_indices = @transform_1, window_bounds = array<i64: 128, 128>}, {transform_indices = @transform_2, window_bounds = array<i64: 128, 128>}, {transform_indices = @transform_3, window_bounds = array<i64: 128, 128>}, {transform_indices = @transform_4, window_bounds = array<i64: 128, 128>}, {transform_indices = @transform_5, window_bounds = array<i64: 128, 128>}, {transform_indices = @transform_6, window_bounds = array<i64: 128, 128>}, {transform_indices = @transform_7, window_bounds = array<i64: 128, 128>}, {transform_indices = @transform_8, window_bounds = array<i64: 128, 128>}, {transform_indices = @transform_9, window_bounds = array<i64: 128, 128>}, {transform_indices = @transform_10, window_bounds = array<i64: 128, 128>}, {transform_indices = @transform_11, window_bounds = array<i64: 128, 128>}, {transform_indices = @transform_12, window_bounds = array<i64: 128, 128>}, {transform_indices = @transform_13, window_bounds = array<i64: 128, 128>}, {transform_indices = @transform_14, window_bounds = array<i64: 128, 128>}, {transform_indices = @transform_15, window_bounds = array<i64: 128, 128>}, {transform_indices = @transform_16, window_bounds = array<i64: 128, 128>}, {transform_indices = @transform_17, window_bounds = array<i64: 128, 8>}]} {
    %c0 = arith.constant 0 : index
    %c0_0 = arith.constant 0 : index
    %0 = vector.load %arg1[%c0, %c0_0] : memref<128x128xf32, #tpu.memory_space<vmem>>, vector<128x128xf32>
    %c0_1 = arith.constant 0 : index
    %c0_2 = arith.constant 0 : index
    %1 = vector.load %arg9[%c0_1, %c0_2] : memref<128x128xf32, #tpu.memory_space<vmem>>, vector<128x128xf32>
    %2 = arith.mulf %1, %0 : vector<128x128xf32>
    %cst = arith.constant dense<0.000000e+00> : vector<128xf32>
    %3 = vector.multi_reduction <add>, %2, %cst [1] : vector<128x128xf32> to vector<128xf32>
    %4 = vector.shape_cast %3 : vector<128xf32> to vector<128x1xf32>
    %cst_3 = arith.constant 2.000000e+00 : f32
    %5 = vector.broadcast %cst_3 : f32 to vector<128x1xf32>
    %6 = arith.mulf %4, %5 : vector<128x1xf32>
    %c0_4 = arith.constant 0 : index
    %c0_5 = arith.constant 0 : index
    %7 = vector.load %arg2[%c0_4, %c0_5] : memref<128x128xf32, #tpu.memory_space<vmem>>, vector<128x128xf32>
    %c0_6 = arith.constant 0 : index
    %c0_7 = arith.constant 0 : index
    %8 = vector.load %arg10[%c0_6, %c0_7] : memref<128x128xf32, #tpu.memory_space<vmem>>, vector<128x128xf32>
    %9 = arith.mulf %8, %7 : vector<128x128xf32>
    %cst_8 = arith.constant dense<0.000000e+00> : vector<128xf32>
    %10 = vector.multi_reduction <add>, %9, %cst_8 [1] : vector<128x128xf32> to vector<128xf32>
    %11 = vector.shape_cast %10 : vector<128xf32> to vector<128x1xf32>
    %cst_9 = arith.constant 2.000000e+00 : f32
    %12 = vector.broadcast %cst_9 : f32 to vector<128x1xf32>
    %13 = arith.mulf %11, %12 : vector<128x1xf32>
    %c0_10 = arith.constant 0 : index
    %c0_11 = arith.constant 0 : index
    %14 = vector.load %arg3[%c0_10, %c0_11] : memref<128x128xf32, #tpu.memory_space<vmem>>, vector<128x128xf32>
    %c0_12 = arith.constant 0 : index
    %c0_13 = arith.constant 0 : index
    %15 = vector.load %arg11[%c0_12, %c0_13] : memref<128x128xf32, #tpu.memory_space<vmem>>, vector<128x128xf32>
    %16 = arith.mulf %15, %14 : vector<128x128xf32>
    %cst_14 = arith.constant dense<0.000000e+00> : vector<128xf32>
    %17 = vector.multi_reduction <add>, %16, %cst_14 [1] : vector<128x128xf32> to vector<128xf32>
    %18 = vector.shape_cast %17 : vector<128xf32> to vector<128x1xf32>
    %cst_15 = arith.constant 2.000000e+00 : f32
    %19 = vector.broadcast %cst_15 : f32 to vector<128x1xf32>
    %20 = arith.mulf %18, %19 : vector<128x1xf32>
    %c0_16 = arith.constant 0 : index
    %c0_17 = arith.constant 0 : index
    %21 = vector.load %arg4[%c0_16, %c0_17] : memref<128x128xf32, #tpu.memory_space<vmem>>, vector<128x128xf32>
    %c0_18 = arith.constant 0 : index
    %c0_19 = arith.constant 0 : index
    %22 = vector.load %arg12[%c0_18, %c0_19] : memref<128x128xf32, #tpu.memory_space<vmem>>, vector<128x128xf32>
    %23 = arith.mulf %22, %21 : vector<128x128xf32>
    %cst_20 = arith.constant dense<0.000000e+00> : vector<128xf32>
    %24 = vector.multi_reduction <add>, %23, %cst_20 [1] : vector<128x128xf32> to vector<128xf32>
    %25 = vector.shape_cast %24 : vector<128xf32> to vector<128x1xf32>
    %cst_21 = arith.constant 2.000000e+00 : f32
    %26 = vector.broadcast %cst_21 : f32 to vector<128x1xf32>
    %27 = arith.mulf %25, %26 : vector<128x1xf32>
    %c0_22 = arith.constant 0 : index
    %c0_23 = arith.constant 0 : index
    %28 = vector.load %arg5[%c0_22, %c0_23] : memref<128x128xf32, #tpu.memory_space<vmem>>, vector<128x128xf32>
    %c0_24 = arith.constant 0 : index
    %c0_25 = arith.constant 0 : index
    %29 = vector.load %arg13[%c0_24, %c0_25] : memref<128x128xf32, #tpu.memory_space<vmem>>, vector<128x128xf32>
    %30 = arith.mulf %29, %28 : vector<128x128xf32>
    %cst_26 = arith.constant dense<0.000000e+00> : vector<128xf32>
    %31 = vector.multi_reduction <add>, %30, %cst_26 [1] : vector<128x128xf32> to vector<128xf32>
    %32 = vector.shape_cast %31 : vector<128xf32> to vector<128x1xf32>
    %cst_27 = arith.constant 2.000000e+00 : f32
    %33 = vector.broadcast %cst_27 : f32 to vector<128x1xf32>
    %34 = arith.mulf %32, %33 : vector<128x1xf32>
    %c0_28 = arith.constant 0 : index
    %c0_29 = arith.constant 0 : index
    %35 = vector.load %arg6[%c0_28, %c0_29] : memref<128x128xf32, #tpu.memory_space<vmem>>, vector<128x128xf32>
    %c0_30 = arith.constant 0 : index
    %c0_31 = arith.constant 0 : index
    %36 = vector.load %arg14[%c0_30, %c0_31] : memref<128x128xf32, #tpu.memory_space<vmem>>, vector<128x128xf32>
    %37 = arith.mulf %36, %35 : vector<128x128xf32>
    %cst_32 = arith.constant dense<0.000000e+00> : vector<128xf32>
    %38 = vector.multi_reduction <add>, %37, %cst_32 [1] : vector<128x128xf32> to vector<128xf32>
    %39 = vector.shape_cast %38 : vector<128xf32> to vector<128x1xf32>
    %cst_33 = arith.constant 2.000000e+00 : f32
    %40 = vector.broadcast %cst_33 : f32 to vector<128x1xf32>
    %41 = arith.mulf %39, %40 : vector<128x1xf32>
    %c0_34 = arith.constant 0 : index
    %c0_35 = arith.constant 0 : index
    %42 = vector.load %arg7[%c0_34, %c0_35] : memref<128x128xf32, #tpu.memory_space<vmem>>, vector<128x128xf32>
    %c0_36 = arith.constant 0 : index
    %c0_37 = arith.constant 0 : index
    %43 = vector.load %arg15[%c0_36, %c0_37] : memref<128x128xf32, #tpu.memory_space<vmem>>, vector<128x128xf32>
    %44 = arith.mulf %43, %42 : vector<128x128xf32>
    %cst_38 = arith.constant dense<0.000000e+00> : vector<128xf32>
    %45 = vector.multi_reduction <add>, %44, %cst_38 [1] : vector<128x128xf32> to vector<128xf32>
    %46 = vector.shape_cast %45 : vector<128xf32> to vector<128x1xf32>
    %cst_39 = arith.constant 2.000000e+00 : f32
    %47 = vector.broadcast %cst_39 : f32 to vector<128x1xf32>
    %48 = arith.mulf %46, %47 : vector<128x1xf32>
    %c0_40 = arith.constant 0 : index
    %c0_41 = arith.constant 0 : index
    %49 = vector.load %arg8[%c0_40, %c0_41] : memref<128x128xf32, #tpu.memory_space<vmem>>, vector<128x128xf32>
    %c0_42 = arith.constant 0 : index
    %c0_43 = arith.constant 0 : index
    %50 = vector.load %arg16[%c0_42, %c0_43] : memref<128x128xf32, #tpu.memory_space<vmem>>, vector<128x128xf32>
    %51 = arith.mulf %50, %49 : vector<128x128xf32>
    %cst_44 = arith.constant dense<0.000000e+00> : vector<128xf32>
    %52 = vector.multi_reduction <add>, %51, %cst_44 [1] : vector<128x128xf32> to vector<128xf32>
    %53 = vector.shape_cast %52 : vector<128xf32> to vector<128x1xf32>
    %cst_45 = arith.constant 2.000000e+00 : f32
    %54 = vector.broadcast %cst_45 : f32 to vector<128x1xf32>
    %55 = arith.mulf %53, %54 : vector<128x1xf32>
    %56 = arith.maximumf %6, %13 : vector<128x1xf32>
    %57 = arith.maximumf %56, %20 : vector<128x1xf32>
    %58 = arith.maximumf %57, %27 : vector<128x1xf32>
    %59 = arith.maximumf %58, %34 : vector<128x1xf32>
    %60 = arith.maximumf %59, %41 : vector<128x1xf32>
    %61 = arith.maximumf %60, %48 : vector<128x1xf32>
    %62 = arith.maximumf %61, %55 : vector<128x1xf32>
    %63 = arith.subf %6, %62 : vector<128x1xf32>
    %64 = math.exp %63 : vector<128x1xf32>
    %65 = arith.subf %13, %62 : vector<128x1xf32>
    %66 = math.exp %65 : vector<128x1xf32>
    %67 = arith.subf %20, %62 : vector<128x1xf32>
    %68 = math.exp %67 : vector<128x1xf32>
    %69 = arith.subf %27, %62 : vector<128x1xf32>
    %70 = math.exp %69 : vector<128x1xf32>
    %71 = arith.subf %34, %62 : vector<128x1xf32>
    %72 = math.exp %71 : vector<128x1xf32>
    %73 = arith.subf %41, %62 : vector<128x1xf32>
    %74 = math.exp %73 : vector<128x1xf32>
    %75 = arith.subf %48, %62 : vector<128x1xf32>
    %76 = math.exp %75 : vector<128x1xf32>
    %77 = arith.subf %55, %62 : vector<128x1xf32>
    %78 = math.exp %77 : vector<128x1xf32>
    %79 = arith.addf %64, %66 : vector<128x1xf32>
    %80 = arith.addf %79, %68 : vector<128x1xf32>
    %81 = arith.addf %80, %70 : vector<128x1xf32>
    %82 = arith.addf %81, %72 : vector<128x1xf32>
    %83 = arith.addf %82, %74 : vector<128x1xf32>
    %84 = arith.addf %83, %76 : vector<128x1xf32>
    %85 = arith.addf %84, %78 : vector<128x1xf32>
    %cst_46 = arith.constant 1.000000e+00 : f32
    %86 = vector.broadcast %cst_46 : f32 to vector<128x1xf32>
    %87 = arith.divf %86, %85 : vector<128x1xf32>
    %88 = arith.mulf %64, %87 : vector<128x1xf32>
    %89 = arith.mulf %66, %87 : vector<128x1xf32>
    %90 = arith.mulf %68, %87 : vector<128x1xf32>
    %91 = arith.mulf %70, %87 : vector<128x1xf32>
    %92 = arith.mulf %72, %87 : vector<128x1xf32>
    %93 = arith.mulf %74, %87 : vector<128x1xf32>
    %94 = arith.mulf %76, %87 : vector<128x1xf32>
    %95 = arith.mulf %78, %87 : vector<128x1xf32>
    %c0_47 = arith.constant 0 : index
    %c0_48 = arith.constant 0 : index
    %96 = vector.load %arg1[%c0_47, %c0_48] : memref<128x128xf32, #tpu.memory_space<vmem>>, vector<128x128xf32>
    %97 = vector.broadcast %88 : vector<128x1xf32> to vector<128x128xf32>
    %98 = arith.mulf %96, %97 : vector<128x128xf32>
    %c0_49 = arith.constant 0 : index
    %c0_50 = arith.constant 0 : index
    %99 = vector.load %arg2[%c0_49, %c0_50] : memref<128x128xf32, #tpu.memory_space<vmem>>, vector<128x128xf32>
    %100 = vector.broadcast %89 : vector<128x1xf32> to vector<128x128xf32>
    %101 = arith.mulf %99, %100 : vector<128x128xf32>
    %102 = arith.addf %98, %101 : vector<128x128xf32>
    %c0_51 = arith.constant 0 : index
    %c0_52 = arith.constant 0 : index
    %103 = vector.load %arg3[%c0_51, %c0_52] : memref<128x128xf32, #tpu.memory_space<vmem>>, vector<128x128xf32>
    %104 = vector.broadcast %90 : vector<128x1xf32> to vector<128x128xf32>
    %105 = arith.mulf %103, %104 : vector<128x128xf32>
    %106 = arith.addf %102, %105 : vector<128x128xf32>
    %c0_53 = arith.constant 0 : index
    %c0_54 = arith.constant 0 : index
    %107 = vector.load %arg4[%c0_53, %c0_54] : memref<128x128xf32, #tpu.memory_space<vmem>>, vector<128x128xf32>
    %108 = vector.broadcast %91 : vector<128x1xf32> to vector<128x128xf32>
    %109 = arith.mulf %107, %108 : vector<128x128xf32>
    %110 = arith.addf %106, %109 : vector<128x128xf32>
    %c0_55 = arith.constant 0 : index
    %c0_56 = arith.constant 0 : index
    %111 = vector.load %arg5[%c0_55, %c0_56] : memref<128x128xf32, #tpu.memory_space<vmem>>, vector<128x128xf32>
    %112 = vector.broadcast %92 : vector<128x1xf32> to vector<128x128xf32>
    %113 = arith.mulf %111, %112 : vector<128x128xf32>
    %114 = arith.addf %110, %113 : vector<128x128xf32>
    %c0_57 = arith.constant 0 : index
    %c0_58 = arith.constant 0 : index
    %115 = vector.load %arg6[%c0_57, %c0_58] : memref<128x128xf32, #tpu.memory_space<vmem>>, vector<128x128xf32>
    %116 = vector.broadcast %93 : vector<128x1xf32> to vector<128x128xf32>
    %117 = arith.mulf %115, %116 : vector<128x128xf32>
    %118 = arith.addf %114, %117 : vector<128x128xf32>
    %c0_59 = arith.constant 0 : index
    %c0_60 = arith.constant 0 : index
    %119 = vector.load %arg7[%c0_59, %c0_60] : memref<128x128xf32, #tpu.memory_space<vmem>>, vector<128x128xf32>
    %120 = vector.broadcast %94 : vector<128x1xf32> to vector<128x128xf32>
    %121 = arith.mulf %119, %120 : vector<128x128xf32>
    %122 = arith.addf %118, %121 : vector<128x128xf32>
    %c0_61 = arith.constant 0 : index
    %c0_62 = arith.constant 0 : index
    %123 = vector.load %arg8[%c0_61, %c0_62] : memref<128x128xf32, #tpu.memory_space<vmem>>, vector<128x128xf32>
    %124 = vector.broadcast %95 : vector<128x1xf32> to vector<128x128xf32>
    %125 = arith.mulf %123, %124 : vector<128x128xf32>
    %126 = arith.addf %122, %125 : vector<128x128xf32>
    %c0_63 = arith.constant 0 : index
    %c0_64 = arith.constant 0 : index
    %127 = vector.load %arg17[%c0_63, %c0_64] : memref<128x128xf32, #tpu.memory_space<vmem>>, vector<128x128xf32>
    tpu.vector_store %arg17[%c0_63, %c0_64], %126 {strides = array<i32>} : memref<128x128xf32, #tpu.memory_space<vmem>>, vector<128x128xf32>,
    %128 = tpu.iota {dimensions = array<i32: 1>} : vector<128x8xi32>
    %cst_65 = arith.constant 0.000000e+00 : f32
    %129 = vector.broadcast %cst_65 : f32 to vector<128x8xf32>
    %c0_i32 = arith.constant 0 : i32
    %130 = vector.broadcast %c0_i32 : i32 to vector<128x8xi32>
    %131 = arith.cmpi eq, %128, %130 : vector<128x8xi32>
    %132 = vector.shape_cast %88 : vector<128x1xf32> to vector<128x1xf32>
    %133 = vector.broadcast %132 : vector<128x1xf32> to vector<128x8xf32>
    %134 = arith.select %131, %133, %129 : vector<128x8xi1>, vector<128x8xf32>
    %c1_i32 = arith.constant 1 : i32
    %135 = vector.broadcast %c1_i32 : i32 to vector<128x8xi32>
    %136 = arith.cmpi eq, %128, %135 : vector<128x8xi32>
    %137 = vector.shape_cast %89 : vector<128x1xf32> to vector<128x1xf32>
    %138 = vector.broadcast %137 : vector<128x1xf32> to vector<128x8xf32>
    %139 = arith.select %136, %138, %134 : vector<128x8xi1>, vector<128x8xf32>
    %c2_i32 = arith.constant 2 : i32
    %140 = vector.broadcast %c2_i32 : i32 to vector<128x8xi32>
    %141 = arith.cmpi eq, %128, %140 : vector<128x8xi32>
    %142 = vector.shape_cast %90 : vector<128x1xf32> to vector<128x1xf32>
    %143 = vector.broadcast %142 : vector<128x1xf32> to vector<128x8xf32>
    %144 = arith.select %141, %143, %139 : vector<128x8xi1>, vector<128x8xf32>
    %c3_i32 = arith.constant 3 : i32
    %145 = vector.broadcast %c3_i32 : i32 to vector<128x8xi32>
    %146 = arith.cmpi eq, %128, %145 : vector<128x8xi32>
    %147 = vector.shape_cast %91 : vector<128x1xf32> to vector<128x1xf32>
    %148 = vector.broadcast %147 : vector<128x1xf32> to vector<128x8xf32>
    %149 = arith.select %146, %148, %144 : vector<128x8xi1>, vector<128x8xf32>
    %c4_i32 = arith.constant 4 : i32
    %150 = vector.broadcast %c4_i32 : i32 to vector<128x8xi32>
    %151 = arith.cmpi eq, %128, %150 : vector<128x8xi32>
    %152 = vector.shape_cast %92 : vector<128x1xf32> to vector<128x1xf32>
    %153 = vector.broadcast %152 : vector<128x1xf32> to vector<128x8xf32>
    %154 = arith.select %151, %153, %149 : vector<128x8xi1>, vector<128x8xf32>
    %c5_i32 = arith.constant 5 : i32
    %155 = vector.broadcast %c5_i32 : i32 to vector<128x8xi32>
    %156 = arith.cmpi eq, %128, %155 : vector<128x8xi32>
    %157 = vector.shape_cast %93 : vector<128x1xf32> to vector<128x1xf32>
    %158 = vector.broadcast %157 : vector<128x1xf32> to vector<128x8xf32>
    %159 = arith.select %156, %158, %154 : vector<128x8xi1>, vector<128x8xf32>
    %c6_i32 = arith.constant 6 : i32
    %160 = vector.broadcast %c6_i32 : i32 to vector<128x8xi32>
    %161 = arith.cmpi eq, %128, %160 : vector<128x8xi32>
    %162 = vector.shape_cast %94 : vector<128x1xf32> to vector<128x1xf32>
    %163 = vector.broadcast %162 : vector<128x1xf32> to vector<128x8xf32>
    %164 = arith.select %161, %163, %159 : vector<128x8xi1>, vector<128x8xf32>
    %c7_i32 = arith.constant 7 : i32
    %165 = vector.broadcast %c7_i32 : i32 to vector<128x8xi32>
    %166 = arith.cmpi eq, %128, %165 : vector<128x8xi32>
    %167 = vector.shape_cast %95 : vector<128x1xf32> to vector<128x1xf32>
    %168 = vector.broadcast %167 : vector<128x1xf32> to vector<128x8xf32>
    %169 = arith.select %166, %168, %164 : vector<128x8xi1>, vector<128x8xf32>
    %c0_66 = arith.constant 0 : index
    %c0_67 = arith.constant 0 : index
    %170 = vector.load %arg18[%c0_66, %c0_67] : memref<128x8xf32, #tpu.memory_space<vmem>>, vector<128x8xf32>
    tpu.vector_store %arg18[%c0_66, %c0_67], %169 {strides = array<i32>} : memref<128x8xf32, #tpu.memory_space<vmem>>, vector<128x8xf32>,
    return
  }
  func.func @transform_0(%arg0: i32) -> (i32, i32) {
    %c0_i32 = arith.constant 0 : i32
    %c0_i32_0 = arith.constant 0 : i32
    return %arg0, %c0_i32 : i32, i32
  }
  func.func @transform_1(%arg0: i32) -> (i32, i32) {
    %c0_i32 = arith.constant 0 : i32
    %c0_i32_0 = arith.constant 0 : i32
    return %arg0, %c0_i32 : i32, i32
  }
  func.func @transform_2(%arg0: i32) -> (i32, i32) {
    %c0_i32 = arith.constant 0 : i32
    %c0_i32_0 = arith.constant 0 : i32
    return %arg0, %c0_i32 : i32, i32
  }
  func.func @transform_3(%arg0: i32) -> (i32, i32) {
    %c0_i32 = arith.constant 0 : i32
    %c0_i32_0 = arith.constant 0 : i32
    return %arg0, %c0_i32 : i32, i32
  }
  func.func @transform_4(%arg0: i32) -> (i32, i32) {
    %c0_i32 = arith.constant 0 : i32
    %c0_i32_0 = arith.constant 0 : i32
    return %arg0, %c0_i32 : i32, i32
  }
  func.func @transform_5(%arg0: i32) -> (i32, i32) {
    %c0_i32 = arith.constant 0 : i32
    %c0_i32_0 = arith.constant 0 : i32
    return %arg0, %c0_i32 : i32, i32
  }
  func.func @transform_6(%arg0: i32) -> (i32, i32) {
    %c0_i32 = arith.constant 0 : i32
    %c0_i32_0 = arith.constant 0 : i32
    return %arg0, %c0_i32 : i32, i32
  }
  func.func @transform_7(%arg0: i32) -> (i32, i32) {
    %c0_i32 = arith.constant 0 : i32
    %c0_i32_0 = arith.constant 0 : i32
    return %arg0, %c0_i32 : i32, i32
  }
  func.func @transform_8(%arg0: i32) -> (i32, i32) {
    %c0_i32 = arith.constant 0 : i32
    %c0_i32_0 = arith.constant 0 : i32
    return %arg0, %c0_i32 : i32, i32
  }
  func.func @transform_9(%arg0: i32) -> (i32, i32) {
    %c0_i32 = arith.constant 0 : i32
    %c0_i32_0 = arith.constant 0 : i32
    return %arg0, %c0_i32 : i32, i32
  }
  func.func @transform_10(%arg0: i32) -> (i32, i32) {
    %c0_i32 = arith.constant 0 : i32
    %c0_i32_0 = arith.constant 0 : i32
    return %arg0, %c0_i32 : i32, i32
  }
  func.func @transform_11(%arg0: i32) -> (i32, i32) {
    %c0_i32 = arith.constant 0 : i32
    %c0_i32_0 = arith.constant 0 : i32
    return %arg0, %c0_i32 : i32, i32
  }
  func.func @transform_12(%arg0: i32) -> (i32, i32) {
    %c0_i32 = arith.constant 0 : i32
    %c0_i32_0 = arith.constant 0 : i32
    return %arg0, %c0_i32 : i32, i32
  }
  func.func @transform_13(%arg0: i32) -> (i32, i32) {
    %c0_i32 = arith.constant 0 : i32
    %c0_i32_0 = arith.constant 0 : i32
    return %arg0, %c0_i32 : i32, i32
  }
  func.func @transform_14(%arg0: i32) -> (i32, i32) {
    %c0_i32 = arith.constant 0 : i32
    %c0_i32_0 = arith.constant 0 : i32
    return %arg0, %c0_i32 : i32, i32
  }
  func.func @transform_15(%arg0: i32) -> (i32, i32) {
    %c0_i32 = arith.constant 0 : i32
    %c0_i32_0 = arith.constant 0 : i32
    return %arg0, %c0_i32 : i32, i32
  }
  func.func @transform_16(%arg0: i32) -> (i32, i32) {
    %c0_i32 = arith.constant 0 : i32
    %c0_i32_0 = arith.constant 0 : i32
    return %arg0, %c0_i32 : i32, i32
  }
  func.func @transform_17(%arg0: i32) -> (i32, i32) {
    %c0_i32 = arith.constant 0 : i32
    %c0_i32_0 = arith.constant 0 : i32
    return %arg0, %c0_i32 : i32, i32
  }
}

</mosaic_0001>

<llo_original>
// kernel: tpu_custom_call.1
$region0: #{tpu_custom_call.1}
  #allocation0 [shape = 'u32[]', space=smem, size = 0x4, offset = 0x4, fixed_abs, tag = 'smem constant byte address 0x4 - core index']
  #allocation1 [shape = 'u32[72,128]{1,0:T(1,128)}', space=vmem, size = 0x9000, scoped, tag = 'internal scratch']
  %s0 = inlined_call_operand.hbm [shape: f32[256,128], index: 0, kind: input, shape index: {}]
  %s1 = inlined_call_operand.hbm [shape: f32[256,128], index: 1, kind: input, shape index: {}]
  %s2 = inlined_call_operand.hbm [shape: f32[256,128], index: 2, kind: input, shape index: {}]
  %s3 = inlined_call_operand.hbm [shape: f32[256,128], index: 3, kind: input, shape index: {}]
  %s4 = inlined_call_operand.hbm [shape: f32[256,128], index: 4, kind: input, shape index: {}]
  %s5 = inlined_call_operand.hbm [shape: f32[256,128], index: 5, kind: input, shape index: {}]
  %s6 = inlined_call_operand.hbm [shape: f32[256,128], index: 6, kind: input, shape index: {}]
  %s7 = inlined_call_operand.hbm [shape: f32[256,128], index: 7, kind: input, shape index: {}]
  %s8 = inlined_call_operand.hbm [shape: f32[256,128], index: 8, kind: input, shape index: {}]
  %s9 = inlined_call_operand.hbm [shape: f32[256,128], index: 9, kind: input, shape index: {}]
  %s10 = inlined_call_operand.hbm [shape: f32[256,128], index: 10, kind: input, shape index: {}]
  %s11 = inlined_call_operand.hbm [shape: f32[256,128], index: 11, kind: input, shape index: {}]
  %s12 = inlined_call_operand.hbm [shape: f32[256,128], index: 12, kind: input, shape index: {}]
  %s13 = inlined_call_operand.hbm [shape: f32[256,128], index: 13, kind: input, shape index: {}]
  %s14 = inlined_call_operand.hbm [shape: f32[256,128], index: 14, kind: input, shape index: {}]
  %s15 = inlined_call_operand.hbm [shape: f32[256,128], index: 15, kind: input, shape index: {}]
  %s16 = inlined_call_operand.hbm [shape: f32[256,128], index: 16, kind: output, shape index: {0}]
  %s17 = inlined_call_operand.vmem [shape: f32[256,8], index: 17, kind: output, shape index: {1}]
  %18 = xla_tuple %s16, %s17
  %s19 = sld [smem:[#allocation0]]
  $region169: #{tpu_custom_call.1} parent=0
    _
  %s21 = ssub.s32 1, %s19
  %s22 = scalar_select 0, %s21, %s19
  $region1: #{tpu_custom_call.1} parent=0
    #allocation2 [shape = 'u8[131072]{0}', space=vmem, size = 0x20000, scoped, tag = 'input window, operand 0']
    #allocation3 [shape = 's32[2]{0}', space=sflag, size = 0x8, scoped, tag = 'scoped memory for tpu_custom_call.1']
    #allocation4 [shape = 's32[2]{0}', space=sflag, size = 0x8, scoped, tag = 'scoped memory for tpu_custom_call.1']
    #allocation5 [shape = 'u8[131072]{0}', space=vmem, size = 0x20000, scoped, tag = 'input window, operand 1']
    #allocation6 [shape = 's32[2]{0}', space=sflag, size = 0x8, scoped, tag = 'scoped memory for tpu_custom_call.1']
    #allocation7 [shape = 'u8[131072]{0}', space=vmem, size = 0x20000, scoped, tag = 'input window, operand 2']
    #allocation8 [shape = 'u8[131072]{0}', space=vmem, size = 0x20000, scoped, tag = 'input window, operand 3']
    #allocation9 [shape = 's32[2]{0}', space=sflag, size = 0x8, scoped, tag = 'scoped memory for tpu_custom_call.1']
    #allocation10 [shape = 'u8[131072]{0}', space=vmem, size = 0x20000, scoped, tag = 'input window, operand 4']
    #allocation11 [shape = 'u8[131072]{0}', space=vmem, size = 0x20000, scoped, tag = 'input window, operand 5']
    #allocation12 [shape = 's32[2]{0}', space=sflag, size = 0x8, scoped, tag = 'scoped memory for tpu_custom_call.1']
    #allocation13 [shape = 'u8[131072]{0}', space=vmem, size = 0x20000, scoped, tag = 'input window, operand 6']
    #allocation14 [shape = 'u8[131072]{0}', space=vmem, size = 0x20000, scoped, tag = 'input window, operand 7']
    #allocation15 [shape = 's32[2]{0}', space=sflag, size = 0x8, scoped, tag = 'scoped memory for tpu_custom_call.1']
    #allocation16 [shape = 'u8[131072]{0}', space=vmem, size = 0x20000, scoped, tag = 'input window, operand 8']
    #allocation17 [shape = 'u8[131072]{0}', space=vmem, size = 0x20000, scoped, tag = 'input window, operand 9']
    #allocation18 [shape = 's32[2]{0}', space=sflag, size = 0x8, scoped, tag = 'scoped memory for tpu_custom_call.1']
    #allocation19 [shape = 'u8[131072]{0}', space=vmem, size = 0x20000, scoped, tag = 'input window, operand 10']
    #allocation20 [shape = 'u8[131072]{0}', space=vmem, size = 0x20000, scoped, tag = 'input window, operand 11']
    #allocation21 [shape = 's32[2]{0}', space=sflag, size = 0x8, scoped, tag = 'scoped memory for tpu_custom_call.1']
    #allocation22 [shape = 'u8[131072]{0}', space=vmem, size = 0x20000, scoped, tag = 'input window, operand 12']
    #allocation23 [shape = 'u8[131072]{0}', space=vmem, size = 0x20000, scoped, tag = 'input window, operand 13']
    #allocation24 [shape = 's32[2]{0}', space=sflag, size = 0x8, scoped, tag = 'scoped memory for tpu_custom_call.1']
    #allocation25 [shape = 'u8[131072]{0}', space=vmem, size = 0x20000, scoped, tag = 'input window, operand 14']
    #allocation26 [shape = 'u8[131072]{0}', space=vmem, size = 0x20000, scoped, tag = 'input window, operand 15']
    #allocation27 [shape = 's32[2]{0}', space=sflag, size = 0x8, scoped, tag = 'scoped memory for tpu_custom_call.1']
    #allocation28 [shape = 'u8[131072]{0}', space=vmem, size = 0x20000, scoped, tag = 'output window, operand 0']
    %23 = vsyncpa [#allocation3], 0
    %s24 = scalar_lea.sflag [#allocation3], 1
    %25 = vsyncpa %s24, 0
    %26 = vsyncpa [#allocation6], 0
    %s27 = scalar_lea.sflag [#allocation6], 1
    %28 = vsyncpa %s27, 0
    %29 = vsyncpa [#allocation9], 0
    %s30 = scalar_lea.sflag [#allocation9], 1
    %31 = vsyncpa %s30, 0
    %32 = vsyncpa [#allocation12], 0
    %s33 = scalar_lea.sflag [#allocation12], 1
    %34 = vsyncpa %s33, 0
    %35 = vsyncpa [#allocation15], 0
    %s36 = scalar_lea.sflag [#allocation15], 1
    %37 = vsyncpa %s36, 0
    %38 = vsyncpa [#allocation18], 0
    %s39 = scalar_lea.sflag [#allocation18], 1
    %40 = vsyncpa %s39, 0
    %41 = vsyncpa [#allocation21], 0
    %s42 = scalar_lea.sflag [#allocation21], 1
    %43 = vsyncpa %s42, 0
    %44 = vsyncpa [#allocation24], 0
    %s45 = scalar_lea.sflag [#allocation24], 1
    %46 = vsyncpa %s45, 0
    %47 = vsyncpa [#allocation27], 0
    %s48 = scalar_lea.sflag [#allocation27], 1
    %49 = vsyncpa %s48, 0
    %50 = vsyncpa [#allocation4], 0
    %s51 = scalar_lea.sflag [#allocation4], 1
    %52 = vsyncpa %s51, 0
    loop: start=0, step=1, limit=4
    $region2: #{tpu_custom_call.1} parent=1 // loop_pre_header
      _
    $region3: #{tpu_custom_call.1} parent=1 // loop_header
      %s54 = sphi 0, %s58
      %p55 = scmp.ge.s32.totalorder %s54, 4
      %s64 = sphi 0, %s66
      %s67 = sphi 0, %s64
      %s68 = sphi 0, %s67
      %s84 = sphi 0, %s68
      %s90 = sphi 0, %s92
      %s93 = sphi 0, %s90
      %s94 = sphi 0, %s93
      %s110 = sphi 0, %s94
      %s116 = sphi 0, %s118
      %s119 = sphi 0, %s116
      %s120 = sphi 0, %s119
      %s136 = sphi 0, %s120
      %s142 = sphi 0, %s144
      %s145 = sphi 0, %s142
      %s146 = sphi 0, %s145
      %s162 = sphi 0, %s146
      %s168 = sphi 0, %s170
      %s171 = sphi 0, %s168
      %s172 = sphi 0, %s171
      %s188 = sphi 0, %s172
      %s194 = sphi 0, %s196
      %s197 = sphi 0, %s194
      %s198 = sphi 0, %s197
      %s214 = sphi 0, %s198
      %s220 = sphi 0, %s222
      %s223 = sphi 0, %s220
      %s224 = sphi 0, %s223
      %s240 = sphi 0, %s224
      %s246 = sphi 0, %s248
      %s249 = sphi 0, %s246
      %s250 = sphi 0, %s249
      %s266 = sphi 0, %s250
      %s272 = sphi 0, %s274
      %s275 = sphi 0, %s272
      %s276 = sphi 0, %s275
      %s292 = sphi 0, %s276
      %s298 = sphi 0, %s300
      %s301 = sphi 0, %s298
      %s302 = sphi 0, %s301
      %s318 = sphi 0, %s302
      %s324 = sphi 0, %s326
      %s327 = sphi 0, %s324
      %s328 = sphi 0, %s327
      %s344 = sphi 0, %s328
      %s350 = sphi 0, %s352
      %s353 = sphi 0, %s350
      %s354 = sphi 0, %s353
      %s370 = sphi 0, %s354
      %s376 = sphi 0, %s378
      %s379 = sphi 0, %s376
      %s380 = sphi 0, %s379
      %s396 = sphi 0, %s380
      %s402 = sphi 0, %s404
      %s405 = sphi 0, %s402
      %s406 = sphi 0, %s405
      %s422 = sphi 0, %s406
      %s428 = sphi 0, %s430
      %s431 = sphi 0, %s428
      %s432 = sphi 0, %s431
      %s448 = sphi 0, %s432
      %s454 = sphi 0, %s456
      %s457 = sphi 0, %s454
      %s458 = sphi 0, %s457
      %s474 = sphi 0, %s458
      %s480 = sphi 0, %s482
      %s483 = sphi 0, %s480
      %s484 = sphi 0, %s483
      %s500 = sphi 0, %s484
      %s506 = sphi 0, %s508
      %s509 = sphi 0, %s506
      %s510 = sphi 0, %s509
      %s526 = sphi 0, %s510
    $region4: #{tpu_custom_call.1} parent=1 // loop_header_branch
      %57 = sbr.rel (%p55) target = $region8
    $region5: #{tpu_custom_call.1} parent=1 // loop_body
      %s59 = ssub.s32 %s54, 1
      %s60 = ssub.s32 %s54, 2
      %s61 = sadd.s32 %s54, 1
      %s62 = ssub.s32 %s54, %s61
      %p63 = scmp.eq.s32.totalorder %s62, 0
      %s65 = sadd.s32 %s64, 1
      %s66 = scalar_select %p63, %s64, %s65
      %p69 = pneg %p63
      %p70 = scmp.eq.s32.totalorder %s54, 1
      %p71 = por %p69, %p70
      %p72 = scmp.ne.s32.totalorder %s64, %s67
      %p73 = scmp.eq.s32.totalorder %s54, 0
      %p74 = por %p72, %p73
      %p75 = scmp.ne.s32.totalorder %s64, %s67
      %p76 = scmp.eq.s32.totalorder %s59, 1
      %p77 = por %p75, %p76
      %p78 = scmp.ne.s32.totalorder %s67, %s68
      %p79 = scmp.eq.s32.totalorder %s59, 0
      %p80 = por %p78, %p79
      %p81 = scmp.ne.s32.totalorder %s67, %s68
      %p82 = scmp.eq.s32.totalorder %s60, 1
      %p83 = por %p81, %p82
      %p85 = scmp.ne.s32.totalorder %s68, %s84
      %p86 = scmp.eq.s32.totalorder %s60, 0
      %p87 = por %p85, %p86
      %s88 = ssub.s32 %s54, %s61
      %p89 = scmp.eq.s32.totalorder %s88, 0
      %s91 = sadd.s32 %s90, 1
      %s92 = scalar_select %p89, %s90, %s91
      %p95 = pneg %p89
      %p96 = scmp.eq.s32.totalorder %s54, 1
      %p97 = por %p95, %p96
      %p98 = scmp.ne.s32.totalorder %s90, %s93
      %p99 = scmp.eq.s32.totalorder %s54, 0
      %p100 = por %p98, %p99
      %p101 = scmp.ne.s32.totalorder %s90, %s93
      %p102 = scmp.eq.s32.totalorder %s59, 1
      %p103 = por %p101, %p102
      %p104 = scmp.ne.s32.totalorder %s93, %s94
      %p105 = scmp.eq.s32.totalorder %s59, 0
      %p106 = por %p104, %p105
      %p107 = scmp.ne.s32.totalorder %s93, %s94
      %p108 = scmp.eq.s32.totalorder %s60, 1
      %p109 = por %p107, %p108
      %p111 = scmp.ne.s32.totalorder %s94, %s110
      %p112 = scmp.eq.s32.totalorder %s60, 0
      %p113 = por %p111, %p112
      %s114 = ssub.s32 %s54, %s61
      %p115 = scmp.eq.s32.totalorder %s114, 0
      %s117 = sadd.s32 %s116, 1
      %s118 = scalar_select %p115, %s116, %s117
      %p121 = pneg %p115
      %p122 = scmp.eq.s32.totalorder %s54, 1
      %p123 = por %p121, %p122
      %p124 = scmp.ne.s32.totalorder %s116, %s119
      %p125 = scmp.eq.s32.totalorder %s54, 0
      %p126 = por %p124, %p125
      %p127 = scmp.ne.s32.totalorder %s116, %s119
      %p128 = scmp.eq.s32.totalorder %s59, 1
      %p129 = por %p127, %p128
      %p130 = scmp.ne.s32.totalorder %s119, %s120
      %p131 = scmp.eq.s32.totalorder %s59, 0
      %p132 = por %p130, %p131
      %p133 = scmp.ne.s32.totalorder %s119, %s120
      %p134 = scmp.eq.s32.totalorder %s60, 1
      %p135 = por %p133, %p134
      %p137 = scmp.ne.s32.totalorder %s120, %s136
      %p138 = scmp.eq.s32.totalorder %s60, 0
      %p139 = por %p137, %p138
      %s140 = ssub.s32 %s54, %s61
      %p141 = scmp.eq.s32.totalorder %s140, 0
      %s143 = sadd.s32 %s142, 1
      %s144 = scalar_select %p141, %s142, %s143
      %p147 = pneg %p141
      %p148 = scmp.eq.s32.totalorder %s54, 1
      %p149 = por %p147, %p148
      %p150 = scmp.ne.s32.totalorder %s142, %s145
      %p151 = scmp.eq.s32.totalorder %s54, 0
      %p152 = por %p150, %p151
      %p153 = scmp.ne.s32.totalorder %s142, %s145
      %p154 = scmp.eq.s32.totalorder %s59, 1
      %p155 = por %p153, %p154
      %p156 = scmp.ne.s32.totalorder %s145, %s146
      %p157 = scmp.eq.s32.totalorder %s59, 0
      %p158 = por %p156, %p157
      %p159 = scmp.ne.s32.totalorder %s145, %s146
      %p160 = scmp.eq.s32.totalorder %s60, 1
      %p161 = por %p159, %p160
      %p163 = scmp.ne.s32.totalorder %s146, %s162
      %p164 = scmp.eq.s32.totalorder %s60, 0
      %p165 = por %p163, %p164
      %s166 = ssub.s32 %s54, %s61
      %p167 = scmp.eq.s32.totalorder %s166, 0
      %s169 = sadd.s32 %s168, 1
      %s170 = scalar_select %p167, %s168, %s169
      %p173 = pneg %p167
      %p174 = scmp.eq.s32.totalorder %s54, 1
      %p175 = por %p173, %p174
      %p176 = scmp.ne.s32.totalorder %s168, %s171
      %p177 = scmp.eq.s32.totalorder %s54, 0
      %p178 = por %p176, %p177
      %p179 = scmp.ne.s32.totalorder %s168, %s171
      %p180 = scmp.eq.s32.totalorder %s59, 1
      %p181 = por %p179, %p180
      %p182 = scmp.ne.s32.totalorder %s171, %s172
      %p183 = scmp.eq.s32.totalorder %s59, 0
      %p184 = por %p182, %p183
      %p185 = scmp.ne.s32.totalorder %s171, %s172
      %p186 = scmp.eq.s32.totalorder %s60, 1
      %p187 = por %p185, %p186
      %p189 = scmp.ne.s32.totalorder %s172, %s188
      %p190 = scmp.eq.s32.totalorder %s60, 0
      %p191 = por %p189, %p190
      %s192 = ssub.s32 %s54, %s61
      %p193 = scmp.eq.s32.totalorder %s192, 0
      %s195 = sadd.s32 %s194, 1
      %s196 = scalar_select %p193, %s194, %s195
      %p199 = pneg %p193
      %p200 = scmp.eq.s32.totalorder %s54, 1
      %p201 = por %p199, %p200
      %p202 = scmp.ne.s32.totalorder %s194, %s197
      %p203 = scmp.eq.s32.totalorder %s54, 0
      %p204 = por %p202, %p203
      %p205 = scmp.ne.s32.totalorder %s194, %s197
      %p206 = scmp.eq.s32.totalorder %s59, 1
      %p207 = por %p205, %p206
      %p208 = scmp.ne.s32.totalorder %s197, %s198
      %p209 = scmp.eq.s32.totalorder %s59, 0
      %p210 = por %p208, %p209
      %p211 = scmp.ne.s32.totalorder %s197, %s198
      %p212 = scmp.eq.s32.totalorder %s60, 1
      %p213 = por %p211, %p212
      %p215 = scmp.ne.s32.totalorder %s198, %s214
      %p216 = scmp.eq.s32.totalorder %s60, 0
      %p217 = por %p215, %p216
      %s218 = ssub.s32 %s54, %s61
      %p219 = scmp.eq.s32.totalorder %s218, 0
      %s221 = sadd.s32 %s220, 1
      %s222 = scalar_select %p219, %s220, %s221
      %p225 = pneg %p219
      %p226 = scmp.eq.s32.totalorder %s54, 1
      %p227 = por %p225, %p226
      %p228 = scmp.ne.s32.totalorder %s220, %s223
      %p229 = scmp.eq.s32.totalorder %s54, 0
      %p230 = por %p228, %p229
      %p231 = scmp.ne.s32.totalorder %s220, %s223
      %p232 = scmp.eq.s32.totalorder %s59, 1
      %p233 = por %p231, %p232
      %p234 = scmp.ne.s32.totalorder %s223, %s224
      %p235 = scmp.eq.s32.totalorder %s59, 0
      %p236 = por %p234, %p235
      %p237 = scmp.ne.s32.totalorder %s223, %s224
      %p238 = scmp.eq.s32.totalorder %s60, 1
      %p239 = por %p237, %p238
      %p241 = scmp.ne.s32.totalorder %s224, %s240
      %p242 = scmp.eq.s32.totalorder %s60, 0
      %p243 = por %p241, %p242
      %s244 = ssub.s32 %s54, %s61
      %p245 = scmp.eq.s32.totalorder %s244, 0
      %s247 = sadd.s32 %s246, 1
      %s248 = scalar_select %p245, %s246, %s247
      %p251 = pneg %p245
      %p252 = scmp.eq.s32.totalorder %s54, 1
      %p253 = por %p251, %p252
      %p254 = scmp.ne.s32.totalorder %s246, %s249
      %p255 = scmp.eq.s32.totalorder %s54, 0
      %p256 = por %p254, %p255
      %p257 = scmp.ne.s32.totalorder %s246, %s249
      %p258 = scmp.eq.s32.totalorder %s59, 1
      %p259 = por %p257, %p258
      %p260 = scmp.ne.s32.totalorder %s249, %s250
      %p261 = scmp.eq.s32.totalorder %s59, 0
      %p262 = por %p260, %p261
      %p263 = scmp.ne.s32.totalorder %s249, %s250
      %p264 = scmp.eq.s32.totalorder %s60, 1
      %p265 = por %p263, %p264
      %p267 = scmp.ne.s32.totalorder %s250, %s266
      %p268 = scmp.eq.s32.totalorder %s60, 0
      %p269 = por %p267, %p268
      %s270 = ssub.s32 %s54, %s61
      %p271 = scmp.eq.s32.totalorder %s270, 0
      %s273 = sadd.s32 %s272, 1
      %s274 = scalar_select %p271, %s272, %s273
      %p277 = pneg %p271
      %p278 = scmp.eq.s32.totalorder %s54, 1
      %p279 = por %p277, %p278
      %p280 = scmp.ne.s32.totalorder %s272, %s275
      %p281 = scmp.eq.s32.totalorder %s54, 0
      %p282 = por %p280, %p281
      %p283 = scmp.ne.s32.totalorder %s272, %s275
      %p284 = scmp.eq.s32.totalorder %s59, 1
      %p285 = por %p283, %p284
      %p286 = scmp.ne.s32.totalorder %s275, %s276
      %p287 = scmp.eq.s32.totalorder %s59, 0
      %p288 = por %p286, %p287
      %p289 = scmp.ne.s32.totalorder %s275, %s276
      %p290 = scmp.eq.s32.totalorder %s60, 1
      %p291 = por %p289, %p290
      %p293 = scmp.ne.s32.totalorder %s276, %s292
      %p294 = scmp.eq.s32.totalorder %s60, 0
      %p295 = por %p293, %p294
      %s296 = ssub.s32 %s54, %s61
      %p297 = scmp.eq.s32.totalorder %s296, 0
      %s299 = sadd.s32 %s298, 1
      %s300 = scalar_select %p297, %s298, %s299
      %p303 = pneg %p297
      %p304 = scmp.eq.s32.totalorder %s54, 1
      %p305 = por %p303, %p304
      %p306 = scmp.ne.s32.totalorder %s298, %s301
      %p307 = scmp.eq.s32.totalorder %s54, 0
      %p308 = por %p306, %p307
      %p309 = scmp.ne.s32.totalorder %s298, %s301
      %p310 = scmp.eq.s32.totalorder %s59, 1
      %p311 = por %p309, %p310
      %p312 = scmp.ne.s32.totalorder %s301, %s302
      %p313 = scmp.eq.s32.totalorder %s59, 0
      %p314 = por %p312, %p313
      %p315 = scmp.ne.s32.totalorder %s301, %s302
      %p316 = scmp.eq.s32.totalorder %s60, 1
      %p317 = por %p315, %p316
      %p319 = scmp.ne.s32.totalorder %s302, %s318
      %p320 = scmp.eq.s32.totalorder %s60, 0
      %p321 = por %p319, %p320
      %s322 = ssub.s32 %s54, %s61
      %p323 = scmp.eq.s32.totalorder %s322, 0
      %s325 = sadd.s32 %s324, 1
      %s326 = scalar_select %p323, %s324, %s325
      %p329 = pneg %p323
      %p330 = scmp.eq.s32.totalorder %s54, 1
      %p331 = por %p329, %p330
      %p332 = scmp.ne.s32.totalorder %s324, %s327
      %p333 = scmp.eq.s32.totalorder %s54, 0
      %p334 = por %p332, %p333
      %p335 = scmp.ne.s32.totalorder %s324, %s327
      %p336 = scmp.eq.s32.totalorder %s59, 1
      %p337 = por %p335, %p336
      %p338 = scmp.ne.s32.totalorder %s327, %s328
      %p339 = scmp.eq.s32.totalorder %s59, 0
      %p340 = por %p338, %p339
      %p341 = scmp.ne.s32.totalorder %s327, %s328
      %p342 = scmp.eq.s32.totalorder %s60, 1
      %p343 = por %p341, %p342
      %p345 = scmp.ne.s32.totalorder %s328, %s344
      %p346 = scmp.eq.s32.totalorder %s60, 0
      %p347 = por %p345, %p346
      %s348 = ssub.s32 %s54, %s61
      %p349 = scmp.eq.s32.totalorder %s348, 0
      %s351 = sadd.s32 %s350, 1
      %s352 = scalar_select %p349, %s350, %s351
      %p355 = pneg %p349
      %p356 = scmp.eq.s32.totalorder %s54, 1
      %p357 = por %p355, %p356
      %p358 = scmp.ne.s32.totalorder %s350, %s353
      %p359 = scmp.eq.s32.totalorder %s54, 0
      %p360 = por %p358, %p359
      %p361 = scmp.ne.s32.totalorder %s350, %s353
      %p362 = scmp.eq.s32.totalorder %s59, 1
      %p363 = por %p361, %p362
      %p364 = scmp.ne.s32.totalorder %s353, %s354
      %p365 = scmp.eq.s32.totalorder %s59, 0
      %p366 = por %p364, %p365
      %p367 = scmp.ne.s32.totalorder %s353, %s354
      %p368 = scmp.eq.s32.totalorder %s60, 1
      %p369 = por %p367, %p368
      %p371 = scmp.ne.s32.totalorder %s354, %s370
      %p372 = scmp.eq.s32.totalorder %s60, 0
      %p373 = por %p371, %p372
      %s374 = ssub.s32 %s54, %s61
      %p375 = scmp.eq.s32.totalorder %s374, 0
      %s377 = sadd.s32 %s376, 1
      %s378 = scalar_select %p375, %s376, %s377
      %p381 = pneg %p375
      %p382 = scmp.eq.s32.totalorder %s54, 1
      %p383 = por %p381, %p382
      %p384 = scmp.ne.s32.totalorder %s376, %s379
      %p385 = scmp.eq.s32.totalorder %s54, 0
      %p386 = por %p384, %p385
      %p387 = scmp.ne.s32.totalorder %s376, %s379
      %p388 = scmp.eq.s32.totalorder %s59, 1
      %p389 = por %p387, %p388
      %p390 = scmp.ne.s32.totalorder %s379, %s380
      %p391 = scmp.eq.s32.totalorder %s59, 0
      %p392 = por %p390, %p391
      %p393 = scmp.ne.s32.totalorder %s379, %s380
      %p394 = scmp.eq.s32.totalorder %s60, 1
      %p395 = por %p393, %p394
      %p397 = scmp.ne.s32.totalorder %s380, %s396
      %p398 = scmp.eq.s32.totalorder %s60, 0
      %p399 = por %p397, %p398
      %s400 = ssub.s32 %s54, %s61
      %p401 = scmp.eq.s32.totalorder %s400, 0
      %s403 = sadd.s32 %s402, 1
      %s404 = scalar_select %p401, %s402, %s403
      %p407 = pneg %p401
      %p408 = scmp.eq.s32.totalorder %s54, 1
      %p409 = por %p407, %p408
      %p410 = scmp.ne.s32.totalorder %s402, %s405
      %p411 = scmp.eq.s32.totalorder %s54, 0
      %p412 = por %p410, %p411
      %p413 = scmp.ne.s32.totalorder %s402, %s405
      %p414 = scmp.eq.s32.totalorder %s59, 1
      %p415 = por %p413, %p414
      %p416 = scmp.ne.s32.totalorder %s405, %s406
      %p417 = scmp.eq.s32.totalorder %s59, 0
      %p418 = por %p416, %p417
      %p419 = scmp.ne.s32.totalorder %s405, %s406
      %p420 = scmp.eq.s32.totalorder %s60, 1
      %p421 = por %p419, %p420
      %p423 = scmp.ne.s32.totalorder %s406, %s422
      %p424 = scmp.eq.s32.totalorder %s60, 0
      %p425 = por %p423, %p424
      %s426 = ssub.s32 %s54, %s61
      %p427 = scmp.eq.s32.totalorder %s426, 0
      %s429 = sadd.s32 %s428, 1
      %s430 = scalar_select %p427, %s428, %s429
      %p433 = pneg %p427
      %p434 = scmp.eq.s32.totalorder %s54, 1
      %p435 = por %p433, %p434
      %p436 = scmp.ne.s32.totalorder %s428, %s431
      %p437 = scmp.eq.s32.totalorder %s54, 0
      %p438 = por %p436, %p437
      %p439 = scmp.ne.s32.totalorder %s428, %s431
      %p440 = scmp.eq.s32.totalorder %s59, 1
      %p441 = por %p439, %p440
      %p442 = scmp.ne.s32.totalorder %s431, %s432
      %p443 = scmp.eq.s32.totalorder %s59, 0
      %p444 = por %p442, %p443
      %p445 = scmp.ne.s32.totalorder %s431, %s432
      %p446 = scmp.eq.s32.totalorder %s60, 1
      %p447 = por %p445, %p446
      %p449 = scmp.ne.s32.totalorder %s432, %s448
      %p450 = scmp.eq.s32.totalorder %s60, 0
      %p451 = por %p449, %p450
      %s452 = ssub.s32 %s54, %s61
      %p453 = scmp.eq.s32.totalorder %s452, 0
      %s455 = sadd.s32 %s454, 1
      %s456 = scalar_select %p453, %s454, %s455
      %p459 = pneg %p453
      %p460 = scmp.eq.s32.totalorder %s54, 1
      %p461 = por %p459, %p460
      %p462 = scmp.ne.s32.totalorder %s454, %s457
      %p463 = scmp.eq.s32.totalorder %s54, 0
      %p464 = por %p462, %p463
      %p465 = scmp.ne.s32.totalorder %s454, %s457
      %p466 = scmp.eq.s32.totalorder %s59, 1
      %p467 = por %p465, %p466
      %p468 = scmp.ne.s32.totalorder %s457, %s458
      %p469 = scmp.eq.s32.totalorder %s59, 0
      %p470 = por %p468, %p469
      %p471 = scmp.ne.s32.totalorder %s457, %s458
      %p472 = scmp.eq.s32.totalorder %s60, 1
      %p473 = por %p471, %p472
      %p475 = scmp.ne.s32.totalorder %s458, %s474
      %p476 = scmp.eq.s32.totalorder %s60, 0
      %p477 = por %p475, %p476
      %s478 = ssub.s32 %s54, %s61
      %p479 = scmp.eq.s32.totalorder %s478, 0
      %s481 = sadd.s32 %s480, 1
      %s482 = scalar_select %p479, %s480, %s481
      %p485 = pneg %p479
      %p486 = scmp.eq.s32.totalorder %s54, 1
      %p487 = por %p485, %p486
      %p488 = scmp.ne.s32.totalorder %s480, %s483
      %p489 = scmp.eq.s32.totalorder %s54, 0
      %p490 = por %p488, %p489
      %p491 = scmp.ne.s32.totalorder %s480, %s483
      %p492 = scmp.eq.s32.totalorder %s59, 1
      %p493 = por %p491, %p492
      %p494 = scmp.ne.s32.totalorder %s483, %s484
      %p495 = scmp.eq.s32.totalorder %s59, 0
      %p496 = por %p494, %p495
      %p497 = scmp.ne.s32.totalorder %s483, %s484
      %p498 = scmp.eq.s32.totalorder %s60, 1
      %p499 = por %p497, %p498
      %p501 = scmp.ne.s32.totalorder %s484, %s500
      %p502 = scmp.eq.s32.totalorder %s60, 0
      %p503 = por %p501, %p502
      %s504 = ssub.s32 %s54, %s61
      %p505 = scmp.eq.s32.totalorder %s504, 0
      %s507 = sadd.s32 %s506, 1
      %s508 = scalar_select %p505, %s506, %s507
      %p511 = pneg %p505
      %p512 = scmp.eq.s32.totalorder %s54, 1
      %p513 = por %p511, %p512
      %p514 = scmp.ne.s32.totalorder %s506, %s509
      %p515 = scmp.eq.s32.totalorder %s54, 0
      %p516 = por %p514, %p515
      %p517 = scmp.ne.s32.totalorder %s506, %s509
      %p518 = scmp.eq.s32.totalorder %s59, 1
      %p519 = por %p517, %p518
      %p520 = scmp.ne.s32.totalorder %s509, %s510
      %p521 = scmp.eq.s32.totalorder %s59, 0
      %p522 = por %p520, %p521
      %p523 = scmp.ne.s32.totalorder %s509, %s510
      %p524 = scmp.eq.s32.totalorder %s60, 1
      %p525 = por %p523, %p524
      %p527 = scmp.ne.s32.totalorder %s510, %s526
      %p528 = scmp.eq.s32.totalorder %s60, 0
      %p529 = por %p527, %p528
      %p530 = scmp.le.s32.totalorder 1, %s54
      %p531 = scmp.lt.s32.totalorder %s54, 3
      %p532 = pnand %p530, %p531
      %p533 = pneg %p532
      // Predicated region
      $region9: #{tpu_custom_call.1} parent=5 // pred_check
        _
      $region10: #{tpu_custom_call.1} parent=5 // pred_check_branch
        %535 = sbr.rel (%p532) target = $region12
      $region11: #{tpu_custom_call.1} parent=5 // pred_region
        %s536 = ssub.s32 %s54, 1
      $region12: #{tpu_custom_call.1} parent=5 // pred_fallthru
        _
      %p537 = scmp.lt.s32.totalorder %s54, 2
      // Predicated region
      $region13: #{tpu_custom_call.1} parent=5 // pred_check
        %p538 = pneg %p537
      $region14: #{tpu_custom_call.1} parent=5 // pred_check_branch
        %540 = sbr.rel (%p538) target = $region16
      $region15: #{tpu_custom_call.1} parent=5 // pred_region
        // Predicated region
        $region17: #{tpu_custom_call.1} parent=15 // pred_check
          %p541 = pneg %p74
        $region18: #{tpu_custom_call.1} parent=15 // pred_check_branch
          %543 = sbr.rel (%p541) target = $region20
        $region19: #{tpu_custom_call.1} parent=15 // pred_region
          %s544 = sand.u32 %s64, 1
          %s545 = scalar_lea.sflag [#allocation3], %s544
          %s546 = sand.u32 %s64, 1
          %s547 = smul.addr %s546, 128
          %s548 = scalar_lea.vmem [#allocation2], %s547
          %s549 = smul.u32 16, %s54
          %551 = vsyncadd %s545, 0
          %s552 = smul.addr %s549, 8
          %s553 = scalar_lea.hbm %s0, %s552
          %s554 = sshll.u32 %s553, 4
          %s555 = int_to_ptr.hbm [resolvable:$true] %s554
          %s556 = sshll.u32 %s548, 4
          %s557 = int_to_ptr.vmem [resolvable:$true] %s556
          %562 = dma.hbm_to_vmem [thread:$0]  %s555, 2048, %s557, %s545, 128, 128, 8
        $region20: #{tpu_custom_call.1} parent=15 // pred_fallthru
          _
        // Predicated region
        $region21: #{tpu_custom_call.1} parent=15 // pred_check
          %p563 = pneg %p100
        $region22: #{tpu_custom_call.1} parent=15 // pred_check_branch
          %565 = sbr.rel (%p563) target = $region24
        $region23: #{tpu_custom_call.1} parent=15 // pred_region
          %s566 = sand.u32 %s54, 1
          %s567 = scalar_lea.sflag [#allocation6], %s566
          %s568 = sand.u32 %s90, 1
          %s569 = smul.addr %s568, 128
          %s570 = scalar_lea.vmem [#allocation5], %s569
          %s571 = smul.u32 16, %s54
          %573 = vsyncadd %s567, 0
          %s574 = smul.addr %s571, 8
          %s575 = scalar_lea.hbm %s1, %s574
          %s576 = sshll.u32 %s575, 4
          %s577 = int_to_ptr.hbm [resolvable:$true] %s576
          %s578 = sshll.u32 %s570, 4
          %s579 = int_to_ptr.vmem [resolvable:$true] %s578
          %584 = dma.hbm_to_vmem [thread:$0]  %s577, 2048, %s579, %s567, 128, 128, 8
        $region24: #{tpu_custom_call.1} parent=15 // pred_fallthru
          _
        // Predicated region
        $region25: #{tpu_custom_call.1} parent=15 // pred_check
          %p585 = pneg %p126
        $region26: #{tpu_custom_call.1} parent=15 // pred_check_branch
          %587 = sbr.rel (%p585) target = $region28
        $region27: #{tpu_custom_call.1} parent=15 // pred_region
          %s588 = sand.u32 %s54, 1
          %s589 = scalar_lea.sflag [#allocation6], %s588
          %s590 = sand.u32 %s116, 1
          %s591 = smul.addr %s590, 128
          %s592 = scalar_lea.vmem [#allocation7], %s591
          %s593 = smul.u32 16, %s54
          %595 = vsyncadd %s589, 0
          %s596 = smul.addr %s593, 8
          %s597 = scalar_lea.hbm %s2, %s596
          %s598 = sshll.u32 %s597, 4
          %s599 = int_to_ptr.hbm [resolvable:$true] %s598
          %s600 = sshll.u32 %s592, 4
          %s601 = int_to_ptr.vmem [resolvable:$true] %s600
          %606 = dma.hbm_to_vmem [thread:$0]  %s599, 2048, %s601, %s589, 128, 128, 8
        $region28: #{tpu_custom_call.1} parent=15 // pred_fallthru
          _
        // Predicated region
        $region29: #{tpu_custom_call.1} parent=15 // pred_check
          %p607 = pneg %p152
        $region30: #{tpu_custom_call.1} parent=15 // pred_check_branch
          %609 = sbr.rel (%p607) target = $region32
        $region31: #{tpu_custom_call.1} parent=15 // pred_region
          %s610 = sand.u32 %s54, 1
          %s611 = scalar_lea.sflag [#allocation9], %s610
          %s612 = sand.u32 %s142, 1
          %s613 = smul.addr %s612, 128
          %s614 = scalar_lea.vmem [#allocation8], %s613
          %s615 = smul.u32 16, %s54
          %617 = vsyncadd %s611, 0
          %s618 = smul.addr %s615, 8
          %s619 = scalar_lea.hbm %s3, %s618
          %s620 = sshll.u32 %s619, 4
          %s621 = int_to_ptr.hbm [resolvable:$true] %s620
          %s622 = sshll.u32 %s614, 4
          %s623 = int_to_ptr.vmem [resolvable:$true] %s622
          %628 = dma.hbm_to_vmem [thread:$0]  %s621, 2048, %s623, %s611, 128, 128, 8
        $region32: #{tpu_custom_call.1} parent=15 // pred_fallthru
          _
        // Predicated region
        $region33: #{tpu_custom_call.1} parent=15 // pred_check
          %p629 = pneg %p178
        $region34: #{tpu_custom_call.1} parent=15 // pred_check_branch
          %631 = sbr.rel (%p629) target = $region36
        $region35: #{tpu_custom_call.1} parent=15 // pred_region
          %s632 = sand.u32 %s54, 1
          %s633 = scalar_lea.sflag [#allocation9], %s632
          %s634 = sand.u32 %s168, 1
          %s635 = smul.addr %s634, 128
          %s636 = scalar_lea.vmem [#allocation10], %s635
          %s637 = smul.u32 16, %s54
          %639 = vsyncadd %s633, 0
          %s640 = smul.addr %s637, 8
          %s641 = scalar_lea.hbm %s4, %s640
          %s642 = sshll.u32 %s641, 4
          %s643 = int_to_ptr.hbm [resolvable:$true] %s642
          %s644 = sshll.u32 %s636, 4
          %s645 = int_to_ptr.vmem [resolvable:$true] %s644
          %650 = dma.hbm_to_vmem [thread:$0]  %s643, 2048, %s645, %s633, 128, 128, 8
        $region36: #{tpu_custom_call.1} parent=15 // pred_fallthru
          _
        // Predicated region
        $region37: #{tpu_custom_call.1} parent=15 // pred_check
          %p651 = pneg %p204
        $region38: #{tpu_custom_call.1} parent=15 // pred_check_branch
          %653 = sbr.rel (%p651) target = $region40
        $region39: #{tpu_custom_call.1} parent=15 // pred_region
          %s654 = sand.u32 %s54, 1
          %s655 = scalar_lea.sflag [#allocation12], %s654
          %s656 = sand.u32 %s194, 1
          %s657 = smul.addr %s656, 128
          %s658 = scalar_lea.vmem [#allocation11], %s657
          %s659 = smul.u32 16, %s54
          %661 = vsyncadd %s655, 0
          %s662 = smul.addr %s659, 8
          %s663 = scalar_lea.hbm %s5, %s662
          %s664 = sshll.u32 %s663, 4
          %s665 = int_to_ptr.hbm [resolvable:$true] %s664
          %s666 = sshll.u32 %s658, 4
          %s667 = int_to_ptr.vmem [resolvable:$true] %s666
          %672 = dma.hbm_to_vmem [thread:$0]  %s665, 2048, %s667, %s655, 128, 128, 8
        $region40: #{tpu_custom_call.1} parent=15 // pred_fallthru
          _
        // Predicated region
        $region41: #{tpu_custom_call.1} parent=15 // pred_check
          %p673 = pneg %p230
        $region42: #{tpu_custom_call.1} parent=15 // pred_check_branch
          %675 = sbr.rel (%p673) target = $region44
        $region43: #{tpu_custom_call.1} parent=15 // pred_region
          %s676 = sand.u32 %s54, 1
          %s677 = scalar_lea.sflag [#allocation12], %s676
          %s678 = sand.u32 %s220, 1
          %s679 = smul.addr %s678, 128
          %s680 = scalar_lea.vmem [#allocation13], %s679
          %s681 = smul.u32 16, %s54
          %683 = vsyncadd %s677, 0
          %s684 = smul.addr %s681, 8
          %s685 = scalar_lea.hbm %s6, %s684
          %s686 = sshll.u32 %s685, 4
          %s687 = int_to_ptr.hbm [resolvable:$true] %s686
          %s688 = sshll.u32 %s680, 4
          %s689 = int_to_ptr.vmem [resolvable:$true] %s688
          %694 = dma.hbm_to_vmem [thread:$0]  %s687, 2048, %s689, %s677, 128, 128, 8
        $region44: #{tpu_custom_call.1} parent=15 // pred_fallthru
          _
        // Predicated region
        $region45: #{tpu_custom_call.1} parent=15 // pred_check
          %p695 = pneg %p256
        $region46: #{tpu_custom_call.1} parent=15 // pred_check_branch
          %697 = sbr.rel (%p695) target = $region48
        $region47: #{tpu_custom_call.1} parent=15 // pred_region
          %s698 = sand.u32 %s54, 1
          %s699 = scalar_lea.sflag [#allocation15], %s698
          %s700 = sand.u32 %s246, 1
          %s701 = smul.addr %s700, 128
          %s702 = scalar_lea.vmem [#allocation14], %s701
          %s703 = smul.u32 16, %s54
          %705 = vsyncadd %s699, 0
          %s706 = smul.addr %s703, 8
          %s707 = scalar_lea.hbm %s7, %s706
          %s708 = sshll.u32 %s707, 4
          %s709 = int_to_ptr.hbm [resolvable:$true] %s708
          %s710 = sshll.u32 %s702, 4
          %s711 = int_to_ptr.vmem [resolvable:$true] %s710
          %716 = dma.hbm_to_vmem [thread:$0]  %s709, 2048, %s711, %s699, 128, 128, 8
        $region48: #{tpu_custom_call.1} parent=15 // pred_fallthru
          _
        // Predicated region
        $region49: #{tpu_custom_call.1} parent=15 // pred_check
          %p717 = pneg %p282
        $region50: #{tpu_custom_call.1} parent=15 // pred_check_branch
          %719 = sbr.rel (%p717) target = $region52
        $region51: #{tpu_custom_call.1} parent=15 // pred_region
          %s720 = sand.u32 %s54, 1
          %s721 = scalar_lea.sflag [#allocation15], %s720
          %s722 = sand.u32 %s272, 1
          %s723 = smul.addr %s722, 128
          %s724 = scalar_lea.vmem [#allocation16], %s723
          %s725 = smul.u32 16, %s54
          %727 = vsyncadd %s721, 0
          %s728 = smul.addr %s725, 8
          %s729 = scalar_lea.hbm %s8, %s728
          %s730 = sshll.u32 %s729, 4
          %s731 = int_to_ptr.hbm [resolvable:$true] %s730
          %s732 = sshll.u32 %s724, 4
          %s733 = int_to_ptr.vmem [resolvable:$true] %s732
          %738 = dma.hbm_to_vmem [thread:$0]  %s731, 2048, %s733, %s721, 128, 128, 8
        $region52: #{tpu_custom_call.1} parent=15 // pred_fallthru
          _
        // Predicated region
        $region53: #{tpu_custom_call.1} parent=15 // pred_check
          %p739 = pneg %p308
        $region54: #{tpu_custom_call.1} parent=15 // pred_check_branch
          %741 = sbr.rel (%p739) target = $region56
        $region55: #{tpu_custom_call.1} parent=15 // pred_region
          %s742 = sand.u32 %s54, 1
          %s743 = scalar_lea.sflag [#allocation18], %s742
          %s744 = sand.u32 %s298, 1
          %s745 = smul.addr %s744, 128
          %s746 = scalar_lea.vmem [#allocation17], %s745
          %s747 = smul.u32 16, %s54
          %749 = vsyncadd %s743, 0
          %s750 = smul.addr %s747, 8
          %s751 = scalar_lea.hbm %s9, %s750
          %s752 = sshll.u32 %s751, 4
          %s753 = int_to_ptr.hbm [resolvable:$true] %s752
          %s754 = sshll.u32 %s746, 4
          %s755 = int_to_ptr.vmem [resolvable:$true] %s754
          %760 = dma.hbm_to_vmem [thread:$0]  %s753, 2048, %s755, %s743, 128, 128, 8
        $region56: #{tpu_custom_call.1} parent=15 // pred_fallthru
          _
        // Predicated region
        $region57: #{tpu_custom_call.1} parent=15 // pred_check
          %p761 = pneg %p334
        $region58: #{tpu_custom_call.1} parent=15 // pred_check_branch
          %763 = sbr.rel (%p761) target = $region60
        $region59: #{tpu_custom_call.1} parent=15 // pred_region
          %s764 = sand.u32 %s54, 1
          %s765 = scalar_lea.sflag [#allocation18], %s764
          %s766 = sand.u32 %s324, 1
          %s767 = smul.addr %s766, 128
          %s768 = scalar_lea.vmem [#allocation19], %s767
          %s769 = smul.u32 16, %s54
          %771 = vsyncadd %s765, 0
          %s772 = smul.addr %s769, 8
          %s773 = scalar_lea.hbm %s10, %s772
          %s774 = sshll.u32 %s773, 4
          %s775 = int_to_ptr.hbm [resolvable:$true] %s774
          %s776 = sshll.u32 %s768, 4
          %s777 = int_to_ptr.vmem [resolvable:$true] %s776
          %782 = dma.hbm_to_vmem [thread:$0]  %s775, 2048, %s777, %s765, 128, 128, 8
        $region60: #{tpu_custom_call.1} parent=15 // pred_fallthru
          _
        // Predicated region
        $region61: #{tpu_custom_call.1} parent=15 // pred_check
          %p783 = pneg %p360
        $region62: #{tpu_custom_call.1} parent=15 // pred_check_branch
          %785 = sbr.rel (%p783) target = $region64
        $region63: #{tpu_custom_call.1} parent=15 // pred_region
          %s786 = sand.u32 %s54, 1
          %s787 = scalar_lea.sflag [#allocation21], %s786
          %s788 = sand.u32 %s350, 1
          %s789 = smul.addr %s788, 128
          %s790 = scalar_lea.vmem [#allocation20], %s789
          %s791 = smul.u32 16, %s54
          %793 = vsyncadd %s787, 0
          %s794 = smul.addr %s791, 8
          %s795 = scalar_lea.hbm %s11, %s794
          %s796 = sshll.u32 %s795, 4
          %s797 = int_to_ptr.hbm [resolvable:$true] %s796
          %s798 = sshll.u32 %s790, 4
          %s799 = int_to_ptr.vmem [resolvable:$true] %s798
          %804 = dma.hbm_to_vmem [thread:$0]  %s797, 2048, %s799, %s787, 128, 128, 8
        $region64: #{tpu_custom_call.1} parent=15 // pred_fallthru
          _
        // Predicated region
        $region65: #{tpu_custom_call.1} parent=15 // pred_check
          %p805 = pneg %p386
        $region66: #{tpu_custom_call.1} parent=15 // pred_check_branch
          %807 = sbr.rel (%p805) target = $region68
        $region67: #{tpu_custom_call.1} parent=15 // pred_region
          %s808 = sand.u32 %s54, 1
          %s809 = scalar_lea.sflag [#allocation21], %s808
          %s810 = sand.u32 %s376, 1
          %s811 = smul.addr %s810, 128
          %s812 = scalar_lea.vmem [#allocation22], %s811
          %s813 = smul.u32 16, %s54
          %815 = vsyncadd %s809, 0
          %s816 = smul.addr %s813, 8
          %s817 = scalar_lea.hbm %s12, %s816
          %s818 = sshll.u32 %s817, 4
          %s819 = int_to_ptr.hbm [resolvable:$true] %s818
          %s820 = sshll.u32 %s812, 4
          %s821 = int_to_ptr.vmem [resolvable:$true] %s820
          %826 = dma.hbm_to_vmem [thread:$0]  %s819, 2048, %s821, %s809, 128, 128, 8
        $region68: #{tpu_custom_call.1} parent=15 // pred_fallthru
          _
        // Predicated region
        $region69: #{tpu_custom_call.1} parent=15 // pred_check
          %p827 = pneg %p412
        $region70: #{tpu_custom_call.1} parent=15 // pred_check_branch
          %829 = sbr.rel (%p827) target = $region72
        $region71: #{tpu_custom_call.1} parent=15 // pred_region
          %s830 = sand.u32 %s54, 1
          %s831 = scalar_lea.sflag [#allocation24], %s830
          %s832 = sand.u32 %s402, 1
          %s833 = smul.addr %s832, 128
          %s834 = scalar_lea.vmem [#allocation23], %s833
          %s835 = smul.u32 16, %s54
          %837 = vsyncadd %s831, 0
          %s838 = smul.addr %s835, 8
          %s839 = scalar_lea.hbm %s13, %s838
          %s840 = sshll.u32 %s839, 4
          %s841 = int_to_ptr.hbm [resolvable:$true] %s840
          %s842 = sshll.u32 %s834, 4
          %s843 = int_to_ptr.vmem [resolvable:$true] %s842
          %848 = dma.hbm_to_vmem [thread:$0]  %s841, 2048, %s843, %s831, 128, 128, 8
        $region72: #{tpu_custom_call.1} parent=15 // pred_fallthru
          _
        // Predicated region
        $region73: #{tpu_custom_call.1} parent=15 // pred_check
          %p849 = pneg %p438
        $region74: #{tpu_custom_call.1} parent=15 // pred_check_branch
          %851 = sbr.rel (%p849) target = $region76
        $region75: #{tpu_custom_call.1} parent=15 // pred_region
          %s852 = sand.u32 %s54, 1
          %s853 = scalar_lea.sflag [#allocation24], %s852
          %s854 = sand.u32 %s428, 1
          %s855 = smul.addr %s854, 128
          %s856 = scalar_lea.vmem [#allocation25], %s855
          %s857 = smul.u32 16, %s54
          %859 = vsyncadd %s853, 0
          %s860 = smul.addr %s857, 8
          %s861 = scalar_lea.hbm %s14, %s860
          %s862 = sshll.u32 %s861, 4
          %s863 = int_to_ptr.hbm [resolvable:$true] %s862
          %s864 = sshll.u32 %s856, 4
          %s865 = int_to_ptr.vmem [resolvable:$true] %s864
          %870 = dma.hbm_to_vmem [thread:$0]  %s863, 2048, %s865, %s853, 128, 128, 8
        $region76: #{tpu_custom_call.1} parent=15 // pred_fallthru
          _
        // Predicated region
        $region77: #{tpu_custom_call.1} parent=15 // pred_check
          %p871 = pneg %p464
        $region78: #{tpu_custom_call.1} parent=15 // pred_check_branch
          %873 = sbr.rel (%p871) target = $region80
        $region79: #{tpu_custom_call.1} parent=15 // pred_region
          %s874 = sand.u32 %s454, 1
          %s875 = scalar_lea.sflag [#allocation27], %s874
          %s876 = sand.u32 %s454, 1
          %s877 = smul.addr %s876, 128
          %s878 = scalar_lea.vmem [#allocation26], %s877
          %s879 = smul.u32 16, %s54
          %881 = vsyncadd %s875, 0
          %s882 = smul.addr %s879, 8
          %s883 = scalar_lea.hbm %s15, %s882
          %s884 = sshll.u32 %s883, 4
          %s885 = int_to_ptr.hbm [resolvable:$true] %s884
          %s886 = sshll.u32 %s878, 4
          %s887 = int_to_ptr.vmem [resolvable:$true] %s886
          %892 = dma.hbm_to_vmem [thread:$0]  %s885, 2048, %s887, %s875, 128, 128, 8
        $region80: #{tpu_custom_call.1} parent=15 // pred_fallthru
          _
      $region16: #{tpu_custom_call.1} parent=5 // pred_fallthru
        _
      %p893 = scmp.le.s32.totalorder 1, %s54
      %p894 = scmp.lt.s32.totalorder %s54, 3
      %p895 = pnand %p893, %p894
      %p896 = pneg %p895
      // Predicated region
      $region81: #{tpu_custom_call.1} parent=5 // pred_check
        _
      $region82: #{tpu_custom_call.1} parent=5 // pred_check_branch
        %898 = sbr.rel (%p895) target = $region84
      $region83: #{tpu_custom_call.1} parent=5 // pred_region
        %s899 = ssub.s32 %s54, 1
        %s900 = sand.u32 %s67, 1
        %s901 = scalar_lea.sflag [#allocation3], %s900
        %s902 = sand.u32 %s67, 1
        %s903 = smul.addr %s902, 128
        %s904 = scalar_lea.vmem [#allocation2], %s903
        // Predicated region
        $region85: #{tpu_custom_call.1} parent=83 // pred_check
          %p905 = pneg %p80
        $region86: #{tpu_custom_call.1} parent=83 // pred_check_branch
          %907 = sbr.rel (%p905) target = $region88
        $region87: #{tpu_custom_call.1} parent=83 // pred_region
          %909 = dma.done %s901, 2048
        $region88: #{tpu_custom_call.1} parent=83 // pred_fallthru
          _
        %s910 = sand.u32 %s59, 1
        %s911 = scalar_lea.sflag [#allocation6], %s910
        %s912 = sand.u32 %s93, 1
        %s913 = smul.addr %s912, 128
        %s914 = scalar_lea.vmem [#allocation5], %s913
        // Predicated region
        $region89: #{tpu_custom_call.1} parent=83 // pred_check
          %p915 = pneg %p106
        $region90: #{tpu_custom_call.1} parent=83 // pred_check_branch
          %917 = sbr.rel (%p915) target = $region92
        $region91: #{tpu_custom_call.1} parent=83 // pred_region
          %919 = dma.done %s911, 2048
        $region92: #{tpu_custom_call.1} parent=83 // pred_fallthru
          _
        %s920 = sand.u32 %s59, 1
        %s921 = scalar_lea.sflag [#allocation6], %s920
        %s922 = sand.u32 %s119, 1
        %s923 = smul.addr %s922, 128
        %s924 = scalar_lea.vmem [#allocation7], %s923
        // Predicated region
        $region93: #{tpu_custom_call.1} parent=83 // pred_check
          %p925 = pneg %p132
        $region94: #{tpu_custom_call.1} parent=83 // pred_check_branch
          %927 = sbr.rel (%p925) target = $region96
        $region95: #{tpu_custom_call.1} parent=83 // pred_region
          %929 = dma.done %s921, 2048
        $region96: #{tpu_custom_call.1} parent=83 // pred_fallthru
          _
        %s930 = sand.u32 %s59, 1
        %s931 = scalar_lea.sflag [#allocation9], %s930
        %s932 = sand.u32 %s145, 1
        %s933 = smul.addr %s932, 128
        %s934 = scalar_lea.vmem [#allocation8], %s933
        // Predicated region
        $region97: #{tpu_custom_call.1} parent=83 // pred_check
          %p935 = pneg %p158
        $region98: #{tpu_custom_call.1} parent=83 // pred_check_branch
          %937 = sbr.rel (%p935) target = $region100
        $region99: #{tpu_custom_call.1} parent=83 // pred_region
          %939 = dma.done %s931, 2048
        $region100: #{tpu_custom_call.1} parent=83 // pred_fallthru
          _
        %s940 = sand.u32 %s59, 1
        %s941 = scalar_lea.sflag [#allocation9], %s940
        %s942 = sand.u32 %s171, 1
        %s943 = smul.addr %s942, 128
        %s944 = scalar_lea.vmem [#allocation10], %s943
        // Predicated region
        $region101: #{tpu_custom_call.1} parent=83 // pred_check
          %p945 = pneg %p184
        $region102: #{tpu_custom_call.1} parent=83 // pred_check_branch
          %947 = sbr.rel (%p945) target = $region104
        $region103: #{tpu_custom_call.1} parent=83 // pred_region
          %949 = dma.done %s941, 2048
        $region104: #{tpu_custom_call.1} parent=83 // pred_fallthru
          _
        %s950 = sand.u32 %s59, 1
        %s951 = scalar_lea.sflag [#allocation12], %s950
        %s952 = sand.u32 %s197, 1
        %s953 = smul.addr %s952, 128
        %s954 = scalar_lea.vmem [#allocation11], %s953
        // Predicated region
        $region105: #{tpu_custom_call.1} parent=83 // pred_check
          %p955 = pneg %p210
        $region106: #{tpu_custom_call.1} parent=83 // pred_check_branch
          %957 = sbr.rel (%p955) target = $region108
        $region107: #{tpu_custom_call.1} parent=83 // pred_region
          %959 = dma.done %s951, 2048
        $region108: #{tpu_custom_call.1} parent=83 // pred_fallthru
          _
        %s960 = sand.u32 %s59, 1
        %s961 = scalar_lea.sflag [#allocation12], %s960
        %s962 = sand.u32 %s223, 1
        %s963 = smul.addr %s962, 128
        %s964 = scalar_lea.vmem [#allocation13], %s963
        // Predicated region
        $region109: #{tpu_custom_call.1} parent=83 // pred_check
          %p965 = pneg %p236
        $region110: #{tpu_custom_call.1} parent=83 // pred_check_branch
          %967 = sbr.rel (%p965) target = $region112
        $region111: #{tpu_custom_call.1} parent=83 // pred_region
          %969 = dma.done %s961, 2048
        $region112: #{tpu_custom_call.1} parent=83 // pred_fallthru
          _
        %s970 = sand.u32 %s59, 1
        %s971 = scalar_lea.sflag [#allocation15], %s970
        %s972 = sand.u32 %s249, 1
        %s973 = smul.addr %s972, 128
        %s974 = scalar_lea.vmem [#allocation14], %s973
        // Predicated region
        $region113: #{tpu_custom_call.1} parent=83 // pred_check
          %p975 = pneg %p262
        $region114: #{tpu_custom_call.1} parent=83 // pred_check_branch
          %977 = sbr.rel (%p975) target = $region116
        $region115: #{tpu_custom_call.1} parent=83 // pred_region
          %979 = dma.done %s971, 2048
        $region116: #{tpu_custom_call.1} parent=83 // pred_fallthru
          _
        %s980 = sand.u32 %s59, 1
        %s981 = scalar_lea.sflag [#allocation15], %s980
        %s982 = sand.u32 %s275, 1
        %s983 = smul.addr %s982, 128
        %s984 = scalar_lea.vmem [#allocation16], %s983
        // Predicated region
        $region117: #{tpu_custom_call.1} parent=83 // pred_check
          %p985 = pneg %p288
        $region118: #{tpu_custom_call.1} parent=83 // pred_check_branch
          %987 = sbr.rel (%p985) target = $region120
        $region119: #{tpu_custom_call.1} parent=83 // pred_region
          %989 = dma.done %s981, 2048
        $region120: #{tpu_custom_call.1} parent=83 // pred_fallthru
          _
        %s990 = sand.u32 %s59, 1
        %s991 = scalar_lea.sflag [#allocation18], %s990
        %s992 = sand.u32 %s301, 1
        %s993 = smul.addr %s992, 128
        %s994 = scalar_lea.vmem [#allocation17], %s993
        // Predicated region
        $region121: #{tpu_custom_call.1} parent=83 // pred_check
          %p995 = pneg %p314
        $region122: #{tpu_custom_call.1} parent=83 // pred_check_branch
          %997 = sbr.rel (%p995) target = $region124
        $region123: #{tpu_custom_call.1} parent=83 // pred_region
          %999 = dma.done %s991, 2048
        $region124: #{tpu_custom_call.1} parent=83 // pred_fallthru
          _
        %s1000 = sand.u32 %s59, 1
        %s1001 = scalar_lea.sflag [#allocation18], %s1000
        %s1002 = sand.u32 %s327, 1
        %s1003 = smul.addr %s1002, 128
        %s1004 = scalar_lea.vmem [#allocation19], %s1003
        // Predicated region
        $region125: #{tpu_custom_call.1} parent=83 // pred_check
          %p1005 = pneg %p340
        $region126: #{tpu_custom_call.1} parent=83 // pred_check_branch
          %1007 = sbr.rel (%p1005) target = $region128
        $region127: #{tpu_custom_call.1} parent=83 // pred_region
          %1009 = dma.done %s1001, 2048
        $region128: #{tpu_custom_call.1} parent=83 // pred_fallthru
          _
        %s1010 = sand.u32 %s59, 1
        %s1011 = scalar_lea.sflag [#allocation21], %s1010
        %s1012 = sand.u32 %s353, 1
        %s1013 = smul.addr %s1012, 128
        %s1014 = scalar_lea.vmem [#allocation20], %s1013
        // Predicated region
        $region129: #{tpu_custom_call.1} parent=83 // pred_check
          %p1015 = pneg %p366
        $region130: #{tpu_custom_call.1} parent=83 // pred_check_branch
          %1017 = sbr.rel (%p1015) target = $region132
        $region131: #{tpu_custom_call.1} parent=83 // pred_region
          %1019 = dma.done %s1011, 2048
        $region132: #{tpu_custom_call.1} parent=83 // pred_fallthru
          _
        %s1020 = sand.u32 %s59, 1
        %s1021 = scalar_lea.sflag [#allocation21], %s1020
        %s1022 = sand.u32 %s379, 1
        %s1023 = smul.addr %s1022, 128
        %s1024 = scalar_lea.vmem [#allocation22], %s1023
        // Predicated region
        $region133: #{tpu_custom_call.1} parent=83 // pred_check
          %p1025 = pneg %p392
        $region134: #{tpu_custom_call.1} parent=83 // pred_check_branch
          %1027 = sbr.rel (%p1025) target = $region136
        $region135: #{tpu_custom_call.1} parent=83 // pred_region
          %1029 = dma.done %s1021, 2048
        $region136: #{tpu_custom_call.1} parent=83 // pred_fallthru
          _
        %s1030 = sand.u32 %s59, 1
        %s1031 = scalar_lea.sflag [#allocation24], %s1030
        %s1032 = sand.u32 %s405, 1
        %s1033 = smul.addr %s1032, 128
        %s1034 = scalar_lea.vmem [#allocation23], %s1033
        // Predicated region
        $region137: #{tpu_custom_call.1} parent=83 // pred_check
          %p1035 = pneg %p418
        $region138: #{tpu_custom_call.1} parent=83 // pred_check_branch
          %1037 = sbr.rel (%p1035) target = $region140
        $region139: #{tpu_custom_call.1} parent=83 // pred_region
          %1039 = dma.done %s1031, 2048
        $region140: #{tpu_custom_call.1} parent=83 // pred_fallthru
          _
        %s1040 = sand.u32 %s59, 1
        %s1041 = scalar_lea.sflag [#allocation24], %s1040
        %s1042 = sand.u32 %s431, 1
        %s1043 = smul.addr %s1042, 128
        %s1044 = scalar_lea.vmem [#allocation25], %s1043
        // Predicated region
        $region141: #{tpu_custom_call.1} parent=83 // pred_check
          %p1045 = pneg %p444
        $region142: #{tpu_custom_call.1} parent=83 // pred_check_branch
          %1047 = sbr.rel (%p1045) target = $region144
        $region143: #{tpu_custom_call.1} parent=83 // pred_region
          %1049 = dma.done %s1041, 2048
        $region144: #{tpu_custom_call.1} parent=83 // pred_fallthru
          _
        %s1050 = sand.u32 %s457, 1
        %s1051 = scalar_lea.sflag [#allocation27], %s1050
        %s1052 = sand.u32 %s457, 1
        %s1053 = smul.addr %s1052, 128
        %s1054 = scalar_lea.vmem [#allocation26], %s1053
        // Predicated region
        $region145: #{tpu_custom_call.1} parent=83 // pred_check
          %p1055 = pneg %p470
        $region146: #{tpu_custom_call.1} parent=83 // pred_check_branch
          %1057 = sbr.rel (%p1055) target = $region148
        $region147: #{tpu_custom_call.1} parent=83 // pred_region
          %1059 = dma.done %s1051, 2048
        $region148: #{tpu_custom_call.1} parent=83 // pred_fallthru
          _
        %s1060 = sand.u32 %s67, 1
        %s1061 = scalar_lea.sflag [#allocation3], %s1060
        %s1062 = sand.u32 %s67, 1
        %s1063 = smul.addr %s1062, 128
        %s1064 = scalar_lea.vmem [#allocation2], %s1063
        %p1065 = pneg %p80
        %p1066 = pneg %p77
        %s1067 = sand.u32 %s59, 1
        %s1068 = scalar_lea.sflag [#allocation6], %s1067
        %s1069 = sand.u32 %s93, 1
        %s1070 = smul.addr %s1069, 128
        %s1071 = scalar_lea.vmem [#allocation5], %s1070
        %p1072 = pneg %p106
        %p1073 = pneg %p103
        %s1074 = sand.u32 %s59, 1
        %s1075 = scalar_lea.sflag [#allocation6], %s1074
        %s1076 = sand.u32 %s119, 1
        %s1077 = smul.addr %s1076, 128
        %s1078 = scalar_lea.vmem [#allocation7], %s1077
        %p1079 = pneg %p132
        %p1080 = pneg %p129
        %s1081 = sand.u32 %s59, 1
        %s1082 = scalar_lea.sflag [#allocation9], %s1081
        %s1083 = sand.u32 %s145, 1
        %s1084 = smul.addr %s1083, 128
        %s1085 = scalar_lea.vmem [#allocation8], %s1084
        %p1086 = pneg %p158
        %p1087 = pneg %p155
        %s1088 = sand.u32 %s59, 1
        %s1089 = scalar_lea.sflag [#allocation9], %s1088
        %s1090 = sand.u32 %s171, 1
        %s1091 = smul.addr %s1090, 128
        %s1092 = scalar_lea.vmem [#allocation10], %s1091
        %p1093 = pneg %p184
        %p1094 = pneg %p181
        %s1095 = sand.u32 %s59, 1
        %s1096 = scalar_lea.sflag [#allocation12], %s1095
        %s1097 = sand.u32 %s197, 1
        %s1098 = smul.addr %s1097, 128
        %s1099 = scalar_lea.vmem [#allocation11], %s1098
        %p1100 = pneg %p210
        %p1101 = pneg %p207
        %s1102 = sand.u32 %s59, 1
        %s1103 = scalar_lea.sflag [#allocation12], %s1102
        %s1104 = sand.u32 %s223, 1
        %s1105 = smul.addr %s1104, 128
        %s1106 = scalar_lea.vmem [#allocation13], %s1105
        %p1107 = pneg %p236
        %p1108 = pneg %p233
        %s1109 = sand.u32 %s59, 1
        %s1110 = scalar_lea.sflag [#allocation15], %s1109
        %s1111 = sand.u32 %s249, 1
        %s1112 = smul.addr %s1111, 128
        %s1113 = scalar_lea.vmem [#allocation14], %s1112
        %p1114 = pneg %p262
        %p1115 = pneg %p259
        %s1116 = sand.u32 %s59, 1
        %s1117 = scalar_lea.sflag [#allocation15], %s1116
        %s1118 = sand.u32 %s275, 1
        %s1119 = smul.addr %s1118, 128
        %s1120 = scalar_lea.vmem [#allocation16], %s1119
        %p1121 = pneg %p288
        %p1122 = pneg %p285
        %s1123 = sand.u32 %s59, 1
        %s1124 = scalar_lea.sflag [#allocation18], %s1123
        %s1125 = sand.u32 %s301, 1
        %s1126 = smul.addr %s1125, 128
        %s1127 = scalar_lea.vmem [#allocation17], %s1126
        %p1128 = pneg %p314
        %p1129 = pneg %p311
        %s1130 = sand.u32 %s59, 1
        %s1131 = scalar_lea.sflag [#allocation18], %s1130
        %s1132 = sand.u32 %s327, 1
        %s1133 = smul.addr %s1132, 128
        %s1134 = scalar_lea.vmem [#allocation19], %s1133
        %p1135 = pneg %p340
        %p1136 = pneg %p337
        %s1137 = sand.u32 %s59, 1
        %s1138 = scalar_lea.sflag [#allocation21], %s1137
        %s1139 = sand.u32 %s353, 1
        %s1140 = smul.addr %s1139, 128
        %s1141 = scalar_lea.vmem [#allocation20], %s1140
        %p1142 = pneg %p366
        %p1143 = pneg %p363
        %s1144 = sand.u32 %s59, 1
        %s1145 = scalar_lea.sflag [#allocation21], %s1144
        %s1146 = sand.u32 %s379, 1
        %s1147 = smul.addr %s1146, 128
        %s1148 = scalar_lea.vmem [#allocation22], %s1147
        %p1149 = pneg %p392
        %p1150 = pneg %p389
        %s1151 = sand.u32 %s59, 1
        %s1152 = scalar_lea.sflag [#allocation24], %s1151
        %s1153 = sand.u32 %s405, 1
        %s1154 = smul.addr %s1153, 128
        %s1155 = scalar_lea.vmem [#allocation23], %s1154
        %p1156 = pneg %p418
        %p1157 = pneg %p415
        %s1158 = sand.u32 %s59, 1
        %s1159 = scalar_lea.sflag [#allocation24], %s1158
        %s1160 = sand.u32 %s431, 1
        %s1161 = smul.addr %s1160, 128
        %s1162 = scalar_lea.vmem [#allocation25], %s1161
        %p1163 = pneg %p444
        %p1164 = pneg %p441
        %s1165 = sand.u32 %s457, 1
        %s1166 = scalar_lea.sflag [#allocation27], %s1165
        %s1167 = sand.u32 %s457, 1
        %s1168 = smul.addr %s1167, 128
        %s1169 = scalar_lea.vmem [#allocation26], %s1168
        %p1170 = pneg %p470
        %p1171 = pneg %p467
        %p1172 = pneg %p496
        %p1173 = pneg %p493
        %s1174 = sand.u32 %s483, 1
        %s1175 = scalar_lea.sflag [#allocation4], %s1174
        %s1176 = sand.u32 %s483, 1
        %s1177 = smul.addr %s1176, 128
        %s1178 = scalar_lea.vmem [#allocation28], %s1177
        %p1179 = pneg %p522
        %p1180 = pneg %p519
        %s1181 = smul.u32 16, %s59
        %p1182 = scmp.lt.s32.totalorder %s1181, 31
        %s1183 = scalar_select %p1182, %s1181, 31
        %s1184 = smul.addr %s1183, 8
        %s1185 = scalar_lea.vmem %s17, %s1184
        %s1186 = smul.u32 16, %s59
        %s1187 = smul.u32 16, %s59
        %s1188 = smul.u32 16, %s59
        %s1189 = smul.u32 16, %s59
        %s1190 = smul.u32 16, %s59
        %s1191 = smul.u32 16, %s59
        %s1192 = smul.u32 16, %s59
        %s1193 = smul.u32 16, %s59
        %s1194 = smul.u32 16, %s59
        %s1195 = smul.u32 16, %s59
        %s1196 = smul.u32 16, %s59
        %s1197 = smul.u32 16, %s59
        %s1198 = smul.u32 16, %s59
        %s1199 = smul.u32 16, %s59
        %s1200 = smul.u32 16, %s59
        %s1201 = smul.u32 16, %s59
        %s1202 = smul.u32 16, %s59
        %s1203 = smul.u32 16, %s59
        %p1204 = scmp.lt.s32.totalorder %s1203, 31
        %s1205 = scalar_select %p1204, %s1203, 31
        %s1206 = smul.addr %s1205, 8
        %s1207 = scalar_lea.vmem %s17, %s1206
        %s1208 = smul.u32 16, %s59
        %v1209 = vld [vmem:[%s904] sm:$0xff]
        %v1210 = vld [vmem:[%s904 + $0x8] sm:$0xff]
        %v1211 = vld [vmem:[%s904 + $0x10] sm:$0xff]
        %v1212 = vld [vmem:[%s904 + $0x18] sm:$0xff]
        %v1213 = vld [vmem:[%s904 + $0x20] sm:$0xff]
        %v1214 = vld [vmem:[%s904 + $0x28] sm:$0xff]
        %v1215 = vld [vmem:[%s904 + $0x30] sm:$0xff]
        %v1216 = vld [vmem:[%s904 + $0x38] sm:$0xff]
        %v1217 = vld [vmem:[%s904 + $0x40] sm:$0xff]
        %v1218 = vld [vmem:[%s904 + $0x48] sm:$0xff]
        %v1219 = vld [vmem:[%s904 + $0x50] sm:$0xff]
        %v1220 = vld [vmem:[%s904 + $0x58] sm:$0xff]
        %v1221 = vld [vmem:[%s904 + $0x60] sm:$0xff]
        %v1222 = vld [vmem:[%s904 + $0x68] sm:$0xff]
        %v1223 = vld [vmem:[%s904 + $0x70] sm:$0xff]
        %v1224 = vld [vmem:[%s904 + $0x78] sm:$0xff]
        %v1225 = vld [vmem:[%s984] sm:$0xff]
        %v1226 = vld [vmem:[%s984 + $0x8] sm:$0xff]
        %v1227 = vld [vmem:[%s984 + $0x10] sm:$0xff]
        %v1228 = vld [vmem:[%s984 + $0x18] sm:$0xff]
        %v1229 = vld [vmem:[%s984 + $0x20] sm:$0xff]
        %v1230 = vld [vmem:[%s984 + $0x28] sm:$0xff]
        %v1231 = vld [vmem:[%s984 + $0x30] sm:$0xff]
        %v1232 = vld [vmem:[%s984 + $0x38] sm:$0xff]
        %v1233 = vld [vmem:[%s984 + $0x40] sm:$0xff]
        %v1234 = vld [vmem:[%s984 + $0x48] sm:$0xff]
        %v1235 = vld [vmem:[%s984 + $0x50] sm:$0xff]
        %v1236 = vld [vmem:[%s984 + $0x58] sm:$0xff]
        %v1237 = vld [vmem:[%s984 + $0x60] sm:$0xff]
        %v1238 = vld [vmem:[%s984 + $0x68] sm:$0xff]
        %v1239 = vld [vmem:[%s984 + $0x70] sm:$0xff]
        %v1240 = vld [vmem:[%s984 + $0x78] sm:$0xff]
        %v1241 = vmul.f32 %v1225, %v1209
        %v1242 = vmul.f32 %v1226, %v1210
        %v1243 = vmul.f32 %v1227, %v1211
        %v1244 = vmul.f32 %v1228, %v1212
        %v1245 = vmul.f32 %v1229, %v1213
        %v1246 = vmul.f32 %v1230, %v1214
        %v1247 = vmul.f32 %v1231, %v1215
        %v1248 = vmul.f32 %v1232, %v1216
        %v1249 = vmul.f32 %v1233, %v1217
        %v1250 = vmul.f32 %v1234, %v1218
        %v1251 = vmul.f32 %v1235, %v1219
        %v1252 = vmul.f32 %v1236, %v1220
        %v1253 = vmul.f32 %v1237, %v1221
        %v1254 = vmul.f32 %v1238, %v1222
        %v1255 = vmul.f32 %v1239, %v1223
        %v1256 = vmul.f32 %v1240, %v1224
        %1257 = vadd.xlane.f32.xlu0 %v1241
        %v1258 = vpop.xlane.xlu0 %1257
        %1259 = vadd.xlane.f32.xlu0 %v1242
        %v1260 = vpop.xlane.xlu0 %1259
        %1261 = vadd.xlane.f32.xlu0 %v1243
        %v1262 = vpop.xlane.xlu0 %1261
        %1263 = vadd.xlane.f32.xlu0 %v1244
        %v1264 = vpop.xlane.xlu0 %1263
        %1265 = vadd.xlane.f32.xlu0 %v1245
        %v1266 = vpop.xlane.xlu0 %1265
        %1267 = vadd.xlane.f32.xlu0 %v1246
        %v1268 = vpop.xlane.xlu0 %1267
        %1269 = vadd.xlane.f32.xlu0 %v1247
        %v1270 = vpop.xlane.xlu0 %1269
        %1271 = vadd.xlane.f32.xlu0 %v1248
        %v1272 = vpop.xlane.xlu0 %1271
        %1273 = vadd.xlane.f32.xlu0 %v1249
        %v1274 = vpop.xlane.xlu0 %1273
        %1275 = vadd.xlane.f32.xlu0 %v1250
        %v1276 = vpop.xlane.xlu0 %1275
        %1277 = vadd.xlane.f32.xlu0 %v1251
        %v1278 = vpop.xlane.xlu0 %1277
        %1279 = vadd.xlane.f32.xlu0 %v1252
        %v1280 = vpop.xlane.xlu0 %1279
        %1281 = vadd.xlane.f32.xlu0 %v1253
        %v1282 = vpop.xlane.xlu0 %1281
        %1283 = vadd.xlane.f32.xlu0 %v1254
        %v1284 = vpop.xlane.xlu0 %1283
        %1285 = vadd.xlane.f32.xlu0 %v1255
        %v1286 = vpop.xlane.xlu0 %1285
        %1287 = vadd.xlane.f32.xlu0 %v1256
        %v1288 = vpop.xlane.xlu0 %1287
        %v1289 = vmul.f32 %v1258, 2.0
        %v1290 = vmul.f32 %v1260, 2.0
        %v1291 = vmul.f32 %v1262, 2.0
        %v1292 = vmul.f32 %v1264, 2.0
        %v1293 = vmul.f32 %v1266, 2.0
        %v1294 = vmul.f32 %v1268, 2.0
        %v1295 = vmul.f32 %v1270, 2.0
        %v1296 = vmul.f32 %v1272, 2.0
        %v1297 = vmul.f32 %v1274, 2.0
        %v1298 = vmul.f32 %v1276, 2.0
        %v1299 = vmul.f32 %v1278, 2.0
        %v1300 = vmul.f32 %v1280, 2.0
        %v1301 = vmul.f32 %v1282, 2.0
        %v1302 = vmul.f32 %v1284, 2.0
        %v1303 = vmul.f32 %v1286, 2.0
        %v1304 = vmul.f32 %v1288, 2.0
        %v1305 = vld [vmem:[%s914] sm:$0xff]
        %v1306 = vld [vmem:[%s914 + $0x8] sm:$0xff]
        %v1307 = vld [vmem:[%s914 + $0x10] sm:$0xff]
        %v1308 = vld [vmem:[%s914 + $0x18] sm:$0xff]
        %v1309 = vld [vmem:[%s914 + $0x20] sm:$0xff]
        %v1310 = vld [vmem:[%s914 + $0x28] sm:$0xff]
        %v1311 = vld [vmem:[%s914 + $0x30] sm:$0xff]
        %v1312 = vld [vmem:[%s914 + $0x38] sm:$0xff]
        %v1313 = vld [vmem:[%s914 + $0x40] sm:$0xff]
        %v1314 = vld [vmem:[%s914 + $0x48] sm:$0xff]
        %v1315 = vld [vmem:[%s914 + $0x50] sm:$0xff]
        %v1316 = vld [vmem:[%s914 + $0x58] sm:$0xff]
        %v1317 = vld [vmem:[%s914 + $0x60] sm:$0xff]
        %v1318 = vld [vmem:[%s914 + $0x68] sm:$0xff]
        %v1319 = vld [vmem:[%s914 + $0x70] sm:$0xff]
        %v1320 = vld [vmem:[%s914 + $0x78] sm:$0xff]
        %v1321 = vld [vmem:[%s994] sm:$0xff]
        %v1322 = vld [vmem:[%s994 + $0x8] sm:$0xff]
        %v1323 = vld [vmem:[%s994 + $0x10] sm:$0xff]
        %v1324 = vld [vmem:[%s994 + $0x18] sm:$0xff]
        %v1325 = vld [vmem:[%s994 + $0x20] sm:$0xff]
        %v1326 = vld [vmem:[%s994 + $0x28] sm:$0xff]
        %v1327 = vld [vmem:[%s994 + $0x30] sm:$0xff]
        %v1328 = vld [vmem:[%s994 + $0x38] sm:$0xff]
        %v1329 = vld [vmem:[%s994 + $0x40] sm:$0xff]
        %v1330 = vld [vmem:[%s994 + $0x48] sm:$0xff]
        %v1331 = vld [vmem:[%s994 + $0x50] sm:$0xff]
        %v1332 = vld [vmem:[%s994 + $0x58] sm:$0xff]
        %v1333 = vld [vmem:[%s994 + $0x60] sm:$0xff]
        %v1334 = vld [vmem:[%s994 + $0x68] sm:$0xff]
        %v1335 = vld [vmem:[%s994 + $0x70] sm:$0xff]
        %v1336 = vld [vmem:[%s994 + $0x78] sm:$0xff]
        %v1337 = vmul.f32 %v1321, %v1305
        %v1338 = vmul.f32 %v1322, %v1306
        %v1339 = vmul.f32 %v1323, %v1307
        %v1340 = vmul.f32 %v1324, %v1308
        %v1341 = vmul.f32 %v1325, %v1309
        %v1342 = vmul.f32 %v1326, %v1310
        %v1343 = vmul.f32 %v1327, %v1311
        %v1344 = vmul.f32 %v1328, %v1312
        %v1345 = vmul.f32 %v1329, %v1313
        %v1346 = vmul.f32 %v1330, %v1314
        %v1347 = vmul.f32 %v1331, %v1315
        %v1348 = vmul.f32 %v1332, %v1316
        %v1349 = vmul.f32 %v1333, %v1317
        %v1350 = vmul.f32 %v1334, %v1318
        %v1351 = vmul.f32 %v1335, %v1319
        %v1352 = vmul.f32 %v1336, %v1320
        %1353 = vadd.xlane.f32.xlu0 %v1337
        %v1354 = vpop.xlane.xlu0 %1353
        %1355 = vadd.xlane.f32.xlu0 %v1338
        %v1356 = vpop.xlane.xlu0 %1355
        %1357 = vadd.xlane.f32.xlu0 %v1339
        %v1358 = vpop.xlane.xlu0 %1357
        %1359 = vadd.xlane.f32.xlu0 %v1340
        %v1360 = vpop.xlane.xlu0 %1359
        %1361 = vadd.xlane.f32.xlu0 %v1341
        %v1362 = vpop.xlane.xlu0 %1361
        %1363 = vadd.xlane.f32.xlu0 %v1342
        %v1364 = vpop.xlane.xlu0 %1363
        %1365 = vadd.xlane.f32.xlu0 %v1343
        %v1366 = vpop.xlane.xlu0 %1365
        %1367 = vadd.xlane.f32.xlu0 %v1344
        %v1368 = vpop.xlane.xlu0 %1367
        %1369 = vadd.xlane.f32.xlu0 %v1345
        %v1370 = vpop.xlane.xlu0 %1369
        %1371 = vadd.xlane.f32.xlu0 %v1346
        %v1372 = vpop.xlane.xlu0 %1371
        %1373 = vadd.xlane.f32.xlu0 %v1347
        %v1374 = vpop.xlane.xlu0 %1373
        %1375 = vadd.xlane.f32.xlu0 %v1348
        %v1376 = vpop.xlane.xlu0 %1375
        %1377 = vadd.xlane.f32.xlu0 %v1349
        %v1378 = vpop.xlane.xlu0 %1377
        %1379 = vadd.xlane.f32.xlu0 %v1350
        %v1380 = vpop.xlane.xlu0 %1379
        %1381 = vadd.xlane.f32.xlu0 %v1351
        %v1382 = vpop.xlane.xlu0 %1381
        %1383 = vadd.xlane.f32.xlu0 %v1352
        %v1384 = vpop.xlane.xlu0 %1383
        %v1385 = vmul.f32 %v1354, 2.0
        %v1386 = vmul.f32 %v1356, 2.0
        %v1387 = vmul.f32 %v1358, 2.0
        %v1388 = vmul.f32 %v1360, 2.0
        %v1389 = vmul.f32 %v1362, 2.0
        %v1390 = vmul.f32 %v1364, 2.0
        %v1391 = vmul.f32 %v1366, 2.0
        %v1392 = vmul.f32 %v1368, 2.0
        %v1393 = vmul.f32 %v1370, 2.0
        %v1394 = vmul.f32 %v1372, 2.0
        %v1395 = vmul.f32 %v1374, 2.0
        %v1396 = vmul.f32 %v1376, 2.0
        %v1397 = vmul.f32 %v1378, 2.0
        %v1398 = vmul.f32 %v1380, 2.0
        %v1399 = vmul.f32 %v1382, 2.0
        %v1400 = vmul.f32 %v1384, 2.0
        %v1401 = vld [vmem:[%s924] sm:$0xff]
        %v1402 = vld [vmem:[%s924 + $0x8] sm:$0xff]
        %v1403 = vld [vmem:[%s924 + $0x10] sm:$0xff]
        %v1404 = vld [vmem:[%s924 + $0x18] sm:$0xff]
        %v1405 = vld [vmem:[%s924 + $0x20] sm:$0xff]
        %v1406 = vld [vmem:[%s924 + $0x28] sm:$0xff]
        %v1407 = vld [vmem:[%s924 + $0x30] sm:$0xff]
        %v1408 = vld [vmem:[%s924 + $0x38] sm:$0xff]
        %v1409 = vld [vmem:[%s924 + $0x40] sm:$0xff]
        %v1410 = vld [vmem:[%s924 + $0x48] sm:$0xff]
        %v1411 = vld [vmem:[%s924 + $0x50] sm:$0xff]
        %v1412 = vld [vmem:[%s924 + $0x58] sm:$0xff]
        %v1413 = vld [vmem:[%s924 + $0x60] sm:$0xff]
        %v1414 = vld [vmem:[%s924 + $0x68] sm:$0xff]
        %v1415 = vld [vmem:[%s924 + $0x70] sm:$0xff]
        %v1416 = vld [vmem:[%s924 + $0x78] sm:$0xff]
        %v1417 = vld [vmem:[%s1004] sm:$0xff]
        %v1418 = vld [vmem:[%s1004 + $0x8] sm:$0xff]
        %v1419 = vld [vmem:[%s1004 + $0x10] sm:$0xff]
        %v1420 = vld [vmem:[%s1004 + $0x18] sm:$0xff]
        %v1421 = vld [vmem:[%s1004 + $0x20] sm:$0xff]
        %v1422 = vld [vmem:[%s1004 + $0x28] sm:$0xff]
        %v1423 = vld [vmem:[%s1004 + $0x30] sm:$0xff]
        %v1424 = vld [vmem:[%s1004 + $0x38] sm:$0xff]
        %v1425 = vld [vmem:[%s1004 + $0x40] sm:$0xff]
        %v1426 = vld [vmem:[%s1004 + $0x48] sm:$0xff]
        %v1427 = vld [vmem:[%s1004 + $0x50] sm:$0xff]
        %v1428 = vld [vmem:[%s1004 + $0x58] sm:$0xff]
        %v1429 = vld [vmem:[%s1004 + $0x60] sm:$0xff]
        %v1430 = vld [vmem:[%s1004 + $0x68] sm:$0xff]
        %v1431 = vld [vmem:[%s1004 + $0x70] sm:$0xff]
        %v1432 = vld [vmem:[%s1004 + $0x78] sm:$0xff]
        %v1433 = vmul.f32 %v1417, %v1401
        %v1434 = vmul.f32 %v1418, %v1402
        %v1435 = vmul.f32 %v1419, %v1403
        %v1436 = vmul.f32 %v1420, %v1404
        %v1437 = vmul.f32 %v1421, %v1405
        %v1438 = vmul.f32 %v1422, %v1406
        %v1439 = vmul.f32 %v1423, %v1407
        %v1440 = vmul.f32 %v1424, %v1408
        %v1441 = vmul.f32 %v1425, %v1409
        %v1442 = vmul.f32 %v1426, %v1410
        %v1443 = vmul.f32 %v1427, %v1411
        %v1444 = vmul.f32 %v1428, %v1412
        %v1445 = vmul.f32 %v1429, %v1413
        %v1446 = vmul.f32 %v1430, %v1414
        %v1447 = vmul.f32 %v1431, %v1415
        %v1448 = vmul.f32 %v1432, %v1416
        %1449 = vadd.xlane.f32.xlu0 %v1433
        %v1450 = vpop.xlane.xlu0 %1449
        %1451 = vadd.xlane.f32.xlu0 %v1434
        %v1452 = vpop.xlane.xlu0 %1451
        %1453 = vadd.xlane.f32.xlu0 %v1435
        %v1454 = vpop.xlane.xlu0 %1453
        %1455 = vadd.xlane.f32.xlu0 %v1436
        %v1456 = vpop.xlane.xlu0 %1455
        %1457 = vadd.xlane.f32.xlu0 %v1437
        %v1458 = vpop.xlane.xlu0 %1457
        %1459 = vadd.xlane.f32.xlu0 %v1438
        %v1460 = vpop.xlane.xlu0 %1459
        %1461 = vadd.xlane.f32.xlu0 %v1439
        %v1462 = vpop.xlane.xlu0 %1461
        %1463 = vadd.xlane.f32.xlu0 %v1440
        %v1464 = vpop.xlane.xlu0 %1463
        %1465 = vadd.xlane.f32.xlu0 %v1441
        %v1466 = vpop.xlane.xlu0 %1465
        %1467 = vadd.xlane.f32.xlu0 %v1442
        %v1468 = vpop.xlane.xlu0 %1467
        %1469 = vadd.xlane.f32.xlu0 %v1443
        %v1470 = vpop.xlane.xlu0 %1469
        %1471 = vadd.xlane.f32.xlu0 %v1444
        %v1472 = vpop.xlane.xlu0 %1471
        %1473 = vadd.xlane.f32.xlu0 %v1445
        %v1474 = vpop.xlane.xlu0 %1473
        %1475 = vadd.xlane.f32.xlu0 %v1446
        %v1476 = vpop.xlane.xlu0 %1475
        %1477 = vadd.xlane.f32.xlu0 %v1447
        %v1478 = vpop.xlane.xlu0 %1477
        %1479 = vadd.xlane.f32.xlu0 %v1448
        %v1480 = vpop.xlane.xlu0 %1479
        %v1481 = vmul.f32 %v1450, 2.0
        %v1482 = vmul.f32 %v1452, 2.0
        %v1483 = vmul.f32 %v1454, 2.0
        %v1484 = vmul.f32 %v1456, 2.0
        %v1485 = vmul.f32 %v1458, 2.0
        %v1486 = vmul.f32 %v1460, 2.0
        %v1487 = vmul.f32 %v1462, 2.0
        %v1488 = vmul.f32 %v1464, 2.0
        %v1489 = vmul.f32 %v1466, 2.0
        %v1490 = vmul.f32 %v1468, 2.0
        %v1491 = vmul.f32 %v1470, 2.0
        %v1492 = vmul.f32 %v1472, 2.0
        %v1493 = vmul.f32 %v1474, 2.0
        %v1494 = vmul.f32 %v1476, 2.0
        %v1495 = vmul.f32 %v1478, 2.0
        %v1496 = vmul.f32 %v1480, 2.0
        %v1497 = vld [vmem:[%s934] sm:$0xff]
        %v1498 = vld [vmem:[%s934 + $0x8] sm:$0xff]
        %v1499 = vld [vmem:[%s934 + $0x10] sm:$0xff]
        %v1500 = vld [vmem:[%s934 + $0x18] sm:$0xff]
        %v1501 = vld [vmem:[%s934 + $0x20] sm:$0xff]
        %v1502 = vld [vmem:[%s934 + $0x28] sm:$0xff]
        %v1503 = vld [vmem:[%s934 + $0x30] sm:$0xff]
        %v1504 = vld [vmem:[%s934 + $0x38] sm:$0xff]
        %v1505 = vld [vmem:[%s934 + $0x40] sm:$0xff]
        %v1506 = vld [vmem:[%s934 + $0x48] sm:$0xff]
        %v1507 = vld [vmem:[%s934 + $0x50] sm:$0xff]
        %v1508 = vld [vmem:[%s934 + $0x58] sm:$0xff]
        %v1509 = vld [vmem:[%s934 + $0x60] sm:$0xff]
        %v1510 = vld [vmem:[%s934 + $0x68] sm:$0xff]
        %v1511 = vld [vmem:[%s934 + $0x70] sm:$0xff]
        %v1512 = vld [vmem:[%s934 + $0x78] sm:$0xff]
        %v1513 = vld [vmem:[%s1014] sm:$0xff]
        %v1514 = vld [vmem:[%s1014 + $0x8] sm:$0xff]
        %v1515 = vld [vmem:[%s1014 + $0x10] sm:$0xff]
        %v1516 = vld [vmem:[%s1014 + $0x18] sm:$0xff]
        %v1517 = vld [vmem:[%s1014 + $0x20] sm:$0xff]
        %v1518 = vld [vmem:[%s1014 + $0x28] sm:$0xff]
        %v1519 = vld [vmem:[%s1014 + $0x30] sm:$0xff]
        %v1520 = vld [vmem:[%s1014 + $0x38] sm:$0xff]
        %v1521 = vld [vmem:[%s1014 + $0x40] sm:$0xff]
        %v1522 = vld [vmem:[%s1014 + $0x48] sm:$0xff]
        %v1523 = vld [vmem:[%s1014 + $0x50] sm:$0xff]
        %v1524 = vld [vmem:[%s1014 + $0x58] sm:$0xff]
        %v1525 = vld [vmem:[%s1014 + $0x60] sm:$0xff]
        %v1526 = vld [vmem:[%s1014 + $0x68] sm:$0xff]
        %v1527 = vld [vmem:[%s1014 + $0x70] sm:$0xff]
        %v1528 = vld [vmem:[%s1014 + $0x78] sm:$0xff]
        %v1529 = vmul.f32 %v1513, %v1497
        %v1530 = vmul.f32 %v1514, %v1498
        %v1531 = vmul.f32 %v1515, %v1499
        %v1532 = vmul.f32 %v1516, %v1500
        %v1533 = vmul.f32 %v1517, %v1501
        %v1534 = vmul.f32 %v1518, %v1502
        %v1535 = vmul.f32 %v1519, %v1503
        %v1536 = vmul.f32 %v1520, %v1504
        %v1537 = vmul.f32 %v1521, %v1505
        %v1538 = vmul.f32 %v1522, %v1506
        %v1539 = vmul.f32 %v1523, %v1507
        %v1540 = vmul.f32 %v1524, %v1508
        %v1541 = vmul.f32 %v1525, %v1509
        %v1542 = vmul.f32 %v1526, %v1510
        %v1543 = vmul.f32 %v1527, %v1511
        %v1544 = vmul.f32 %v1528, %v1512
        %1545 = vadd.xlane.f32.xlu0 %v1529
        %v1546 = vpop.xlane.xlu0 %1545
        %1547 = vadd.xlane.f32.xlu0 %v1530
        %v1548 = vpop.xlane.xlu0 %1547
        %1549 = vadd.xlane.f32.xlu0 %v1531
        %v1550 = vpop.xlane.xlu0 %1549
        %1551 = vadd.xlane.f32.xlu0 %v1532
        %v1552 = vpop.xlane.xlu0 %1551
        %1553 = vadd.xlane.f32.xlu0 %v1533
        %v1554 = vpop.xlane.xlu0 %1553
        %1555 = vadd.xlane.f32.xlu0 %v1534
        %v1556 = vpop.xlane.xlu0 %1555
        %1557 = vadd.xlane.f32.xlu0 %v1535
        %v1558 = vpop.xlane.xlu0 %1557
        %1559 = vadd.xlane.f32.xlu0 %v1536
        %v1560 = vpop.xlane.xlu0 %1559
        %1561 = vadd.xlane.f32.xlu0 %v1537
        %v1562 = vpop.xlane.xlu0 %1561
        %1563 = vadd.xlane.f32.xlu0 %v1538
        %v1564 = vpop.xlane.xlu0 %1563
        %1565 = vadd.xlane.f32.xlu0 %v1539
        %v1566 = vpop.xlane.xlu0 %1565
        %1567 = vadd.xlane.f32.xlu0 %v1540
        %v1568 = vpop.xlane.xlu0 %1567
        %1569 = vadd.xlane.f32.xlu0 %v1541
        %v1570 = vpop.xlane.xlu0 %1569
        %1571 = vadd.xlane.f32.xlu0 %v1542
        %v1572 = vpop.xlane.xlu0 %1571
        %1573 = vadd.xlane.f32.xlu0 %v1543
        %v1574 = vpop.xlane.xlu0 %1573
        %1575 = vadd.xlane.f32.xlu0 %v1544
        %v1576 = vpop.xlane.xlu0 %1575
        %v1577 = vmul.f32 %v1546, 2.0
        %v1578 = vmul.f32 %v1548, 2.0
        %v1579 = vmul.f32 %v1550, 2.0
        %v1580 = vmul.f32 %v1552, 2.0
        %v1581 = vmul.f32 %v1554, 2.0
        %v1582 = vmul.f32 %v1556, 2.0
        %v1583 = vmul.f32 %v1558, 2.0
        %v1584 = vmul.f32 %v1560, 2.0
        %v1585 = vmul.f32 %v1562, 2.0
        %v1586 = vmul.f32 %v1564, 2.0
        %v1587 = vmul.f32 %v1566, 2.0
        %v1588 = vmul.f32 %v1568, 2.0
        %v1589 = vmul.f32 %v1570, 2.0
        %v1590 = vmul.f32 %v1572, 2.0
        %v1591 = vmul.f32 %v1574, 2.0
        %v1592 = vmul.f32 %v1576, 2.0
        %v1593 = vld [vmem:[%s944] sm:$0xff]
        %v1594 = vld [vmem:[%s944 + $0x8] sm:$0xff]
        %v1595 = vld [vmem:[%s944 + $0x10] sm:$0xff]
        %v1596 = vld [vmem:[%s944 + $0x18] sm:$0xff]
        %v1597 = vld [vmem:[%s944 + $0x20] sm:$0xff]
        %v1598 = vld [vmem:[%s944 + $0x28] sm:$0xff]
        %v1599 = vld [vmem:[%s944 + $0x30] sm:$0xff]
        %v1600 = vld [vmem:[%s944 + $0x38] sm:$0xff]
        %v1601 = vld [vmem:[%s944 + $0x40] sm:$0xff]
        %v1602 = vld [vmem:[%s944 + $0x48] sm:$0xff]
        %v1603 = vld [vmem:[%s944 + $0x50] sm:$0xff]
        %v1604 = vld [vmem:[%s944 + $0x58] sm:$0xff]
        %v1605 = vld [vmem:[%s944 + $0x60] sm:$0xff]
        %v1606 = vld [vmem:[%s944 + $0x68] sm:$0xff]
        %v1607 = vld [vmem:[%s944 + $0x70] sm:$0xff]
        %v1608 = vld [vmem:[%s944 + $0x78] sm:$0xff]
        %v1609 = vld [vmem:[%s1024] sm:$0xff]
        %v1610 = vld [vmem:[%s1024 + $0x8] sm:$0xff]
        %v1611 = vld [vmem:[%s1024 + $0x10] sm:$0xff]
        %v1612 = vld [vmem:[%s1024 + $0x18] sm:$0xff]
        %v1613 = vld [vmem:[%s1024 + $0x20] sm:$0xff]
        %v1614 = vld [vmem:[%s1024 + $0x28] sm:$0xff]
        %v1615 = vld [vmem:[%s1024 + $0x30] sm:$0xff]
        %v1616 = vld [vmem:[%s1024 + $0x38] sm:$0xff]
        %v1617 = vld [vmem:[%s1024 + $0x40] sm:$0xff]
        %v1618 = vld [vmem:[%s1024 + $0x48] sm:$0xff]
        %v1619 = vld [vmem:[%s1024 + $0x50] sm:$0xff]
        %v1620 = vld [vmem:[%s1024 + $0x58] sm:$0xff]
        %v1621 = vld [vmem:[%s1024 + $0x60] sm:$0xff]
        %v1622 = vld [vmem:[%s1024 + $0x68] sm:$0xff]
        %v1623 = vld [vmem:[%s1024 + $0x70] sm:$0xff]
        %v1624 = vld [vmem:[%s1024 + $0x78] sm:$0xff]
        %v1625 = vmul.f32 %v1609, %v1593
        %v1626 = vmul.f32 %v1610, %v1594
        %v1627 = vmul.f32 %v1611, %v1595
        %v1628 = vmul.f32 %v1612, %v1596
        %v1629 = vmul.f32 %v1613, %v1597
        %v1630 = vmul.f32 %v1614, %v1598
        %v1631 = vmul.f32 %v1615, %v1599
        %v1632 = vmul.f32 %v1616, %v1600
        %v1633 = vmul.f32 %v1617, %v1601
        %v1634 = vmul.f32 %v1618, %v1602
        %v1635 = vmul.f32 %v1619, %v1603
        %v1636 = vmul.f32 %v1620, %v1604
        %v1637 = vmul.f32 %v1621, %v1605
        %v1638 = vmul.f32 %v1622, %v1606
        %v1639 = vmul.f32 %v1623, %v1607
        %v1640 = vmul.f32 %v1624, %v1608
        %1641 = vadd.xlane.f32.xlu0 %v1625
        %v1642 = vpop.xlane.xlu0 %1641
        %1643 = vadd.xlane.f32.xlu0 %v1626
        %v1644 = vpop.xlane.xlu0 %1643
        %1645 = vadd.xlane.f32.xlu0 %v1627
        %v1646 = vpop.xlane.xlu0 %1645
        %1647 = vadd.xlane.f32.xlu0 %v1628
        %v1648 = vpop.xlane.xlu0 %1647
        %1649 = vadd.xlane.f32.xlu0 %v1629
        %v1650 = vpop.xlane.xlu0 %1649
        %1651 = vadd.xlane.f32.xlu0 %v1630
        %v1652 = vpop.xlane.xlu0 %1651
        %1653 = vadd.xlane.f32.xlu0 %v1631
        %v1654 = vpop.xlane.xlu0 %1653
        %1655 = vadd.xlane.f32.xlu0 %v1632
        %v1656 = vpop.xlane.xlu0 %1655
        %1657 = vadd.xlane.f32.xlu0 %v1633
        %v1658 = vpop.xlane.xlu0 %1657
        %1659 = vadd.xlane.f32.xlu0 %v1634
        %v1660 = vpop.xlane.xlu0 %1659
        %1661 = vadd.xlane.f32.xlu0 %v1635
        %v1662 = vpop.xlane.xlu0 %1661
        %1663 = vadd.xlane.f32.xlu0 %v1636
        %v1664 = vpop.xlane.xlu0 %1663
        %1665 = vadd.xlane.f32.xlu0 %v1637
        %v1666 = vpop.xlane.xlu0 %1665
        %1667 = vadd.xlane.f32.xlu0 %v1638
        %v1668 = vpop.xlane.xlu0 %1667
        %1669 = vadd.xlane.f32.xlu0 %v1639
        %v1670 = vpop.xlane.xlu0 %1669
        %1671 = vadd.xlane.f32.xlu0 %v1640
        %v1672 = vpop.xlane.xlu0 %1671
        %v1673 = vmul.f32 %v1642, 2.0
        %v1674 = vmul.f32 %v1644, 2.0
        %v1675 = vmul.f32 %v1646, 2.0
        %v1676 = vmul.f32 %v1648, 2.0
        %v1677 = vmul.f32 %v1650, 2.0
        %v1678 = vmul.f32 %v1652, 2.0
        %v1679 = vmul.f32 %v1654, 2.0
        %v1680 = vmul.f32 %v1656, 2.0
        %v1681 = vmul.f32 %v1658, 2.0
        %v1682 = vmul.f32 %v1660, 2.0
        %v1683 = vmul.f32 %v1662, 2.0
        %v1684 = vmul.f32 %v1664, 2.0
        %v1685 = vmul.f32 %v1666, 2.0
        %v1686 = vmul.f32 %v1668, 2.0
        %v1687 = vmul.f32 %v1670, 2.0
        %v1688 = vmul.f32 %v1672, 2.0
        %v1689 = vld [vmem:[%s954] sm:$0xff]
        %v1690 = vld [vmem:[%s954 + $0x8] sm:$0xff]
        %v1691 = vld [vmem:[%s954 + $0x10] sm:$0xff]
        %v1692 = vld [vmem:[%s954 + $0x18] sm:$0xff]
        %v1693 = vld [vmem:[%s954 + $0x20] sm:$0xff]
        %v1694 = vld [vmem:[%s954 + $0x28] sm:$0xff]
        %v1695 = vld [vmem:[%s954 + $0x30] sm:$0xff]
        %v1696 = vld [vmem:[%s954 + $0x38] sm:$0xff]
        %v1697 = vld [vmem:[%s954 + $0x40] sm:$0xff]
        %v1698 = vld [vmem:[%s954 + $0x48] sm:$0xff]
        %v1699 = vld [vmem:[%s954 + $0x50] sm:$0xff]
        %v1700 = vld [vmem:[%s954 + $0x58] sm:$0xff]
        %v1701 = vld [vmem:[%s954 + $0x60] sm:$0xff]
        %v1702 = vld [vmem:[%s954 + $0x68] sm:$0xff]
        %v1703 = vld [vmem:[%s954 + $0x70] sm:$0xff]
        %v1704 = vld [vmem:[%s954 + $0x78] sm:$0xff]
        %v1705 = vld [vmem:[%s1034] sm:$0xff]
        %v1706 = vld [vmem:[%s1034 + $0x8] sm:$0xff]
        %v1707 = vld [vmem:[%s1034 + $0x10] sm:$0xff]
        %v1708 = vld [vmem:[%s1034 + $0x18] sm:$0xff]
        %v1709 = vld [vmem:[%s1034 + $0x20] sm:$0xff]
        %v1710 = vld [vmem:[%s1034 + $0x28] sm:$0xff]
        %v1711 = vld [vmem:[%s1034 + $0x30] sm:$0xff]
        %v1712 = vld [vmem:[%s1034 + $0x38] sm:$0xff]
        %v1713 = vld [vmem:[%s1034 + $0x40] sm:$0xff]
        %v1714 = vld [vmem:[%s1034 + $0x48] sm:$0xff]
        %v1715 = vld [vmem:[%s1034 + $0x50] sm:$0xff]
        %v1716 = vld [vmem:[%s1034 + $0x58] sm:$0xff]
        %v1717 = vld [vmem:[%s1034 + $0x60] sm:$0xff]
        %v1718 = vld [vmem:[%s1034 + $0x68] sm:$0xff]
        %v1719 = vld [vmem:[%s1034 + $0x70] sm:$0xff]
        %v1720 = vld [vmem:[%s1034 + $0x78] sm:$0xff]
        %v1721 = vmul.f32 %v1705, %v1689
        %v1722 = vmul.f32 %v1706, %v1690
        %v1723 = vmul.f32 %v1707, %v1691
        %v1724 = vmul.f32 %v1708, %v1692
        %v1725 = vmul.f32 %v1709, %v1693
        %v1726 = vmul.f32 %v1710, %v1694
        %v1727 = vmul.f32 %v1711, %v1695
        %v1728 = vmul.f32 %v1712, %v1696
        %v1729 = vmul.f32 %v1713, %v1697
        %v1730 = vmul.f32 %v1714, %v1698
        %v1731 = vmul.f32 %v1715, %v1699
        %v1732 = vmul.f32 %v1716, %v1700
        %v1733 = vmul.f32 %v1717, %v1701
        %v1734 = vmul.f32 %v1718, %v1702
        %v1735 = vmul.f32 %v1719, %v1703
        %v1736 = vmul.f32 %v1720, %v1704
        %1737 = vadd.xlane.f32.xlu0 %v1721
        %v1738 = vpop.xlane.xlu0 %1737
        %1739 = vadd.xlane.f32.xlu0 %v1722
        %v1740 = vpop.xlane.xlu0 %1739
        %1741 = vadd.xlane.f32.xlu0 %v1723
        %v1742 = vpop.xlane.xlu0 %1741
        %1743 = vadd.xlane.f32.xlu0 %v1724
        %v1744 = vpop.xlane.xlu0 %1743
        %1745 = vadd.xlane.f32.xlu0 %v1725
        %v1746 = vpop.xlane.xlu0 %1745
        %1747 = vadd.xlane.f32.xlu0 %v1726
        %v1748 = vpop.xlane.xlu0 %1747
        %1749 = vadd.xlane.f32.xlu0 %v1727
        %v1750 = vpop.xlane.xlu0 %1749
        %1751 = vadd.xlane.f32.xlu0 %v1728
        %v1752 = vpop.xlane.xlu0 %1751
        %1753 = vadd.xlane.f32.xlu0 %v1729
        %v1754 = vpop.xlane.xlu0 %1753
        %1755 = vadd.xlane.f32.xlu0 %v1730
        %v1756 = vpop.xlane.xlu0 %1755
        %1757 = vadd.xlane.f32.xlu0 %v1731
        %v1758 = vpop.xlane.xlu0 %1757
        %1759 = vadd.xlane.f32.xlu0 %v1732
        %v1760 = vpop.xlane.xlu0 %1759
        %1761 = vadd.xlane.f32.xlu0 %v1733
        %v1762 = vpop.xlane.xlu0 %1761
        %1763 = vadd.xlane.f32.xlu0 %v1734
        %v1764 = vpop.xlane.xlu0 %1763
        %1765 = vadd.xlane.f32.xlu0 %v1735
        %v1766 = vpop.xlane.xlu0 %1765
        %1767 = vadd.xlane.f32.xlu0 %v1736
        %v1768 = vpop.xlane.xlu0 %1767
        %v1769 = vmul.f32 %v1738, 2.0
        %v1770 = vmul.f32 %v1740, 2.0
        %v1771 = vmul.f32 %v1742, 2.0
        %v1772 = vmul.f32 %v1744, 2.0
        %v1773 = vmul.f32 %v1746, 2.0
        %v1774 = vmul.f32 %v1748, 2.0
        %v1775 = vmul.f32 %v1750, 2.0
        %v1776 = vmul.f32 %v1752, 2.0
        %v1777 = vmul.f32 %v1754, 2.0
        %v1778 = vmul.f32 %v1756, 2.0
        %v1779 = vmul.f32 %v1758, 2.0
        %v1780 = vmul.f32 %v1760, 2.0
        %v1781 = vmul.f32 %v1762, 2.0
        %v1782 = vmul.f32 %v1764, 2.0
        %v1783 = vmul.f32 %v1766, 2.0
        %v1784 = vmul.f32 %v1768, 2.0
        %v1785 = vld [vmem:[%s964] sm:$0xff]
        %v1786 = vld [vmem:[%s964 + $0x8] sm:$0xff]
        %v1787 = vld [vmem:[%s964 + $0x10] sm:$0xff]
        %v1788 = vld [vmem:[%s964 + $0x18] sm:$0xff]
        %v1789 = vld [vmem:[%s964 + $0x20] sm:$0xff]
        %v1790 = vld [vmem:[%s964 + $0x28] sm:$0xff]
        %v1791 = vld [vmem:[%s964 + $0x30] sm:$0xff]
        %v1792 = vld [vmem:[%s964 + $0x38] sm:$0xff]
        %v1793 = vld [vmem:[%s964 + $0x40] sm:$0xff]
        %v1794 = vld [vmem:[%s964 + $0x48] sm:$0xff]
        %v1795 = vld [vmem:[%s964 + $0x50] sm:$0xff]
        %v1796 = vld [vmem:[%s964 + $0x58] sm:$0xff]
        %v1797 = vld [vmem:[%s964 + $0x60] sm:$0xff]
        %v1798 = vld [vmem:[%s964 + $0x68] sm:$0xff]
        %v1799 = vld [vmem:[%s964 + $0x70] sm:$0xff]
        %v1800 = vld [vmem:[%s964 + $0x78] sm:$0xff]
        %v1801 = vld [vmem:[%s1044] sm:$0xff]
        %v1802 = vld [vmem:[%s1044 + $0x8] sm:$0xff]
        %v1803 = vld [vmem:[%s1044 + $0x10] sm:$0xff]
        %v1804 = vld [vmem:[%s1044 + $0x18] sm:$0xff]
        %v1805 = vld [vmem:[%s1044 + $0x20] sm:$0xff]
        %v1806 = vld [vmem:[%s1044 + $0x28] sm:$0xff]
        %v1807 = vld [vmem:[%s1044 + $0x30] sm:$0xff]
        %v1808 = vld [vmem:[%s1044 + $0x38] sm:$0xff]
        %v1809 = vld [vmem:[%s1044 + $0x40] sm:$0xff]
        %v1810 = vld [vmem:[%s1044 + $0x48] sm:$0xff]
        %v1811 = vld [vmem:[%s1044 + $0x50] sm:$0xff]
        %v1812 = vld [vmem:[%s1044 + $0x58] sm:$0xff]
        %v1813 = vld [vmem:[%s1044 + $0x60] sm:$0xff]
        %v1814 = vld [vmem:[%s1044 + $0x68] sm:$0xff]
        %v1815 = vld [vmem:[%s1044 + $0x70] sm:$0xff]
        %v1816 = vld [vmem:[%s1044 + $0x78] sm:$0xff]
        %v1817 = vmul.f32 %v1801, %v1785
        %v1818 = vmul.f32 %v1802, %v1786
        %v1819 = vmul.f32 %v1803, %v1787
        %v1820 = vmul.f32 %v1804, %v1788
        %v1821 = vmul.f32 %v1805, %v1789
        %v1822 = vmul.f32 %v1806, %v1790
        %v1823 = vmul.f32 %v1807, %v1791
        %v1824 = vmul.f32 %v1808, %v1792
        %v1825 = vmul.f32 %v1809, %v1793
        %v1826 = vmul.f32 %v1810, %v1794
        %v1827 = vmul.f32 %v1811, %v1795
        %v1828 = vmul.f32 %v1812, %v1796
        %v1829 = vmul.f32 %v1813, %v1797
        %v1830 = vmul.f32 %v1814, %v1798
        %v1831 = vmul.f32 %v1815, %v1799
        %v1832 = vmul.f32 %v1816, %v1800
        %1833 = vadd.xlane.f32.xlu0 %v1817
        %v1834 = vpop.xlane.xlu0 %1833
        %1835 = vadd.xlane.f32.xlu0 %v1818
        %v1836 = vpop.xlane.xlu0 %1835
        %1837 = vadd.xlane.f32.xlu0 %v1819
        %v1838 = vpop.xlane.xlu0 %1837
        %1839 = vadd.xlane.f32.xlu0 %v1820
        %v1840 = vpop.xlane.xlu0 %1839
        %1841 = vadd.xlane.f32.xlu0 %v1821
        %v1842 = vpop.xlane.xlu0 %1841
        %1843 = vadd.xlane.f32.xlu0 %v1822
        %v1844 = vpop.xlane.xlu0 %1843
        %1845 = vadd.xlane.f32.xlu0 %v1823
        %v1846 = vpop.xlane.xlu0 %1845
        %1847 = vadd.xlane.f32.xlu0 %v1824
        %v1848 = vpop.xlane.xlu0 %1847
        %1849 = vadd.xlane.f32.xlu0 %v1825
        %v1850 = vpop.xlane.xlu0 %1849
        %1851 = vadd.xlane.f32.xlu0 %v1826
        %v1852 = vpop.xlane.xlu0 %1851
        %1853 = vadd.xlane.f32.xlu0 %v1827
        %v1854 = vpop.xlane.xlu0 %1853
        %1855 = vadd.xlane.f32.xlu0 %v1828
        %v1856 = vpop.xlane.xlu0 %1855
        %1857 = vadd.xlane.f32.xlu0 %v1829
        %v1858 = vpop.xlane.xlu0 %1857
        %1859 = vadd.xlane.f32.xlu0 %v1830
        %v1860 = vpop.xlane.xlu0 %1859
        %1861 = vadd.xlane.f32.xlu0 %v1831
        %v1862 = vpop.xlane.xlu0 %1861
        %1863 = vadd.xlane.f32.xlu0 %v1832
        %v1864 = vpop.xlane.xlu0 %1863
        %v1865 = vmul.f32 %v1834, 2.0
        %v1866 = vmul.f32 %v1836, 2.0
        %v1867 = vmul.f32 %v1838, 2.0
        %v1868 = vmul.f32 %v1840, 2.0
        %v1869 = vmul.f32 %v1842, 2.0
        %v1870 = vmul.f32 %v1844, 2.0
        %v1871 = vmul.f32 %v1846, 2.0
        %v1872 = vmul.f32 %v1848, 2.0
        %v1873 = vmul.f32 %v1850, 2.0
        %v1874 = vmul.f32 %v1852, 2.0
        %v1875 = vmul.f32 %v1854, 2.0
        %v1876 = vmul.f32 %v1856, 2.0
        %v1877 = vmul.f32 %v1858, 2.0
        %v1878 = vmul.f32 %v1860, 2.0
        %v1879 = vmul.f32 %v1862, 2.0
        %v1880 = vmul.f32 %v1864, 2.0
        %v1881 = vld [vmem:[%s974] sm:$0xff]
        %v1882 = vld [vmem:[%s974 + $0x8] sm:$0xff]
        %v1883 = vld [vmem:[%s974 + $0x10] sm:$0xff]
        %v1884 = vld [vmem:[%s974 + $0x18] sm:$0xff]
        %v1885 = vld [vmem:[%s974 + $0x20] sm:$0xff]
        %v1886 = vld [vmem:[%s974 + $0x28] sm:$0xff]
        %v1887 = vld [vmem:[%s974 + $0x30] sm:$0xff]
        %v1888 = vld [vmem:[%s974 + $0x38] sm:$0xff]
        %v1889 = vld [vmem:[%s974 + $0x40] sm:$0xff]
        %v1890 = vld [vmem:[%s974 + $0x48] sm:$0xff]
        %v1891 = vld [vmem:[%s974 + $0x50] sm:$0xff]
        %v1892 = vld [vmem:[%s974 + $0x58] sm:$0xff]
        %v1893 = vld [vmem:[%s974 + $0x60] sm:$0xff]
        %v1894 = vld [vmem:[%s974 + $0x68] sm:$0xff]
        %v1895 = vld [vmem:[%s974 + $0x70] sm:$0xff]
        %v1896 = vld [vmem:[%s974 + $0x78] sm:$0xff]
        %v1897 = vld [vmem:[%s1054] sm:$0xff]
        %v1898 = vld [vmem:[%s1054 + $0x8] sm:$0xff]
        %v1899 = vld [vmem:[%s1054 + $0x10] sm:$0xff]
        %v1900 = vld [vmem:[%s1054 + $0x18] sm:$0xff]
        %v1901 = vld [vmem:[%s1054 + $0x20] sm:$0xff]
        %v1902 = vld [vmem:[%s1054 + $0x28] sm:$0xff]
        %v1903 = vld [vmem:[%s1054 + $0x30] sm:$0xff]
        %v1904 = vld [vmem:[%s1054 + $0x38] sm:$0xff]
        %v1905 = vld [vmem:[%s1054 + $0x40] sm:$0xff]
        %v1906 = vld [vmem:[%s1054 + $0x48] sm:$0xff]
        %v1907 = vld [vmem:[%s1054 + $0x50] sm:$0xff]
        %v1908 = vld [vmem:[%s1054 + $0x58] sm:$0xff]
        %v1909 = vld [vmem:[%s1054 + $0x60] sm:$0xff]
        %v1910 = vld [vmem:[%s1054 + $0x68] sm:$0xff]
        %v1911 = vld [vmem:[%s1054 + $0x70] sm:$0xff]
        %v1912 = vld [vmem:[%s1054 + $0x78] sm:$0xff]
        %v1913 = vmul.f32 %v1897, %v1881
        %v1914 = vmul.f32 %v1898, %v1882
        %v1915 = vmul.f32 %v1899, %v1883
        %v1916 = vmul.f32 %v1900, %v1884
        %v1917 = vmul.f32 %v1901, %v1885
        %v1918 = vmul.f32 %v1902, %v1886
        %v1919 = vmul.f32 %v1903, %v1887
        %v1920 = vmul.f32 %v1904, %v1888
        %v1921 = vmul.f32 %v1905, %v1889
        %v1922 = vmul.f32 %v1906, %v1890
        %v1923 = vmul.f32 %v1907, %v1891
        %v1924 = vmul.f32 %v1908, %v1892
        %v1925 = vmul.f32 %v1909, %v1893
        %v1926 = vmul.f32 %v1910, %v1894
        %v1927 = vmul.f32 %v1911, %v1895
        %v1928 = vmul.f32 %v1912, %v1896
        %1929 = vadd.xlane.f32.xlu0 %v1913
        %v1930 = vpop.xlane.xlu0 %1929
        %1931 = vadd.xlane.f32.xlu0 %v1914
        %v1932 = vpop.xlane.xlu0 %1931
        %1933 = vadd.xlane.f32.xlu0 %v1915
        %v1934 = vpop.xlane.xlu0 %1933
        %1935 = vadd.xlane.f32.xlu0 %v1916
        %v1936 = vpop.xlane.xlu0 %1935
        %1937 = vadd.xlane.f32.xlu0 %v1917
        %v1938 = vpop.xlane.xlu0 %1937
        %1939 = vadd.xlane.f32.xlu0 %v1918
        %v1940 = vpop.xlane.xlu0 %1939
        %1941 = vadd.xlane.f32.xlu0 %v1919
        %v1942 = vpop.xlane.xlu0 %1941
        %1943 = vadd.xlane.f32.xlu0 %v1920
        %v1944 = vpop.xlane.xlu0 %1943
        %1945 = vadd.xlane.f32.xlu0 %v1921
        %v1946 = vpop.xlane.xlu0 %1945
        %1947 = vadd.xlane.f32.xlu0 %v1922
        %v1948 = vpop.xlane.xlu0 %1947
        %1949 = vadd.xlane.f32.xlu0 %v1923
        %v1950 = vpop.xlane.xlu0 %1949
        %1951 = vadd.xlane.f32.xlu0 %v1924
        %v1952 = vpop.xlane.xlu0 %1951
        %1953 = vadd.xlane.f32.xlu0 %v1925
        %v1954 = vpop.xlane.xlu0 %1953
        %1955 = vadd.xlane.f32.xlu0 %v1926
        %v1956 = vpop.xlane.xlu0 %1955
        %1957 = vadd.xlane.f32.xlu0 %v1927
        %v1958 = vpop.xlane.xlu0 %1957
        %1959 = vadd.xlane.f32.xlu0 %v1928
        %v1960 = vpop.xlane.xlu0 %1959
        %v1961 = vmul.f32 %v1930, 2.0
        %v1962 = vmul.f32 %v1932, 2.0
        %v1963 = vmul.f32 %v1934, 2.0
        %v1964 = vmul.f32 %v1936, 2.0
        %v1965 = vmul.f32 %v1938, 2.0
        %v1966 = vmul.f32 %v1940, 2.0
        %v1967 = vmul.f32 %v1942, 2.0
        %v1968 = vmul.f32 %v1944, 2.0
        %v1969 = vmul.f32 %v1946, 2.0
        %v1970 = vmul.f32 %v1948, 2.0
        %v1971 = vmul.f32 %v1950, 2.0
        %v1972 = vmul.f32 %v1952, 2.0
        %v1973 = vmul.f32 %v1954, 2.0
        %v1974 = vmul.f32 %v1956, 2.0
        %v1975 = vmul.f32 %v1958, 2.0
        %v1976 = vmul.f32 %v1960, 2.0
        %v1977 = vmax.f32 %v1289, %v1385
        %v1978 = vmax.f32 %v1290, %v1386
        %v1979 = vmax.f32 %v1291, %v1387
        %v1980 = vmax.f32 %v1292, %v1388
        %v1981 = vmax.f32 %v1293, %v1389
        %v1982 = vmax.f32 %v1294, %v1390
        %v1983 = vmax.f32 %v1295, %v1391
        %v1984 = vmax.f32 %v1296, %v1392
        %v1985 = vmax.f32 %v1297, %v1393
        %v1986 = vmax.f32 %v1298, %v1394
        %v1987 = vmax.f32 %v1299, %v1395
        %v1988 = vmax.f32 %v1300, %v1396
        %v1989 = vmax.f32 %v1301, %v1397
        %v1990 = vmax.f32 %v1302, %v1398
        %v1991 = vmax.f32 %v1303, %v1399
        %v1992 = vmax.f32 %v1304, %v1400
        %v1993 = vmax.f32 %v1977, %v1481
        %v1994 = vmax.f32 %v1978, %v1482
        %v1995 = vmax.f32 %v1979, %v1483
        %v1996 = vmax.f32 %v1980, %v1484
        %v1997 = vmax.f32 %v1981, %v1485
        %v1998 = vmax.f32 %v1982, %v1486
        %v1999 = vmax.f32 %v1983, %v1487
        %v2000 = vmax.f32 %v1984, %v1488
        %v2001 = vmax.f32 %v1985, %v1489
        %v2002 = vmax.f32 %v1986, %v1490
        %v2003 = vmax.f32 %v1987, %v1491
        %v2004 = vmax.f32 %v1988, %v1492
        %v2005 = vmax.f32 %v1989, %v1493
        %v2006 = vmax.f32 %v1990, %v1494
        %v2007 = vmax.f32 %v1991, %v1495
        %v2008 = vmax.f32 %v1992, %v1496
        %v2009 = vmax.f32 %v1993, %v1577
        %v2010 = vmax.f32 %v1994, %v1578
        %v2011 = vmax.f32 %v1995, %v1579
        %v2012 = vmax.f32 %v1996, %v1580
        %v2013 = vmax.f32 %v1997, %v1581
        %v2014 = vmax.f32 %v1998, %v1582
        %v2015 = vmax.f32 %v1999, %v1583
        %v2016 = vmax.f32 %v2000, %v1584
        %v2017 = vmax.f32 %v2001, %v1585
        %v2018 = vmax.f32 %v2002, %v1586
        %v2019 = vmax.f32 %v2003, %v1587
        %v2020 = vmax.f32 %v2004, %v1588
        %v2021 = vmax.f32 %v2005, %v1589
        %v2022 = vmax.f32 %v2006, %v1590
        %v2023 = vmax.f32 %v2007, %v1591
        %v2024 = vmax.f32 %v2008, %v1592
        %v2025 = vmax.f32 %v2009, %v1673
        %v2026 = vmax.f32 %v2010, %v1674
        %v2027 = vmax.f32 %v2011, %v1675
        %v2028 = vmax.f32 %v2012, %v1676
        %v2029 = vmax.f32 %v2013, %v1677
        %v2030 = vmax.f32 %v2014, %v1678
        %v2031 = vmax.f32 %v2015, %v1679
        %v2032 = vmax.f32 %v2016, %v1680
        %v2033 = vmax.f32 %v2017, %v1681
        %v2034 = vmax.f32 %v2018, %v1682
        %v2035 = vmax.f32 %v2019, %v1683
        %v2036 = vmax.f32 %v2020, %v1684
        %v2037 = vmax.f32 %v2021, %v1685
        %v2038 = vmax.f32 %v2022, %v1686
        %v2039 = vmax.f32 %v2023, %v1687
        %v2040 = vmax.f32 %v2024, %v1688
        %v2041 = vmax.f32 %v2025, %v1769
        %v2042 = vmax.f32 %v2026, %v1770
        %v2043 = vmax.f32 %v2027, %v1771
        %v2044 = vmax.f32 %v2028, %v1772
        %v2045 = vmax.f32 %v2029, %v1773
        %v2046 = vmax.f32 %v2030, %v1774
        %v2047 = vmax.f32 %v2031, %v1775
        %v2048 = vmax.f32 %v2032, %v1776
        %v2049 = vmax.f32 %v2033, %v1777
        %v2050 = vmax.f32 %v2034, %v1778
        %v2051 = vmax.f32 %v2035, %v1779
        %v2052 = vmax.f32 %v2036, %v1780
        %v2053 = vmax.f32 %v2037, %v1781
        %v2054 = vmax.f32 %v2038, %v1782
        %v2055 = vmax.f32 %v2039, %v1783
        %v2056 = vmax.f32 %v2040, %v1784
        %v2057 = vmax.f32 %v2041, %v1865
        %v2058 = vmax.f32 %v2042, %v1866
        %v2059 = vmax.f32 %v2043, %v1867
        %v2060 = vmax.f32 %v2044, %v1868
        %v2061 = vmax.f32 %v2045, %v1869
        %v2062 = vmax.f32 %v2046, %v1870
        %v2063 = vmax.f32 %v2047, %v1871
        %v2064 = vmax.f32 %v2048, %v1872
        %v2065 = vmax.f32 %v2049, %v1873
        %v2066 = vmax.f32 %v2050, %v1874
        %v2067 = vmax.f32 %v2051, %v1875
        %v2068 = vmax.f32 %v2052, %v1876
        %v2069 = vmax.f32 %v2053, %v1877
        %v2070 = vmax.f32 %v2054, %v1878
        %v2071 = vmax.f32 %v2055, %v1879
        %v2072 = vmax.f32 %v2056, %v1880
        %v2073 = vmax.f32 %v2057, %v1961
        %v2074 = vmax.f32 %v2058, %v1962
        %v2075 = vmax.f32 %v2059, %v1963
        %v2076 = vmax.f32 %v2060, %v1964
        %v2077 = vmax.f32 %v2061, %v1965
        %v2078 = vmax.f32 %v2062, %v1966
        %v2079 = vmax.f32 %v2063, %v1967
        %v2080 = vmax.f32 %v2064, %v1968
        %v2081 = vmax.f32 %v2065, %v1969
        %v2082 = vmax.f32 %v2066, %v1970
        %v2083 = vmax.f32 %v2067, %v1971
        %v2084 = vmax.f32 %v2068, %v1972
        %v2085 = vmax.f32 %v2069, %v1973
        %v2086 = vmax.f32 %v2070, %v1974
        %v2087 = vmax.f32 %v2071, %v1975
        %v2088 = vmax.f32 %v2072, %v1976
        %v2089 = vsub.f32 %v1289, %v2073
        %v2090 = vsub.f32 %v1290, %v2074
        %v2091 = vsub.f32 %v1291, %v2075
        %v2092 = vsub.f32 %v1292, %v2076
        %v2093 = vsub.f32 %v1293, %v2077
        %v2094 = vsub.f32 %v1294, %v2078
        %v2095 = vsub.f32 %v1295, %v2079
        %v2096 = vsub.f32 %v1296, %v2080
        %v2097 = vsub.f32 %v1297, %v2081
        %v2098 = vsub.f32 %v1298, %v2082
        %v2099 = vsub.f32 %v1299, %v2083
        %v2100 = vsub.f32 %v1300, %v2084
        %v2101 = vsub.f32 %v1301, %v2085
        %v2102 = vsub.f32 %v1302, %v2086
        %v2103 = vsub.f32 %v1303, %v2087
        %v2104 = vsub.f32 %v1304, %v2088
        %v2105 = vmul.f32 %v2089, 1.442695
        %v2106 = vpow.pop %v2105
        %v2107 = vmul.f32 %v2090, 1.442695
        %v2108 = vpow.pop %v2107
        %v2109 = vmul.f32 %v2091, 1.442695
        %v2110 = vpow.pop %v2109
        %v2111 = vmul.f32 %v2092, 1.442695
        %v2112 = vpow.pop %v2111
        %v2113 = vmul.f32 %v2093, 1.442695
        %v2114 = vpow.pop %v2113
        %v2115 = vmul.f32 %v2094, 1.442695
        %v2116 = vpow.pop %v2115
        %v2117 = vmul.f32 %v2095, 1.442695
        %v2118 = vpow.pop %v2117
        %v2119 = vmul.f32 %v2096, 1.442695
        %v2120 = vpow.pop %v2119
        %v2121 = vmul.f32 %v2097, 1.442695
        %v2122 = vpow.pop %v2121
        %v2123 = vmul.f32 %v2098, 1.442695
        %v2124 = vpow.pop %v2123
        %v2125 = vmul.f32 %v2099, 1.442695
        %v2126 = vpow.pop %v2125
        %v2127 = vmul.f32 %v2100, 1.442695
        %v2128 = vpow.pop %v2127
        %v2129 = vmul.f32 %v2101, 1.442695
        %v2130 = vpow.pop %v2129
        %v2131 = vmul.f32 %v2102, 1.442695
        %v2132 = vpow.pop %v2131
        %v2133 = vmul.f32 %v2103, 1.442695
        %v2134 = vpow.pop %v2133
        %v2135 = vmul.f32 %v2104, 1.442695
        %v2136 = vpow.pop %v2135
        %v2137 = vsub.f32 %v1385, %v2073
        %v2138 = vsub.f32 %v1386, %v2074
        %v2139 = vsub.f32 %v1387, %v2075
        %v2140 = vsub.f32 %v1388, %v2076
        %v2141 = vsub.f32 %v1389, %v2077
        %v2142 = vsub.f32 %v1390, %v2078
        %v2143 = vsub.f32 %v1391, %v2079
        %v2144 = vsub.f32 %v1392, %v2080
        %v2145 = vsub.f32 %v1393, %v2081
        %v2146 = vsub.f32 %v1394, %v2082
        %v2147 = vsub.f32 %v1395, %v2083
        %v2148 = vsub.f32 %v1396, %v2084
        %v2149 = vsub.f32 %v1397, %v2085
        %v2150 = vsub.f32 %v1398, %v2086
        %v2151 = vsub.f32 %v1399, %v2087
        %v2152 = vsub.f32 %v1400, %v2088
        %v2153 = vmul.f32 %v2137, 1.442695
        %v2154 = vpow.pop %v2153
        %v2155 = vmul.f32 %v2138, 1.442695
        %v2156 = vpow.pop %v2155
        %v2157 = vmul.f32 %v2139, 1.442695
        %v2158 = vpow.pop %v2157
        %v2159 = vmul.f32 %v2140, 1.442695
        %v2160 = vpow.pop %v2159
        %v2161 = vmul.f32 %v2141, 1.442695
        %v2162 = vpow.pop %v2161
        %v2163 = vmul.f32 %v2142, 1.442695
        %v2164 = vpow.pop %v2163
        %v2165 = vmul.f32 %v2143, 1.442695
        %v2166 = vpow.pop %v2165
        %v2167 = vmul.f32 %v2144, 1.442695
        %v2168 = vpow.pop %v2167
        %v2169 = vmul.f32 %v2145, 1.442695
        %v2170 = vpow.pop %v2169
        %v2171 = vmul.f32 %v2146, 1.442695
        %v2172 = vpow.pop %v2171
        %v2173 = vmul.f32 %v2147, 1.442695
        %v2174 = vpow.pop %v2173
        %v2175 = vmul.f32 %v2148, 1.442695
        %v2176 = vpow.pop %v2175
        %v2177 = vmul.f32 %v2149, 1.442695
        %v2178 = vpow.pop %v2177
        %v2179 = vmul.f32 %v2150, 1.442695
        %v2180 = vpow.pop %v2179
        %v2181 = vmul.f32 %v2151, 1.442695
        %v2182 = vpow.pop %v2181
        %v2183 = vmul.f32 %v2152, 1.442695
        %v2184 = vpow.pop %v2183
        %v2185 = vsub.f32 %v1481, %v2073
        %v2186 = vsub.f32 %v1482, %v2074
        %v2187 = vsub.f32 %v1483, %v2075
        %v2188 = vsub.f32 %v1484, %v2076
        %v2189 = vsub.f32 %v1485, %v2077
        %v2190 = vsub.f32 %v1486, %v2078
        %v2191 = vsub.f32 %v1487, %v2079
        %v2192 = vsub.f32 %v1488, %v2080
        %v2193 = vsub.f32 %v1489, %v2081
        %v2194 = vsub.f32 %v1490, %v2082
        %v2195 = vsub.f32 %v1491, %v2083
        %v2196 = vsub.f32 %v1492, %v2084
        %v2197 = vsub.f32 %v1493, %v2085
        %v2198 = vsub.f32 %v1494, %v2086
        %v2199 = vsub.f32 %v1495, %v2087
        %v2200 = vsub.f32 %v1496, %v2088
        %v2201 = vmul.f32 %v2185, 1.442695
        %v2202 = vpow.pop %v2201
        %v2203 = vmul.f32 %v2186, 1.442695
        %v2204 = vpow.pop %v2203
        %v2205 = vmul.f32 %v2187, 1.442695
        %v2206 = vpow.pop %v2205
        %v2207 = vmul.f32 %v2188, 1.442695
        %v2208 = vpow.pop %v2207
        %v2209 = vmul.f32 %v2189, 1.442695
        %v2210 = vpow.pop %v2209
        %v2211 = vmul.f32 %v2190, 1.442695
        %v2212 = vpow.pop %v2211
        %v2213 = vmul.f32 %v2191, 1.442695
        %v2214 = vpow.pop %v2213
        %v2215 = vmul.f32 %v2192, 1.442695
        %v2216 = vpow.pop %v2215
        %v2217 = vmul.f32 %v2193, 1.442695
        %v2218 = vpow.pop %v2217
        %v2219 = vmul.f32 %v2194, 1.442695
        %v2220 = vpow.pop %v2219
        %v2221 = vmul.f32 %v2195, 1.442695
        %v2222 = vpow.pop %v2221
        %v2223 = vmul.f32 %v2196, 1.442695
        %v2224 = vpow.pop %v2223
        %v2225 = vmul.f32 %v2197, 1.442695
        %v2226 = vpow.pop %v2225
        %v2227 = vmul.f32 %v2198, 1.442695
        %v2228 = vpow.pop %v2227
        %v2229 = vmul.f32 %v2199, 1.442695
        %v2230 = vpow.pop %v2229
        %v2231 = vmul.f32 %v2200, 1.442695
        %v2232 = vpow.pop %v2231
        %v2233 = vsub.f32 %v1577, %v2073
        %v2234 = vsub.f32 %v1578, %v2074
        %v2235 = vsub.f32 %v1579, %v2075
        %v2236 = vsub.f32 %v1580, %v2076
        %v2237 = vsub.f32 %v1581, %v2077
        %v2238 = vsub.f32 %v1582, %v2078
        %v2239 = vsub.f32 %v1583, %v2079
        %v2240 = vsub.f32 %v1584, %v2080
        %v2241 = vsub.f32 %v1585, %v2081
        %v2242 = vsub.f32 %v1586, %v2082
        %v2243 = vsub.f32 %v1587, %v2083
        %v2244 = vsub.f32 %v1588, %v2084
        %v2245 = vsub.f32 %v1589, %v2085
        %v2246 = vsub.f32 %v1590, %v2086
        %v2247 = vsub.f32 %v1591, %v2087
        %v2248 = vsub.f32 %v1592, %v2088
        %v2249 = vmul.f32 %v2233, 1.442695
        %v2250 = vpow.pop %v2249
        %v2251 = vmul.f32 %v2234, 1.442695
        %v2252 = vpow.pop %v2251
        %v2253 = vmul.f32 %v2235, 1.442695
        %v2254 = vpow.pop %v2253
        %v2255 = vmul.f32 %v2236, 1.442695
        %v2256 = vpow.pop %v2255
        %v2257 = vmul.f32 %v2237, 1.442695
        %v2258 = vpow.pop %v2257
        %v2259 = vmul.f32 %v2238, 1.442695
        %v2260 = vpow.pop %v2259
        %v2261 = vmul.f32 %v2239, 1.442695
        %v2262 = vpow.pop %v2261
        %v2263 = vmul.f32 %v2240, 1.442695
        %v2264 = vpow.pop %v2263
        %v2265 = vmul.f32 %v2241, 1.442695
        %v2266 = vpow.pop %v2265
        %v2267 = vmul.f32 %v2242, 1.442695
        %v2268 = vpow.pop %v2267
        %v2269 = vmul.f32 %v2243, 1.442695
        %v2270 = vpow.pop %v2269
        %v2271 = vmul.f32 %v2244, 1.442695
        %v2272 = vpow.pop %v2271
        %v2273 = vmul.f32 %v2245, 1.442695
        %v2274 = vpow.pop %v2273
        %v2275 = vmul.f32 %v2246, 1.442695
        %v2276 = vpow.pop %v2275
        %v2277 = vmul.f32 %v2247, 1.442695
        %v2278 = vpow.pop %v2277
        %v2279 = vmul.f32 %v2248, 1.442695
        %v2280 = vpow.pop %v2279
        %v2281 = vsub.f32 %v1673, %v2073
        %v2282 = vsub.f32 %v1674, %v2074
        %v2283 = vsub.f32 %v1675, %v2075
        %v2284 = vsub.f32 %v1676, %v2076
        %v2285 = vsub.f32 %v1677, %v2077
        %v2286 = vsub.f32 %v1678, %v2078
        %v2287 = vsub.f32 %v1679, %v2079
        %v2288 = vsub.f32 %v1680, %v2080
        %v2289 = vsub.f32 %v1681, %v2081
        %v2290 = vsub.f32 %v1682, %v2082
        %v2291 = vsub.f32 %v1683, %v2083
        %v2292 = vsub.f32 %v1684, %v2084
        %v2293 = vsub.f32 %v1685, %v2085
        %v2294 = vsub.f32 %v1686, %v2086
        %v2295 = vsub.f32 %v1687, %v2087
        %v2296 = vsub.f32 %v1688, %v2088
        %v2297 = vmul.f32 %v2281, 1.442695
        %v2298 = vpow.pop %v2297
        %v2299 = vmul.f32 %v2282, 1.442695
        %v2300 = vpow.pop %v2299
        %v2301 = vmul.f32 %v2283, 1.442695
        %v2302 = vpow.pop %v2301
        %v2303 = vmul.f32 %v2284, 1.442695
        %v2304 = vpow.pop %v2303
        %v2305 = vmul.f32 %v2285, 1.442695
        %v2306 = vpow.pop %v2305
        %v2307 = vmul.f32 %v2286, 1.442695
        %v2308 = vpow.pop %v2307
        %v2309 = vmul.f32 %v2287, 1.442695
        %v2310 = vpow.pop %v2309
        %v2311 = vmul.f32 %v2288, 1.442695
        %v2312 = vpow.pop %v2311
        %v2313 = vmul.f32 %v2289, 1.442695
        %v2314 = vpow.pop %v2313
        %v2315 = vmul.f32 %v2290, 1.442695
        %v2316 = vpow.pop %v2315
        %v2317 = vmul.f32 %v2291, 1.442695
        %v2318 = vpow.pop %v2317
        %v2319 = vmul.f32 %v2292, 1.442695
        %v2320 = vpow.pop %v2319
        %v2321 = vmul.f32 %v2293, 1.442695
        %v2322 = vpow.pop %v2321
        %v2323 = vmul.f32 %v2294, 1.442695
        %v2324 = vpow.pop %v2323
        %v2325 = vmul.f32 %v2295, 1.442695
        %v2326 = vpow.pop %v2325
        %v2327 = vmul.f32 %v2296, 1.442695
        %v2328 = vpow.pop %v2327
        %v2329 = vsub.f32 %v1769, %v2073
        %v2330 = vsub.f32 %v1770, %v2074
        %v2331 = vsub.f32 %v1771, %v2075
        %v2332 = vsub.f32 %v1772, %v2076
        %v2333 = vsub.f32 %v1773, %v2077
        %v2334 = vsub.f32 %v1774, %v2078
        %v2335 = vsub.f32 %v1775, %v2079
        %v2336 = vsub.f32 %v1776, %v2080
        %v2337 = vsub.f32 %v1777, %v2081
        %v2338 = vsub.f32 %v1778, %v2082
        %v2339 = vsub.f32 %v1779, %v2083
        %v2340 = vsub.f32 %v1780, %v2084
        %v2341 = vsub.f32 %v1781, %v2085
        %v2342 = vsub.f32 %v1782, %v2086
        %v2343 = vsub.f32 %v1783, %v2087
        %v2344 = vsub.f32 %v1784, %v2088
        %v2345 = vmul.f32 %v2329, 1.442695
        %v2346 = vpow.pop %v2345
        %v2347 = vmul.f32 %v2330, 1.442695
        %v2348 = vpow.pop %v2347
        %v2349 = vmul.f32 %v2331, 1.442695
        %v2350 = vpow.pop %v2349
        %v2351 = vmul.f32 %v2332, 1.442695
        %v2352 = vpow.pop %v2351
        %v2353 = vmul.f32 %v2333, 1.442695
        %v2354 = vpow.pop %v2353
        %v2355 = vmul.f32 %v2334, 1.442695
        %v2356 = vpow.pop %v2355
        %v2357 = vmul.f32 %v2335, 1.442695
        %v2358 = vpow.pop %v2357
        %v2359 = vmul.f32 %v2336, 1.442695
        %v2360 = vpow.pop %v2359
        %v2361 = vmul.f32 %v2337, 1.442695
        %v2362 = vpow.pop %v2361
        %v2363 = vmul.f32 %v2338, 1.442695
        %v2364 = vpow.pop %v2363
        %v2365 = vmul.f32 %v2339, 1.442695
        %v2366 = vpow.pop %v2365
        %v2367 = vmul.f32 %v2340, 1.442695
        %v2368 = vpow.pop %v2367
        %v2369 = vmul.f32 %v2341, 1.442695
        %v2370 = vpow.pop %v2369
        %v2371 = vmul.f32 %v2342, 1.442695
        %v2372 = vpow.pop %v2371
        %v2373 = vmul.f32 %v2343, 1.442695
        %v2374 = vpow.pop %v2373
        %v2375 = vmul.f32 %v2344, 1.442695
        %v2376 = vpow.pop %v2375
        %v2377 = vsub.f32 %v1865, %v2073
        %v2378 = vsub.f32 %v1866, %v2074
        %v2379 = vsub.f32 %v1867, %v2075
        %v2380 = vsub.f32 %v1868, %v2076
        %v2381 = vsub.f32 %v1869, %v2077
        %v2382 = vsub.f32 %v1870, %v2078
        %v2383 = vsub.f32 %v1871, %v2079
        %v2384 = vsub.f32 %v1872, %v2080
        %v2385 = vsub.f32 %v1873, %v2081
        %v2386 = vsub.f32 %v1874, %v2082
        %v2387 = vsub.f32 %v1875, %v2083
        %v2388 = vsub.f32 %v1876, %v2084
        %v2389 = vsub.f32 %v1877, %v2085
        %v2390 = vsub.f32 %v1878, %v2086
        %v2391 = vsub.f32 %v1879, %v2087
        %v2392 = vsub.f32 %v1880, %v2088
        %v2393 = vmul.f32 %v2377, 1.442695
        %v2394 = vpow.pop %v2393
        %v2395 = vmul.f32 %v2378, 1.442695
        %v2396 = vpow.pop %v2395
        %v2397 = vmul.f32 %v2379, 1.442695
        %v2398 = vpow.pop %v2397
        %v2399 = vmul.f32 %v2380, 1.442695
        %v2400 = vpow.pop %v2399
        %v2401 = vmul.f32 %v2381, 1.442695
        %v2402 = vpow.pop %v2401
        %v2403 = vmul.f32 %v2382, 1.442695
        %v2404 = vpow.pop %v2403
        %v2405 = vmul.f32 %v2383, 1.442695
        %v2406 = vpow.pop %v2405
        %v2407 = vmul.f32 %v2384, 1.442695
        %v2408 = vpow.pop %v2407
        %v2409 = vmul.f32 %v2385, 1.442695
        %v2410 = vpow.pop %v2409
        %v2411 = vmul.f32 %v2386, 1.442695
        %v2412 = vpow.pop %v2411
        %v2413 = vmul.f32 %v2387, 1.442695
        %v2414 = vpow.pop %v2413
        %v2415 = vmul.f32 %v2388, 1.442695
        %v2416 = vpow.pop %v2415
        %v2417 = vmul.f32 %v2389, 1.442695
        %v2418 = vpow.pop %v2417
        %v2419 = vmul.f32 %v2390, 1.442695
        %v2420 = vpow.pop %v2419
        %v2421 = vmul.f32 %v2391, 1.442695
        %v2422 = vpow.pop %v2421
        %v2423 = vmul.f32 %v2392, 1.442695
        %v2424 = vpow.pop %v2423
        %v2425 = vsub.f32 %v1961, %v2073
        %v2426 = vsub.f32 %v1962, %v2074
        %v2427 = vsub.f32 %v1963, %v2075
        %v2428 = vsub.f32 %v1964, %v2076
        %v2429 = vsub.f32 %v1965, %v2077
        %v2430 = vsub.f32 %v1966, %v2078
        %v2431 = vsub.f32 %v1967, %v2079
        %v2432 = vsub.f32 %v1968, %v2080
        %v2433 = vsub.f32 %v1969, %v2081
        %v2434 = vsub.f32 %v1970, %v2082
        %v2435 = vsub.f32 %v1971, %v2083
        %v2436 = vsub.f32 %v1972, %v2084
        %v2437 = vsub.f32 %v1973, %v2085
        %v2438 = vsub.f32 %v1974, %v2086
        %v2439 = vsub.f32 %v1975, %v2087
        %v2440 = vsub.f32 %v1976, %v2088
        %v2441 = vmul.f32 %v2425, 1.442695
        %v2442 = vpow.pop %v2441
        %v2443 = vmul.f32 %v2426, 1.442695
        %v2444 = vpow.pop %v2443
        %v2445 = vmul.f32 %v2427, 1.442695
        %v2446 = vpow.pop %v2445
        %v2447 = vmul.f32 %v2428, 1.442695
        %v2448 = vpow.pop %v2447
        %v2449 = vmul.f32 %v2429, 1.442695
        %v2450 = vpow.pop %v2449
        %v2451 = vmul.f32 %v2430, 1.442695
        %v2452 = vpow.pop %v2451
        %v2453 = vmul.f32 %v2431, 1.442695
        %v2454 = vpow.pop %v2453
        %v2455 = vmul.f32 %v2432, 1.442695
        %v2456 = vpow.pop %v2455
        %v2457 = vmul.f32 %v2433, 1.442695
        %v2458 = vpow.pop %v2457
        %v2459 = vmul.f32 %v2434, 1.442695
        %v2460 = vpow.pop %v2459
        %v2461 = vmul.f32 %v2435, 1.442695
        %v2462 = vpow.pop %v2461
        %v2463 = vmul.f32 %v2436, 1.442695
        %v2464 = vpow.pop %v2463
        %v2465 = vmul.f32 %v2437, 1.442695
        %v2466 = vpow.pop %v2465
        %v2467 = vmul.f32 %v2438, 1.442695
        %v2468 = vpow.pop %v2467
        %v2469 = vmul.f32 %v2439, 1.442695
        %v2470 = vpow.pop %v2469
        %v2471 = vmul.f32 %v2440, 1.442695
        %v2472 = vpow.pop %v2471
        %v2473 = vadd.f32 %v2106, %v2154
        %v2474 = vadd.f32 %v2108, %v2156
        %v2475 = vadd.f32 %v2110, %v2158
        %v2476 = vadd.f32 %v2112, %v2160
        %v2477 = vadd.f32 %v2114, %v2162
        %v2478 = vadd.f32 %v2116, %v2164
        %v2479 = vadd.f32 %v2118, %v2166
        %v2480 = vadd.f32 %v2120, %v2168
        %v2481 = vadd.f32 %v2122, %v2170
        %v2482 = vadd.f32 %v2124, %v2172
        %v2483 = vadd.f32 %v2126, %v2174
        %v2484 = vadd.f32 %v2128, %v2176
        %v2485 = vadd.f32 %v2130, %v2178
        %v2486 = vadd.f32 %v2132, %v2180
        %v2487 = vadd.f32 %v2134, %v2182
        %v2488 = vadd.f32 %v2136, %v2184
        %v2489 = vadd.f32 %v2473, %v2202
        %v2490 = vadd.f32 %v2474, %v2204
        %v2491 = vadd.f32 %v2475, %v2206
        %v2492 = vadd.f32 %v2476, %v2208
        %v2493 = vadd.f32 %v2477, %v2210
        %v2494 = vadd.f32 %v2478, %v2212
        %v2495 = vadd.f32 %v2479, %v2214
        %v2496 = vadd.f32 %v2480, %v2216
        %v2497 = vadd.f32 %v2481, %v2218
        %v2498 = vadd.f32 %v2482, %v2220
        %v2499 = vadd.f32 %v2483, %v2222
        %v2500 = vadd.f32 %v2484, %v2224
        %v2501 = vadd.f32 %v2485, %v2226
        %v2502 = vadd.f32 %v2486, %v2228
        %v2503 = vadd.f32 %v2487, %v2230
        %v2504 = vadd.f32 %v2488, %v2232
        %v2505 = vadd.f32 %v2489, %v2250
        %v2506 = vadd.f32 %v2490, %v2252
        %v2507 = vadd.f32 %v2491, %v2254
        %v2508 = vadd.f32 %v2492, %v2256
        %v2509 = vadd.f32 %v2493, %v2258
        %v2510 = vadd.f32 %v2494, %v2260
        %v2511 = vadd.f32 %v2495, %v2262
        %v2512 = vadd.f32 %v2496, %v2264
        %v2513 = vadd.f32 %v2497, %v2266
        %v2514 = vadd.f32 %v2498, %v2268
        %v2515 = vadd.f32 %v2499, %v2270
        %v2516 = vadd.f32 %v2500, %v2272
        %v2517 = vadd.f32 %v2501, %v2274
        %v2518 = vadd.f32 %v2502, %v2276
        %v2519 = vadd.f32 %v2503, %v2278
        %v2520 = vadd.f32 %v2504, %v2280
        %v2521 = vadd.f32 %v2505, %v2298
        %v2522 = vadd.f32 %v2506, %v2300
        %v2523 = vadd.f32 %v2507, %v2302
        %v2524 = vadd.f32 %v2508, %v2304
        %v2525 = vadd.f32 %v2509, %v2306
        %v2526 = vadd.f32 %v2510, %v2308
        %v2527 = vadd.f32 %v2511, %v2310
        %v2528 = vadd.f32 %v2512, %v2312
        %v2529 = vadd.f32 %v2513, %v2314
        %v2530 = vadd.f32 %v2514, %v2316
        %v2531 = vadd.f32 %v2515, %v2318
        %v2532 = vadd.f32 %v2516, %v2320
        %v2533 = vadd.f32 %v2517, %v2322
        %v2534 = vadd.f32 %v2518, %v2324
        %v2535 = vadd.f32 %v2519, %v2326
        %v2536 = vadd.f32 %v2520, %v2328
        %v2537 = vadd.f32 %v2521, %v2346
        %v2538 = vadd.f32 %v2522, %v2348
        %v2539 = vadd.f32 %v2523, %v2350
        %v2540 = vadd.f32 %v2524, %v2352
        %v2541 = vadd.f32 %v2525, %v2354
        %v2542 = vadd.f32 %v2526, %v2356
        %v2543 = vadd.f32 %v2527, %v2358
        %v2544 = vadd.f32 %v2528, %v2360
        %v2545 = vadd.f32 %v2529, %v2362
        %v2546 = vadd.f32 %v2530, %v2364
        %v2547 = vadd.f32 %v2531, %v2366
        %v2548 = vadd.f32 %v2532, %v2368
        %v2549 = vadd.f32 %v2533, %v2370
        %v2550 = vadd.f32 %v2534, %v2372
        %v2551 = vadd.f32 %v2535, %v2374
        %v2552 = vadd.f32 %v2536, %v2376
        %v2553 = vadd.f32 %v2537, %v2394
        %v2554 = vadd.f32 %v2538, %v2396
        %v2555 = vadd.f32 %v2539, %v2398
        %v2556 = vadd.f32 %v2540, %v2400
        %v2557 = vadd.f32 %v2541, %v2402
        %v2558 = vadd.f32 %v2542, %v2404
        %v2559 = vadd.f32 %v2543, %v2406
        %v2560 = vadd.f32 %v2544, %v2408
        %v2561 = vadd.f32 %v2545, %v2410
        %v2562 = vadd.f32 %v2546, %v2412
        %v2563 = vadd.f32 %v2547, %v2414
        %v2564 = vadd.f32 %v2548, %v2416
        %v2565 = vadd.f32 %v2549, %v2418
        %v2566 = vadd.f32 %v2550, %v2420
        %v2567 = vadd.f32 %v2551, %v2422
        %v2568 = vadd.f32 %v2552, %v2424
        %v2569 = vadd.f32 %v2553, %v2442
        %v2570 = vadd.f32 %v2554, %v2444
        %v2571 = vadd.f32 %v2555, %v2446
        %v2572 = vadd.f32 %v2556, %v2448
        %v2573 = vadd.f32 %v2557, %v2450
        %v2574 = vadd.f32 %v2558, %v2452
        %v2575 = vadd.f32 %v2559, %v2454
        %v2576 = vadd.f32 %v2560, %v2456
        %v2577 = vadd.f32 %v2561, %v2458
        %v2578 = vadd.f32 %v2562, %v2460
        %v2579 = vadd.f32 %v2563, %v2462
        %v2580 = vadd.f32 %v2564, %v2464
        %v2581 = vadd.f32 %v2565, %v2466
        %v2582 = vadd.f32 %v2566, %v2468
        %v2583 = vadd.f32 %v2567, %v2470
        %v2584 = vadd.f32 %v2568, %v2472
        %v2585 = vrcp.pop %v2569
        %v2586 = vmul.f32 %v2569, %v2585
        %v2587 = vsub.f32 1.0, %v2586
        %v2588 = vmul.f32 %v2585, %v2587
        %v2589 = vadd.f32 %v2585, %v2588
        %vm2590 = vweird.f32 %v2569
        %vm2591 = vweird.f32 %v2585
        %vm2592 = vmor %vm2590, %vm2591
        %v2593 = vsel %vm2592, %v2585, %v2589
        %v2594 = vand.u32 2147483647, %v2569
        %vm2595 = vcmp.eq.f32.partialorder %v2594, 8.507059e+37
        %v2596 = vand.u32 %v2569, 2147483648
        %v2597 = vor.u32 1.1754944e-38, %v2596
        %v2598 = vsel %vm2595, %v2597, %v2593
        %v2599 = vmul.f32 1.0, %v2598
        %v2600 = vrcp.pop %v2570
        %v2601 = vmul.f32 %v2570, %v2600
        %v2602 = vsub.f32 1.0, %v2601
        %v2603 = vmul.f32 %v2600, %v2602
        %v2604 = vadd.f32 %v2600, %v2603
        %vm2605 = vweird.f32 %v2570
        %vm2606 = vweird.f32 %v2600
        %vm2607 = vmor %vm2605, %vm2606
        %v2608 = vsel %vm2607, %v2600, %v2604
        %v2609 = vand.u32 2147483647, %v2570
        %vm2610 = vcmp.eq.f32.partialorder %v2609, 8.507059e+37
        %v2611 = vand.u32 %v2570, 2147483648
        %v2612 = vor.u32 1.1754944e-38, %v2611
        %v2613 = vsel %vm2610, %v2612, %v2608
        %v2614 = vmul.f32 1.0, %v2613
        %v2615 = vrcp.pop %v2571
        %v2616 = vmul.f32 %v2571, %v2615
        %v2617 = vsub.f32 1.0, %v2616
        %v2618 = vmul.f32 %v2615, %v2617
        %v2619 = vadd.f32 %v2615, %v2618
        %vm2620 = vweird.f32 %v2571
        %vm2621 = vweird.f32 %v2615
        %vm2622 = vmor %vm2620, %vm2621
        %v2623 = vsel %vm2622, %v2615, %v2619
        %v2624 = vand.u32 2147483647, %v2571
        %vm2625 = vcmp.eq.f32.partialorder %v2624, 8.507059e+37
        %v2626 = vand.u32 %v2571, 2147483648
        %v2627 = vor.u32 1.1754944e-38, %v2626
        %v2628 = vsel %vm2625, %v2627, %v2623
        %v2629 = vmul.f32 1.0, %v2628
        %v2630 = vrcp.pop %v2572
        %v2631 = vmul.f32 %v2572, %v2630
        %v2632 = vsub.f32 1.0, %v2631
        %v2633 = vmul.f32 %v2630, %v2632
        %v2634 = vadd.f32 %v2630, %v2633
        %vm2635 = vweird.f32 %v2572
        %vm2636 = vweird.f32 %v2630
        %vm2637 = vmor %vm2635, %vm2636
        %v2638 = vsel %vm2637, %v2630, %v2634
        %v2639 = vand.u32 2147483647, %v2572
        %vm2640 = vcmp.eq.f32.partialorder %v2639, 8.507059e+37
        %v2641 = vand.u32 %v2572, 2147483648
        %v2642 = vor.u32 1.1754944e-38, %v2641
        %v2643 = vsel %vm2640, %v2642, %v2638
        %v2644 = vmul.f32 1.0, %v2643
        %v2645 = vrcp.pop %v2573
        %v2646 = vmul.f32 %v2573, %v2645
        %v2647 = vsub.f32 1.0, %v2646
        %v2648 = vmul.f32 %v2645, %v2647
        %v2649 = vadd.f32 %v2645, %v2648
        %vm2650 = vweird.f32 %v2573
        %vm2651 = vweird.f32 %v2645
        %vm2652 = vmor %vm2650, %vm2651
        %v2653 = vsel %vm2652, %v2645, %v2649
        %v2654 = vand.u32 2147483647, %v2573
        %vm2655 = vcmp.eq.f32.partialorder %v2654, 8.507059e+37
        %v2656 = vand.u32 %v2573, 2147483648
        %v2657 = vor.u32 1.1754944e-38, %v2656
        %v2658 = vsel %vm2655, %v2657, %v2653
        %v2659 = vmul.f32 1.0, %v2658
        %v2660 = vrcp.pop %v2574
        %v2661 = vmul.f32 %v2574, %v2660
        %v2662 = vsub.f32 1.0, %v2661
        %v2663 = vmul.f32 %v2660, %v2662
        %v2664 = vadd.f32 %v2660, %v2663
        %vm2665 = vweird.f32 %v2574
        %vm2666 = vweird.f32 %v2660
        %vm2667 = vmor %vm2665, %vm2666
        %v2668 = vsel %vm2667, %v2660, %v2664
        %v2669 = vand.u32 2147483647, %v2574
        %vm2670 = vcmp.eq.f32.partialorder %v2669, 8.507059e+37
        %v2671 = vand.u32 %v2574, 2147483648
        %v2672 = vor.u32 1.1754944e-38, %v2671
        %v2673 = vsel %vm2670, %v2672, %v2668
        %v2674 = vmul.f32 1.0, %v2673
        %v2675 = vrcp.pop %v2575
        %v2676 = vmul.f32 %v2575, %v2675
        %v2677 = vsub.f32 1.0, %v2676
        %v2678 = vmul.f32 %v2675, %v2677
        %v2679 = vadd.f32 %v2675, %v2678
        %vm2680 = vweird.f32 %v2575
        %vm2681 = vweird.f32 %v2675
        %vm2682 = vmor %vm2680, %vm2681
        %v2683 = vsel %vm2682, %v2675, %v2679
        %v2684 = vand.u32 2147483647, %v2575
        %vm2685 = vcmp.eq.f32.partialorder %v2684, 8.507059e+37
        %v2686 = vand.u32 %v2575, 2147483648
        %v2687 = vor.u32 1.1754944e-38, %v2686
        %v2688 = vsel %vm2685, %v2687, %v2683
        %v2689 = vmul.f32 1.0, %v2688
        %v2690 = vrcp.pop %v2576
        %v2691 = vmul.f32 %v2576, %v2690
        %v2692 = vsub.f32 1.0, %v2691
        %v2693 = vmul.f32 %v2690, %v2692
        %v2694 = vadd.f32 %v2690, %v2693
        %vm2695 = vweird.f32 %v2576
        %vm2696 = vweird.f32 %v2690
        %vm2697 = vmor %vm2695, %vm2696
        %v2698 = vsel %vm2697, %v2690, %v2694
        %v2699 = vand.u32 2147483647, %v2576
        %vm2700 = vcmp.eq.f32.partialorder %v2699, 8.507059e+37
        %v2701 = vand.u32 %v2576, 2147483648
        %v2702 = vor.u32 1.1754944e-38, %v2701
        %v2703 = vsel %vm2700, %v2702, %v2698
        %v2704 = vmul.f32 1.0, %v2703
        %v2705 = vrcp.pop %v2577
        %v2706 = vmul.f32 %v2577, %v2705
        %v2707 = vsub.f32 1.0, %v2706
        %v2708 = vmul.f32 %v2705, %v2707
        %v2709 = vadd.f32 %v2705, %v2708
        %vm2710 = vweird.f32 %v2577
        %vm2711 = vweird.f32 %v2705
        %vm2712 = vmor %vm2710, %vm2711
        %v2713 = vsel %vm2712, %v2705, %v2709
        %v2714 = vand.u32 2147483647, %v2577
        %vm2715 = vcmp.eq.f32.partialorder %v2714, 8.507059e+37
        %v2716 = vand.u32 %v2577, 2147483648
        %v2717 = vor.u32 1.1754944e-38, %v2716
        %v2718 = vsel %vm2715, %v2717, %v2713
        %v2719 = vmul.f32 1.0, %v2718
        %v2720 = vrcp.pop %v2578
        %v2721 = vmul.f32 %v2578, %v2720
        %v2722 = vsub.f32 1.0, %v2721
        %v2723 = vmul.f32 %v2720, %v2722
        %v2724 = vadd.f32 %v2720, %v2723
        %vm2725 = vweird.f32 %v2578
        %vm2726 = vweird.f32 %v2720
        %vm2727 = vmor %vm2725, %vm2726
        %v2728 = vsel %vm2727, %v2720, %v2724
        %v2729 = vand.u32 2147483647, %v2578
        %vm2730 = vcmp.eq.f32.partialorder %v2729, 8.507059e+37
        %v2731 = vand.u32 %v2578, 2147483648
        %v2732 = vor.u32 1.1754944e-38, %v2731
        %v2733 = vsel %vm2730, %v2732, %v2728
        %v2734 = vmul.f32 1.0, %v2733
        %v2735 = vrcp.pop %v2579
        %v2736 = vmul.f32 %v2579, %v2735
        %v2737 = vsub.f32 1.0, %v2736
        %v2738 = vmul.f32 %v2735, %v2737
        %v2739 = vadd.f32 %v2735, %v2738
        %vm2740 = vweird.f32 %v2579
        %vm2741 = vweird.f32 %v2735
        %vm2742 = vmor %vm2740, %vm2741
        %v2743 = vsel %vm2742, %v2735, %v2739
        %v2744 = vand.u32 2147483647, %v2579
        %vm2745 = vcmp.eq.f32.partialorder %v2744, 8.507059e+37
        %v2746 = vand.u32 %v2579, 2147483648
        %v2747 = vor.u32 1.1754944e-38, %v2746
        %v2748 = vsel %vm2745, %v2747, %v2743
        %v2749 = vmul.f32 1.0, %v2748
        %v2750 = vrcp.pop %v2580
        %v2751 = vmul.f32 %v2580, %v2750
        %v2752 = vsub.f32 1.0, %v2751
        %v2753 = vmul.f32 %v2750, %v2752
        %v2754 = vadd.f32 %v2750, %v2753
        %vm2755 = vweird.f32 %v2580
        %vm2756 = vweird.f32 %v2750
        %vm2757 = vmor %vm2755, %vm2756
        %v2758 = vsel %vm2757, %v2750, %v2754
        %v2759 = vand.u32 2147483647, %v2580
        %vm2760 = vcmp.eq.f32.partialorder %v2759, 8.507059e+37
        %v2761 = vand.u32 %v2580, 2147483648
        %v2762 = vor.u32 1.1754944e-38, %v2761
        %v2763 = vsel %vm2760, %v2762, %v2758
        %v2764 = vmul.f32 1.0, %v2763
        %v2765 = vrcp.pop %v2581
        %v2766 = vmul.f32 %v2581, %v2765
        %v2767 = vsub.f32 1.0, %v2766
        %v2768 = vmul.f32 %v2765, %v2767
        %v2769 = vadd.f32 %v2765, %v2768
        %vm2770 = vweird.f32 %v2581
        %vm2771 = vweird.f32 %v2765
        %vm2772 = vmor %vm2770, %vm2771
        %v2773 = vsel %vm2772, %v2765, %v2769
        %v2774 = vand.u32 2147483647, %v2581
        %vm2775 = vcmp.eq.f32.partialorder %v2774, 8.507059e+37
        %v2776 = vand.u32 %v2581, 2147483648
        %v2777 = vor.u32 1.1754944e-38, %v2776
        %v2778 = vsel %vm2775, %v2777, %v2773
        %v2779 = vmul.f32 1.0, %v2778
        %v2780 = vrcp.pop %v2582
        %v2781 = vmul.f32 %v2582, %v2780
        %v2782 = vsub.f32 1.0, %v2781
        %v2783 = vmul.f32 %v2780, %v2782
        %v2784 = vadd.f32 %v2780, %v2783
        %vm2785 = vweird.f32 %v2582
        %vm2786 = vweird.f32 %v2780
        %vm2787 = vmor %vm2785, %vm2786
        %v2788 = vsel %vm2787, %v2780, %v2784
        %v2789 = vand.u32 2147483647, %v2582
        %vm2790 = vcmp.eq.f32.partialorder %v2789, 8.507059e+37
        %v2791 = vand.u32 %v2582, 2147483648
        %v2792 = vor.u32 1.1754944e-38, %v2791
        %v2793 = vsel %vm2790, %v2792, %v2788
        %v2794 = vmul.f32 1.0, %v2793
        %v2795 = vrcp.pop %v2583
        %v2796 = vmul.f32 %v2583, %v2795
        %v2797 = vsub.f32 1.0, %v2796
        %v2798 = vmul.f32 %v2795, %v2797
        %v2799 = vadd.f32 %v2795, %v2798
        %vm2800 = vweird.f32 %v2583
        %vm2801 = vweird.f32 %v2795
        %vm2802 = vmor %vm2800, %vm2801
        %v2803 = vsel %vm2802, %v2795, %v2799
        %v2804 = vand.u32 2147483647, %v2583
        %vm2805 = vcmp.eq.f32.partialorder %v2804, 8.507059e+37
        %v2806 = vand.u32 %v2583, 2147483648
        %v2807 = vor.u32 1.1754944e-38, %v2806
        %v2808 = vsel %vm2805, %v2807, %v2803
        %v2809 = vmul.f32 1.0, %v2808
        %v2810 = vrcp.pop %v2584
        %v2811 = vmul.f32 %v2584, %v2810
        %v2812 = vsub.f32 1.0, %v2811
        %v2813 = vmul.f32 %v2810, %v2812
        %v2814 = vadd.f32 %v2810, %v2813
        %vm2815 = vweird.f32 %v2584
        %vm2816 = vweird.f32 %v2810
        %vm2817 = vmor %vm2815, %vm2816
        %v2818 = vsel %vm2817, %v2810, %v2814
        %v2819 = vand.u32 2147483647, %v2584
        %vm2820 = vcmp.eq.f32.partialorder %v2819, 8.507059e+37
        %v2821 = vand.u32 %v2584, 2147483648
        %v2822 = vor.u32 1.1754944e-38, %v2821
        %v2823 = vsel %vm2820, %v2822, %v2818
        %v2824 = vmul.f32 1.0, %v2823
        %v2825 = vmul.f32 %v2106, %v2599
        %v2826 = vmul.f32 %v2108, %v2614
        %v2827 = vmul.f32 %v2110, %v2629
        %v2828 = vmul.f32 %v2112, %v2644
        %v2829 = vmul.f32 %v2114, %v2659
        %v2830 = vmul.f32 %v2116, %v2674
        %v2831 = vmul.f32 %v2118, %v2689
        %v2832 = vmul.f32 %v2120, %v2704
        %v2833 = vmul.f32 %v2122, %v2719
        %v2834 = vmul.f32 %v2124, %v2734
        %v2835 = vmul.f32 %v2126, %v2749
        %v2836 = vmul.f32 %v2128, %v2764
        %v2837 = vmul.f32 %v2130, %v2779
        %v2838 = vmul.f32 %v2132, %v2794
        %v2839 = vmul.f32 %v2134, %v2809
        %v2840 = vmul.f32 %v2136, %v2824
        %v2841 = vmul.f32 %v2154, %v2599
        %v2842 = vmul.f32 %v2156, %v2614
        %v2843 = vmul.f32 %v2158, %v2629
        %v2844 = vmul.f32 %v2160, %v2644
        %v2845 = vmul.f32 %v2162, %v2659
        %v2846 = vmul.f32 %v2164, %v2674
        %v2847 = vmul.f32 %v2166, %v2689
        %v2848 = vmul.f32 %v2168, %v2704
        %v2849 = vmul.f32 %v2170, %v2719
        %v2850 = vmul.f32 %v2172, %v2734
        %v2851 = vmul.f32 %v2174, %v2749
        %v2852 = vmul.f32 %v2176, %v2764
        %v2853 = vmul.f32 %v2178, %v2779
        %v2854 = vmul.f32 %v2180, %v2794
        %v2855 = vmul.f32 %v2182, %v2809
        %v2856 = vmul.f32 %v2184, %v2824
        %v2857 = vmul.f32 %v2202, %v2599
        %v2858 = vmul.f32 %v2204, %v2614
        %v2859 = vmul.f32 %v2206, %v2629
        %v2860 = vmul.f32 %v2208, %v2644
        %v2861 = vmul.f32 %v2210, %v2659
        %v2862 = vmul.f32 %v2212, %v2674
        %v2863 = vmul.f32 %v2214, %v2689
        %v2864 = vmul.f32 %v2216, %v2704
        %v2865 = vmul.f32 %v2218, %v2719
        %v2866 = vmul.f32 %v2220, %v2734
        %v2867 = vmul.f32 %v2222, %v2749
        %v2868 = vmul.f32 %v2224, %v2764
        %v2869 = vmul.f32 %v2226, %v2779
        %v2870 = vmul.f32 %v2228, %v2794
        %v2871 = vmul.f32 %v2230, %v2809
        %v2872 = vmul.f32 %v2232, %v2824
        %v2873 = vmul.f32 %v2250, %v2599
        %v2874 = vmul.f32 %v2252, %v2614
        %v2875 = vmul.f32 %v2254, %v2629
        %v2876 = vmul.f32 %v2256, %v2644
        %v2877 = vmul.f32 %v2258, %v2659
        %v2878 = vmul.f32 %v2260, %v2674
        %v2879 = vmul.f32 %v2262, %v2689
        %v2880 = vmul.f32 %v2264, %v2704
        %v2881 = vmul.f32 %v2266, %v2719
        %v2882 = vmul.f32 %v2268, %v2734
        %v2883 = vmul.f32 %v2270, %v2749
        %v2884 = vmul.f32 %v2272, %v2764
        %v2885 = vmul.f32 %v2274, %v2779
        %v2886 = vmul.f32 %v2276, %v2794
        %v2887 = vmul.f32 %v2278, %v2809
        %v2888 = vmul.f32 %v2280, %v2824
        %v2889 = vmul.f32 %v2298, %v2599
        %v2890 = vmul.f32 %v2300, %v2614
        %v2891 = vmul.f32 %v2302, %v2629
        %v2892 = vmul.f32 %v2304, %v2644
        %v2893 = vmul.f32 %v2306, %v2659
        %v2894 = vmul.f32 %v2308, %v2674
        %v2895 = vmul.f32 %v2310, %v2689
        %v2896 = vmul.f32 %v2312, %v2704
        %v2897 = vmul.f32 %v2314, %v2719
        %v2898 = vmul.f32 %v2316, %v2734
        %v2899 = vmul.f32 %v2318, %v2749
        %v2900 = vmul.f32 %v2320, %v2764
        %v2901 = vmul.f32 %v2322, %v2779
        %v2902 = vmul.f32 %v2324, %v2794
        %v2903 = vmul.f32 %v2326, %v2809
        %v2904 = vmul.f32 %v2328, %v2824
        %v2905 = vmul.f32 %v2346, %v2599
        %v2906 = vmul.f32 %v2348, %v2614
        %v2907 = vmul.f32 %v2350, %v2629
        %v2908 = vmul.f32 %v2352, %v2644
        %v2909 = vmul.f32 %v2354, %v2659
        %v2910 = vmul.f32 %v2356, %v2674
        %v2911 = vmul.f32 %v2358, %v2689
        %v2912 = vmul.f32 %v2360, %v2704
        %v2913 = vmul.f32 %v2362, %v2719
        %v2914 = vmul.f32 %v2364, %v2734
        %v2915 = vmul.f32 %v2366, %v2749
        %v2916 = vmul.f32 %v2368, %v2764
        %v2917 = vmul.f32 %v2370, %v2779
        %v2918 = vmul.f32 %v2372, %v2794
        %v2919 = vmul.f32 %v2374, %v2809
        %v2920 = vmul.f32 %v2376, %v2824
        %v2921 = vmul.f32 %v2394, %v2599
        %v2922 = vmul.f32 %v2396, %v2614
        %v2923 = vmul.f32 %v2398, %v2629
        %v2924 = vmul.f32 %v2400, %v2644
        %v2925 = vmul.f32 %v2402, %v2659
        %v2926 = vmul.f32 %v2404, %v2674
        %v2927 = vmul.f32 %v2406, %v2689
        %v2928 = vmul.f32 %v2408, %v2704
        %v2929 = vmul.f32 %v2410, %v2719
        %v2930 = vmul.f32 %v2412, %v2734
        %v2931 = vmul.f32 %v2414, %v2749
        %v2932 = vmul.f32 %v2416, %v2764
        %v2933 = vmul.f32 %v2418, %v2779
        %v2934 = vmul.f32 %v2420, %v2794
        %v2935 = vmul.f32 %v2422, %v2809
        %v2936 = vmul.f32 %v2424, %v2824
        %v2937 = vmul.f32 %v2442, %v2599
        %v2938 = vmul.f32 %v2444, %v2614
        %v2939 = vmul.f32 %v2446, %v2629
        %v2940 = vmul.f32 %v2448, %v2644
        %v2941 = vmul.f32 %v2450, %v2659
        %v2942 = vmul.f32 %v2452, %v2674
        %v2943 = vmul.f32 %v2454, %v2689
        %v2944 = vmul.f32 %v2456, %v2704
        %v2945 = vmul.f32 %v2458, %v2719
        %v2946 = vmul.f32 %v2460, %v2734
        %v2947 = vmul.f32 %v2462, %v2749
        %v2948 = vmul.f32 %v2464, %v2764
        %v2949 = vmul.f32 %v2466, %v2779
        %v2950 = vmul.f32 %v2468, %v2794
        %v2951 = vmul.f32 %v2470, %v2809
        %v2952 = vmul.f32 %v2472, %v2824
        %v2953 = vmul.f32 %v1209, %v2825
        %v2954 = vmul.f32 %v1210, %v2826
        %v2955 = vmul.f32 %v1211, %v2827
        %v2956 = vmul.f32 %v1212, %v2828
        %v2957 = vmul.f32 %v1213, %v2829
        %v2958 = vmul.f32 %v1214, %v2830
        %v2959 = vmul.f32 %v1215, %v2831
        %v2960 = vmul.f32 %v1216, %v2832
        %v2961 = vmul.f32 %v1217, %v2833
        %v2962 = vmul.f32 %v1218, %v2834
        %v2963 = vmul.f32 %v1219, %v2835
        %v2964 = vmul.f32 %v1220, %v2836
        %v2965 = vmul.f32 %v1221, %v2837
        %v2966 = vmul.f32 %v1222, %v2838
        %v2967 = vmul.f32 %v1223, %v2839
        %v2968 = vmul.f32 %v1224, %v2840
        %v2969 = vmul.f32 %v1305, %v2841
        %v2970 = vmul.f32 %v1306, %v2842
        %v2971 = vmul.f32 %v1307, %v2843
        %v2972 = vmul.f32 %v1308, %v2844
        %v2973 = vmul.f32 %v1309, %v2845
        %v2974 = vmul.f32 %v1310, %v2846
        %v2975 = vmul.f32 %v1311, %v2847
        %v2976 = vmul.f32 %v1312, %v2848
        %v2977 = vmul.f32 %v1313, %v2849
        %v2978 = vmul.f32 %v1314, %v2850
        %v2979 = vmul.f32 %v1315, %v2851
        %v2980 = vmul.f32 %v1316, %v2852
        %v2981 = vmul.f32 %v1317, %v2853
        %v2982 = vmul.f32 %v1318, %v2854
        %v2983 = vmul.f32 %v1319, %v2855
        %v2984 = vmul.f32 %v1320, %v2856
        %v2985 = vadd.f32 %v2953, %v2969
        %v2986 = vadd.f32 %v2954, %v2970
        %v2987 = vadd.f32 %v2955, %v2971
        %v2988 = vadd.f32 %v2956, %v2972
        %v2989 = vadd.f32 %v2957, %v2973
        %v2990 = vadd.f32 %v2958, %v2974
        %v2991 = vadd.f32 %v2959, %v2975
        %v2992 = vadd.f32 %v2960, %v2976
        %v2993 = vadd.f32 %v2961, %v2977
        %v2994 = vadd.f32 %v2962, %v2978
        %v2995 = vadd.f32 %v2963, %v2979
        %v2996 = vadd.f32 %v2964, %v2980
        %v2997 = vadd.f32 %v2965, %v2981
        %v2998 = vadd.f32 %v2966, %v2982
        %v2999 = vadd.f32 %v2967, %v2983
        %v3000 = vadd.f32 %v2968, %v2984
        %v3001 = vmul.f32 %v1401, %v2857
        %v3002 = vmul.f32 %v1402, %v2858
        %v3003 = vmul.f32 %v1403, %v2859
        %v3004 = vmul.f32 %v1404, %v2860
        %v3005 = vmul.f32 %v1405, %v2861
        %v3006 = vmul.f32 %v1406, %v2862
        %v3007 = vmul.f32 %v1407, %v2863
        %v3008 = vmul.f32 %v1408, %v2864
        %v3009 = vmul.f32 %v1409, %v2865
        %v3010 = vmul.f32 %v1410, %v2866
        %v3011 = vmul.f32 %v1411, %v2867
        %v3012 = vmul.f32 %v1412, %v2868
        %v3013 = vmul.f32 %v1413, %v2869
        %v3014 = vmul.f32 %v1414, %v2870
        %v3015 = vmul.f32 %v1415, %v2871
        %v3016 = vmul.f32 %v1416, %v2872
        %v3017 = vadd.f32 %v2985, %v3001
        %v3018 = vadd.f32 %v2986, %v3002
        %v3019 = vadd.f32 %v2987, %v3003
        %v3020 = vadd.f32 %v2988, %v3004
        %v3021 = vadd.f32 %v2989, %v3005
        %v3022 = vadd.f32 %v2990, %v3006
        %v3023 = vadd.f32 %v2991, %v3007
        %v3024 = vadd.f32 %v2992, %v3008
        %v3025 = vadd.f32 %v2993, %v3009
        %v3026 = vadd.f32 %v2994, %v3010
        %v3027 = vadd.f32 %v2995, %v3011
        %v3028 = vadd.f32 %v2996, %v3012
        %v3029 = vadd.f32 %v2997, %v3013
        %v3030 = vadd.f32 %v2998, %v3014
        %v3031 = vadd.f32 %v2999, %v3015
        %v3032 = vadd.f32 %v3000, %v3016
        %v3033 = vmul.f32 %v1497, %v2873
        %v3034 = vmul.f32 %v1498, %v2874
        %v3035 = vmul.f32 %v1499, %v2875
        %v3036 = vmul.f32 %v1500, %v2876
        %v3037 = vmul.f32 %v1501, %v2877
        %v3038 = vmul.f32 %v1502, %v2878
        %v3039 = vmul.f32 %v1503, %v2879
        %v3040 = vmul.f32 %v1504, %v2880
        %v3041 = vmul.f32 %v1505, %v2881
        %v3042 = vmul.f32 %v1506, %v2882
        %v3043 = vmul.f32 %v1507, %v2883
        %v3044 = vmul.f32 %v1508, %v2884
        %v3045 = vmul.f32 %v1509, %v2885
        %v3046 = vmul.f32 %v1510, %v2886
        %v3047 = vmul.f32 %v1511, %v2887
        %v3048 = vmul.f32 %v1512, %v2888
        %v3049 = vadd.f32 %v3017, %v3033
        %v3050 = vadd.f32 %v3018, %v3034
        %v3051 = vadd.f32 %v3019, %v3035
        %v3052 = vadd.f32 %v3020, %v3036
        %v3053 = vadd.f32 %v3021, %v3037
        %v3054 = vadd.f32 %v3022, %v3038
        %v3055 = vadd.f32 %v3023, %v3039
        %v3056 = vadd.f32 %v3024, %v3040
        %v3057 = vadd.f32 %v3025, %v3041
        %v3058 = vadd.f32 %v3026, %v3042
        %v3059 = vadd.f32 %v3027, %v3043
        %v3060 = vadd.f32 %v3028, %v3044
        %v3061 = vadd.f32 %v3029, %v3045
        %v3062 = vadd.f32 %v3030, %v3046
        %v3063 = vadd.f32 %v3031, %v3047
        %v3064 = vadd.f32 %v3032, %v3048
        %v3065 = vmul.f32 %v1593, %v2889
        %v3066 = vmul.f32 %v1594, %v2890
        %v3067 = vmul.f32 %v1595, %v2891
        %v3068 = vmul.f32 %v1596, %v2892
        %v3069 = vmul.f32 %v1597, %v2893
        %v3070 = vmul.f32 %v1598, %v2894
        %v3071 = vmul.f32 %v1599, %v2895
        %v3072 = vmul.f32 %v1600, %v2896
        %v3073 = vmul.f32 %v1601, %v2897
        %v3074 = vmul.f32 %v1602, %v2898
        %v3075 = vmul.f32 %v1603, %v2899
        %v3076 = vmul.f32 %v1604, %v2900
        %v3077 = vmul.f32 %v1605, %v2901
        %v3078 = vmul.f32 %v1606, %v2902
        %v3079 = vmul.f32 %v1607, %v2903
        %v3080 = vmul.f32 %v1608, %v2904
        %v3081 = vadd.f32 %v3049, %v3065
        %v3082 = vadd.f32 %v3050, %v3066
        %v3083 = vadd.f32 %v3051, %v3067
        %v3084 = vadd.f32 %v3052, %v3068
        %v3085 = vadd.f32 %v3053, %v3069
        %v3086 = vadd.f32 %v3054, %v3070
        %v3087 = vadd.f32 %v3055, %v3071
        %v3088 = vadd.f32 %v3056, %v3072
        %v3089 = vadd.f32 %v3057, %v3073
        %v3090 = vadd.f32 %v3058, %v3074
        %v3091 = vadd.f32 %v3059, %v3075
        %v3092 = vadd.f32 %v3060, %v3076
        %v3093 = vadd.f32 %v3061, %v3077
        %v3094 = vadd.f32 %v3062, %v3078
        %v3095 = vadd.f32 %v3063, %v3079
        %v3096 = vadd.f32 %v3064, %v3080
        %v3097 = vmul.f32 %v1689, %v2905
        %v3098 = vmul.f32 %v1690, %v2906
        %v3099 = vmul.f32 %v1691, %v2907
        %v3100 = vmul.f32 %v1692, %v2908
        %v3101 = vmul.f32 %v1693, %v2909
        %v3102 = vmul.f32 %v1694, %v2910
        %v3103 = vmul.f32 %v1695, %v2911
        %v3104 = vmul.f32 %v1696, %v2912
        %v3105 = vmul.f32 %v1697, %v2913
        %v3106 = vmul.f32 %v1698, %v2914
        %v3107 = vmul.f32 %v1699, %v2915
        %v3108 = vmul.f32 %v1700, %v2916
        %v3109 = vmul.f32 %v1701, %v2917
        %v3110 = vmul.f32 %v1702, %v2918
        %v3111 = vmul.f32 %v1703, %v2919
        %v3112 = vmul.f32 %v1704, %v2920
        %v3113 = vadd.f32 %v3081, %v3097
        %v3114 = vadd.f32 %v3082, %v3098
        %v3115 = vadd.f32 %v3083, %v3099
        %v3116 = vadd.f32 %v3084, %v3100
        %v3117 = vadd.f32 %v3085, %v3101
        %v3118 = vadd.f32 %v3086, %v3102
        %v3119 = vadd.f32 %v3087, %v3103
        %v3120 = vadd.f32 %v3088, %v3104
        %v3121 = vadd.f32 %v3089, %v3105
        %v3122 = vadd.f32 %v3090, %v3106
        %v3123 = vadd.f32 %v3091, %v3107
        %v3124 = vadd.f32 %v3092, %v3108
        %v3125 = vadd.f32 %v3093, %v3109
        %v3126 = vadd.f32 %v3094, %v3110
        %v3127 = vadd.f32 %v3095, %v3111
        %v3128 = vadd.f32 %v3096, %v3112
        %v3129 = vmul.f32 %v1785, %v2921
        %v3130 = vmul.f32 %v1786, %v2922
        %v3131 = vmul.f32 %v1787, %v2923
        %v3132 = vmul.f32 %v1788, %v2924
        %v3133 = vmul.f32 %v1789, %v2925
        %v3134 = vmul.f32 %v1790, %v2926
        %v3135 = vmul.f32 %v1791, %v2927
        %v3136 = vmul.f32 %v1792, %v2928
        %v3137 = vmul.f32 %v1793, %v2929
        %v3138 = vmul.f32 %v1794, %v2930
        %v3139 = vmul.f32 %v1795, %v2931
        %v3140 = vmul.f32 %v1796, %v2932
        %v3141 = vmul.f32 %v1797, %v2933
        %v3142 = vmul.f32 %v1798, %v2934
        %v3143 = vmul.f32 %v1799, %v2935
        %v3144 = vmul.f32 %v1800, %v2936
        %v3145 = vadd.f32 %v3113, %v3129
        %v3146 = vadd.f32 %v3114, %v3130
        %v3147 = vadd.f32 %v3115, %v3131
        %v3148 = vadd.f32 %v3116, %v3132
        %v3149 = vadd.f32 %v3117, %v3133
        %v3150 = vadd.f32 %v3118, %v3134
        %v3151 = vadd.f32 %v3119, %v3135
        %v3152 = vadd.f32 %v3120, %v3136
        %v3153 = vadd.f32 %v3121, %v3137
        %v3154 = vadd.f32 %v3122, %v3138
        %v3155 = vadd.f32 %v3123, %v3139
        %v3156 = vadd.f32 %v3124, %v3140
        %v3157 = vadd.f32 %v3125, %v3141
        %v3158 = vadd.f32 %v3126, %v3142
        %v3159 = vadd.f32 %v3127, %v3143
        %v3160 = vadd.f32 %v3128, %v3144
        %v3161 = vmul.f32 %v1881, %v2937
        %v3162 = vmul.f32 %v1882, %v2938
        %v3163 = vmul.f32 %v1883, %v2939
        %v3164 = vmul.f32 %v1884, %v2940
        %v3165 = vmul.f32 %v1885, %v2941
        %v3166 = vmul.f32 %v1886, %v2942
        %v3167 = vmul.f32 %v1887, %v2943
        %v3168 = vmul.f32 %v1888, %v2944
        %v3169 = vmul.f32 %v1889, %v2945
        %v3170 = vmul.f32 %v1890, %v2946
        %v3171 = vmul.f32 %v1891, %v2947
        %v3172 = vmul.f32 %v1892, %v2948
        %v3173 = vmul.f32 %v1893, %v2949
        %v3174 = vmul.f32 %v1894, %v2950
        %v3175 = vmul.f32 %v1895, %v2951
        %v3176 = vmul.f32 %v1896, %v2952
        %v3177 = vadd.f32 %v3145, %v3161
        %v3178 = vadd.f32 %v3146, %v3162
        %v3179 = vadd.f32 %v3147, %v3163
        %v3180 = vadd.f32 %v3148, %v3164
        %v3181 = vadd.f32 %v3149, %v3165
        %v3182 = vadd.f32 %v3150, %v3166
        %v3183 = vadd.f32 %v3151, %v3167
        %v3184 = vadd.f32 %v3152, %v3168
        %v3185 = vadd.f32 %v3153, %v3169
        %v3186 = vadd.f32 %v3154, %v3170
        %v3187 = vadd.f32 %v3155, %v3171
        %v3188 = vadd.f32 %v3156, %v3172
        %v3189 = vadd.f32 %v3157, %v3173
        %v3190 = vadd.f32 %v3158, %v3174
        %v3191 = vadd.f32 %v3159, %v3175
        %v3192 = vadd.f32 %v3160, %v3176
        %3193 = vst [vmem:[%s1178] sm:$0xff] %v3177
        %3194 = vst [vmem:[%s1178 + $0x8] sm:$0xff] %v3178
        %3195 = vst [vmem:[%s1178 + $0x10] sm:$0xff] %v3179
        %3196 = vst [vmem:[%s1178 + $0x18] sm:$0xff] %v3180
        %3197 = vst [vmem:[%s1178 + $0x20] sm:$0xff] %v3181
        %3198 = vst [vmem:[%s1178 + $0x28] sm:$0xff] %v3182
        %3199 = vst [vmem:[%s1178 + $0x30] sm:$0xff] %v3183
        %3200 = vst [vmem:[%s1178 + $0x38] sm:$0xff] %v3184
        %3201 = vst [vmem:[%s1178 + $0x40] sm:$0xff] %v3185
        %3202 = vst [vmem:[%s1178 + $0x48] sm:$0xff] %v3186
        %3203 = vst [vmem:[%s1178 + $0x50] sm:$0xff] %v3187
        %3204 = vst [vmem:[%s1178 + $0x58] sm:$0xff] %v3188
        %3205 = vst [vmem:[%s1178 + $0x60] sm:$0xff] %v3189
        %3206 = vst [vmem:[%s1178 + $0x68] sm:$0xff] %v3190
        %3207 = vst [vmem:[%s1178 + $0x70] sm:$0xff] %v3191
        %3208 = vst [vmem:[%s1178 + $0x78] sm:$0xff] %v3192
        %v3209 = vlaneseq
        %v3210 = vand.u32 %v3209, 127
        %vm3211 = vcmp.eq.s32.totalorder %v3210, 0
        %v3212 = vsel %vm3211, %v2825, 0.0
        %v3213 = vsel %vm3211, %v2826, 0.0
        %v3214 = vsel %vm3211, %v2827, 0.0
        %v3215 = vsel %vm3211, %v2828, 0.0
        %v3216 = vsel %vm3211, %v2829, 0.0
        %v3217 = vsel %vm3211, %v2830, 0.0
        %v3218 = vsel %vm3211, %v2831, 0.0
        %v3219 = vsel %vm3211, %v2832, 0.0
        %v3220 = vsel %vm3211, %v2833, 0.0
        %v3221 = vsel %vm3211, %v2834, 0.0
        %v3222 = vsel %vm3211, %v2835, 0.0
        %v3223 = vsel %vm3211, %v2836, 0.0
        %v3224 = vsel %vm3211, %v2837, 0.0
        %v3225 = vsel %vm3211, %v2838, 0.0
        %v3226 = vsel %vm3211, %v2839, 0.0
        %v3227 = vsel %vm3211, %v2840, 0.0
        %vm3228 = vcmp.eq.s32.totalorder %v3210, 1
        %v3229 = vsel %vm3228, %v2841, %v3212
        %v3230 = vsel %vm3228, %v2842, %v3213
        %v3231 = vsel %vm3228, %v2843, %v3214
        %v3232 = vsel %vm3228, %v2844, %v3215
        %v3233 = vsel %vm3228, %v2845, %v3216
        %v3234 = vsel %vm3228, %v2846, %v3217
        %v3235 = vsel %vm3228, %v2847, %v3218
        %v3236 = vsel %vm3228, %v2848, %v3219
        %v3237 = vsel %vm3228, %v2849, %v3220
        %v3238 = vsel %vm3228, %v2850, %v3221
        %v3239 = vsel %vm3228, %v2851, %v3222
        %v3240 = vsel %vm3228, %v2852, %v3223
        %v3241 = vsel %vm3228, %v2853, %v3224
        %v3242 = vsel %vm3228, %v2854, %v3225
        %v3243 = vsel %vm3228, %v2855, %v3226
        %v3244 = vsel %vm3228, %v2856, %v3227
        %vm3245 = vcmp.eq.s32.totalorder %v3210, 2
        %v3246 = vsel %vm3245, %v2857, %v3229
        %v3247 = vsel %vm3245, %v2858, %v3230
        %v3248 = vsel %vm3245, %v2859, %v3231
        %v3249 = vsel %vm3245, %v2860, %v3232
        %v3250 = vsel %vm3245, %v2861, %v3233
        %v3251 = vsel %vm3245, %v2862, %v3234
        %v3252 = vsel %vm3245, %v2863, %v3235
        %v3253 = vsel %vm3245, %v2864, %v3236
        %v3254 = vsel %vm3245, %v2865, %v3237
        %v3255 = vsel %vm3245, %v2866, %v3238
        %v3256 = vsel %vm3245, %v2867, %v3239
        %v3257 = vsel %vm3245, %v2868, %v3240
        %v3258 = vsel %vm3245, %v2869, %v3241
        %v3259 = vsel %vm3245, %v2870, %v3242
        %v3260 = vsel %vm3245, %v2871, %v3243
        %v3261 = vsel %vm3245, %v2872, %v3244
        %vm3262 = vcmp.eq.s32.totalorder %v3210, 3
        %v3263 = vsel %vm3262, %v2873, %v3246
        %v3264 = vsel %vm3262, %v2874, %v3247
        %v3265 = vsel %vm3262, %v2875, %v3248
        %v3266 = vsel %vm3262, %v2876, %v3249
        %v3267 = vsel %vm3262, %v2877, %v3250
        %v3268 = vsel %vm3262, %v2878, %v3251
        %v3269 = vsel %vm3262, %v2879, %v3252
        %v3270 = vsel %vm3262, %v2880, %v3253
        %v3271 = vsel %vm3262, %v2881, %v3254
        %v3272 = vsel %vm3262, %v2882, %v3255
        %v3273 = vsel %vm3262, %v2883, %v3256
        %v3274 = vsel %vm3262, %v2884, %v3257
        %v3275 = vsel %vm3262, %v2885, %v3258
        %v3276 = vsel %vm3262, %v2886, %v3259
        %v3277 = vsel %vm3262, %v2887, %v3260
        %v3278 = vsel %vm3262, %v2888, %v3261
        %vm3279 = vcmp.eq.s32.totalorder %v3210, 4
        %v3280 = vsel %vm3279, %v2889, %v3263
        %v3281 = vsel %vm3279, %v2890, %v3264
        %v3282 = vsel %vm3279, %v2891, %v3265
        %v3283 = vsel %vm3279, %v2892, %v3266
        %v3284 = vsel %vm3279, %v2893, %v3267
        %v3285 = vsel %vm3279, %v2894, %v3268
        %v3286 = vsel %vm3279, %v2895, %v3269
        %v3287 = vsel %vm3279, %v2896, %v3270
        %v3288 = vsel %vm3279, %v2897, %v3271
        %v3289 = vsel %vm3279, %v2898, %v3272
        %v3290 = vsel %vm3279, %v2899, %v3273
        %v3291 = vsel %vm3279, %v2900, %v3274
        %v3292 = vsel %vm3279, %v2901, %v3275
        %v3293 = vsel %vm3279, %v2902, %v3276
        %v3294 = vsel %vm3279, %v2903, %v3277
        %v3295 = vsel %vm3279, %v2904, %v3278
        %vm3296 = vcmp.eq.s32.totalorder %v3210, 5
        %v3297 = vsel %vm3296, %v2905, %v3280
        %v3298 = vsel %vm3296, %v2906, %v3281
        %v3299 = vsel %vm3296, %v2907, %v3282
        %v3300 = vsel %vm3296, %v2908, %v3283
        %v3301 = vsel %vm3296, %v2909, %v3284
        %v3302 = vsel %vm3296, %v2910, %v3285
        %v3303 = vsel %vm3296, %v2911, %v3286
        %v3304 = vsel %vm3296, %v2912, %v3287
        %v3305 = vsel %vm3296, %v2913, %v3288
        %v3306 = vsel %vm3296, %v2914, %v3289
        %v3307 = vsel %vm3296, %v2915, %v3290
        %v3308 = vsel %vm3296, %v2916, %v3291
        %v3309 = vsel %vm3296, %v2917, %v3292
        %v3310 = vsel %vm3296, %v2918, %v3293
        %v3311 = vsel %vm3296, %v2919, %v3294
        %v3312 = vsel %vm3296, %v2920, %v3295
        %vm3313 = vcmp.eq.s32.totalorder %v3210, 6
        %v3314 = vsel %vm3313, %v2921, %v3297
        %v3315 = vsel %vm3313, %v2922, %v3298
        %v3316 = vsel %vm3313, %v2923, %v3299
        %v3317 = vsel %vm3313, %v2924, %v3300
        %v3318 = vsel %vm3313, %v2925, %v3301
        %v3319 = vsel %vm3313, %v2926, %v3302
        %v3320 = vsel %vm3313, %v2927, %v3303
        %v3321 = vsel %vm3313, %v2928, %v3304
        %v3322 = vsel %vm3313, %v2929, %v3305
        %v3323 = vsel %vm3313, %v2930, %v3306
        %v3324 = vsel %vm3313, %v2931, %v3307
        %v3325 = vsel %vm3313, %v2932, %v3308
        %v3326 = vsel %vm3313, %v2933, %v3309
        %v3327 = vsel %vm3313, %v2934, %v3310
        %v3328 = vsel %vm3313, %v2935, %v3311
        %v3329 = vsel %vm3313, %v2936, %v3312
        %vm3330 = vcmp.eq.s32.totalorder %v3210, 7
        %v3331 = vsel %vm3330, %v2937, %v3314
        %v3332 = vsel %vm3330, %v2938, %v3315
        %v3333 = vsel %vm3330, %v2939, %v3316
        %v3334 = vsel %vm3330, %v2940, %v3317
        %v3335 = vsel %vm3330, %v2941, %v3318
        %v3336 = vsel %vm3330, %v2942, %v3319
        %v3337 = vsel %vm3330, %v2943, %v3320
        %v3338 = vsel %vm3330, %v2944, %v3321
        %v3339 = vsel %vm3330, %v2945, %v3322
        %v3340 = vsel %vm3330, %v2946, %v3323
        %v3341 = vsel %vm3330, %v2947, %v3324
        %v3342 = vsel %vm3330, %v2948, %v3325
        %v3343 = vsel %vm3330, %v2949, %v3326
        %v3344 = vsel %vm3330, %v2950, %v3327
        %v3345 = vsel %vm3330, %v2951, %v3328
        %v3346 = vsel %vm3330, %v2952, %v3329
        %vm3347 = vcmask 64512
        %3348 = vst.msk [vmem:[%s1207] sm:$0xff] %vm3347, %v3331
        %3349 = vst.msk [vmem:[%s1207 + $0x8] sm:$0xff] %vm3347, %v3332
        %3350 = vst.msk [vmem:[%s1207 + $0x10] sm:$0xff] %vm3347, %v3333
        %3351 = vst.msk [vmem:[%s1207 + $0x18] sm:$0xff] %vm3347, %v3334
        %3352 = vst.msk [vmem:[%s1207 + $0x20] sm:$0xff] %vm3347, %v3335
        %3353 = vst.msk [vmem:[%s1207 + $0x28] sm:$0xff] %vm3347, %v3336
        %3354 = vst.msk [vmem:[%s1207 + $0x30] sm:$0xff] %vm3347, %v3337
        %3355 = vst.msk [vmem:[%s1207 + $0x38] sm:$0xff] %vm3347, %v3338
        %3356 = vst.msk [vmem:[%s1207 + $0x40] sm:$0xff] %vm3347, %v3339
        %3357 = vst.msk [vmem:[%s1207 + $0x48] sm:$0xff] %vm3347, %v3340
        %3358 = vst.msk [vmem:[%s1207 + $0x50] sm:$0xff] %vm3347, %v3341
        %3359 = vst.msk [vmem:[%s1207 + $0x58] sm:$0xff] %vm3347, %v3342
        %3360 = vst.msk [vmem:[%s1207 + $0x60] sm:$0xff] %vm3347, %v3343
        %3361 = vst.msk [vmem:[%s1207 + $0x68] sm:$0xff] %vm3347, %v3344
        %3362 = vst.msk [vmem:[%s1207 + $0x70] sm:$0xff] %vm3347, %v3345
        %3363 = vst.msk [vmem:[%s1207 + $0x78] sm:$0xff] %vm3347, %v3346
        %s3364 = sand.u32 %s483, 1
        %s3365 = scalar_lea.sflag [#allocation4], %s3364
        %s3366 = sand.u32 %s483, 1
        %s3367 = smul.addr %s3366, 128
        %s3368 = scalar_lea.vmem [#allocation28], %s3367
        %s3369 = smul.u32 16, %s59
        %p3370 = scmp.lt.s32.totalorder %s3369, 31
        %s3371 = scalar_select %p3370, %s3369, 31
        %s3372 = smul.addr %s3371, 8
        %s3373 = scalar_lea.vmem %s17, %s3372
        // Predicated region
        $region149: #{tpu_custom_call.1} parent=83 // pred_check
          %p3374 = pneg %p493
        $region150: #{tpu_custom_call.1} parent=83 // pred_check_branch
          %3376 = sbr.rel (%p3374) target = $region152
        $region151: #{tpu_custom_call.1} parent=83 // pred_region
          %s3377 = smul.u32 16, %s59
          %3379 = vsyncadd %s3365, 0
          %s3380 = smul.addr %s3377, 8
          %s3381 = scalar_lea.hbm %s16, %s3380
          %s3382 = sshll.u32 %s3368, 4
          %s3383 = int_to_ptr.vmem [resolvable:$true] %s3382
          %s3384 = sshll.u32 %s3381, 4
          %s3385 = int_to_ptr.hbm [resolvable:$true] %s3384
          %3390 = dma.vmem_to_hbm [thread:$0]  %s3383, 2048, %s3385, %s3365, 128, 128, 8
        $region152: #{tpu_custom_call.1} parent=83 // pred_fallthru
          _
        // Predicated region
        $region153: #{tpu_custom_call.1} parent=83 // pred_check
          %p3391 = pneg %p519
        $region154: #{tpu_custom_call.1} parent=83 // pred_check_branch
          %3393 = sbr.rel (%p3391) target = $region156
        $region155: #{tpu_custom_call.1} parent=83 // pred_region
          %s3394 = smul.u32 16, %s59
        $region156: #{tpu_custom_call.1} parent=83 // pred_fallthru
          _
      $region84: #{tpu_custom_call.1} parent=5 // pred_fallthru
        _
      %p3395 = scmp.le.s32.totalorder 2, %s54
      // Predicated region
      $region157: #{tpu_custom_call.1} parent=5 // pred_check
        %p3396 = pneg %p3395
      $region158: #{tpu_custom_call.1} parent=5 // pred_check_branch
        %3398 = sbr.rel (%p3396) target = $region160
      $region159: #{tpu_custom_call.1} parent=5 // pred_region
        %s3399 = ssub.s32 %s54, 2
        // Predicated region
        $region161: #{tpu_custom_call.1} parent=159 // pred_check
          %p3400 = pneg %p499
        $region162: #{tpu_custom_call.1} parent=159 // pred_check_branch
          %3402 = sbr.rel (%p3400) target = $region164
        $region163: #{tpu_custom_call.1} parent=159 // pred_region
          %s3403 = sand.u32 %s484, 1
          %s3404 = scalar_lea.sflag [#allocation4], %s3403
          %s3405 = sand.u32 %s484, 1
          %s3406 = smul.addr %s3405, 128
          %s3407 = scalar_lea.vmem [#allocation28], %s3406
          %3409 = dma.done %s3404, 2048
        $region164: #{tpu_custom_call.1} parent=159 // pred_fallthru
          _
        // Predicated region
        $region165: #{tpu_custom_call.1} parent=159 // pred_check
          %p3410 = pneg %p525
        $region166: #{tpu_custom_call.1} parent=159 // pred_check_branch
          %3412 = sbr.rel (%p3410) target = $region168
        $region167: #{tpu_custom_call.1} parent=159 // pred_region
          %s3413 = smul.u32 16, %s60
          %p3414 = scmp.lt.s32.totalorder %s3413, 31
          %s3415 = scalar_select %p3414, %s3413, 31
          %s3416 = smul.addr %s3415, 8
          %s3417 = scalar_lea.vmem %s17, %s3416
        $region168: #{tpu_custom_call.1} parent=159 // pred_fallthru
          _
      $region160: #{tpu_custom_call.1} parent=5 // pred_fallthru
        _
    $region6: #{tpu_custom_call.1} parent=1 // loop_footer
      %s58 = sadd.s32 1, %s54
    $region7: #{tpu_custom_call.1} parent=1 // loop_footer_branch
      %53 = sbr.rel target = $region3
    $region8: #{tpu_custom_call.1} parent=1 // loop_exit
      _
    %3418 = vsyncpa [#allocation3], 1
    %s3419 = scalar_lea.sflag [#allocation3], 1
    %3420 = vsyncpa %s3419, 1
    %3421 = vsyncpa [#allocation6], 1
    %s3422 = scalar_lea.sflag [#allocation6], 1
    %3423 = vsyncpa %s3422, 1
    %3424 = vsyncpa [#allocation9], 1
    %s3425 = scalar_lea.sflag [#allocation9], 1
    %3426 = vsyncpa %s3425, 1
    %3427 = vsyncpa [#allocation12], 1
    %s3428 = scalar_lea.sflag [#allocation12], 1
    %3429 = vsyncpa %s3428, 1
    %3430 = vsyncpa [#allocation15], 1
    %s3431 = scalar_lea.sflag [#allocation15], 1
    %3432 = vsyncpa %s3431, 1
    %3433 = vsyncpa [#allocation18], 1
    %s3434 = scalar_lea.sflag [#allocation18], 1
    %3435 = vsyncpa %s3434, 1
    %3436 = vsyncpa [#allocation21], 1
    %s3437 = scalar_lea.sflag [#allocation21], 1
    %3438 = vsyncpa %s3437, 1
    %3439 = vsyncpa [#allocation24], 1
    %s3440 = scalar_lea.sflag [#allocation24], 1
    %3441 = vsyncpa %s3440, 1
    %3442 = vsyncpa [#allocation27], 1
    %s3443 = scalar_lea.sflag [#allocation27], 1
    %3444 = vsyncpa %s3443, 1
    %3445 = vsyncpa [#allocation4], 1
    %s3446 = scalar_lea.sflag [#allocation4], 1
    %3447 = vsyncpa %s3446, 1

</llo_original>
